<compile_context>
chip_gen: v7x
topology: tpu7x:2x2x1
jax: 0.10.0
libtpu: 0.0.40
codegen_flags: <defaults>
</compile_context>

<pallas_src>
import functools
import math

import jax
import jax.numpy as jnp
from jax.experimental import pallas as pl
from jax.experimental.pallas import tpu as pltpu


# ----------------------------------------------------------------------------
# helpers
# ----------------------------------------------------------------------------
def _tile_rows(M: int, target: int = 512):
    """Return (TM, Mp): a row tile (multiple of 8, <= target) and padded rows."""
    Mp = ((M + 7) // 8) * 8
    if Mp <= target:
        return Mp, Mp
    t = (target // 8) * 8
    while t >= 128:
        if Mp % t == 0:
            return t, Mp
        t -= 8
    # no decent divisor: pad up to a multiple of the target tile
    TM = (target // 8) * 8
    Mp = ((M + TM - 1) // TM) * TM
    return TM, Mp


def _tile_cols(N: int, target: int = 1024):
    """Column tile: full N if small, else largest multiple-of-128 divisor."""
    if N <= target:
        return N
    t = (target // 128) * 128
    while t >= 128:
        if N % t == 0:
            return t
        t -= 128
    return N


def _vmem_limit(*elem_counts):
    """vmem_limit_bytes from the (f32, double-buffered) tile footprint."""
    need = int(sum(elem_counts)) * 4 * 2 + (2 << 20)
    return max(32 << 20, min(need, 64 << 20))


# ----------------------------------------------------------------------------
# Kernel 1: fused linear (x @ W + b), optional ReLU, tiled over rows and cols
# ----------------------------------------------------------------------------
def _linear_kernel(x_ref, w_ref, b_ref, o_ref, *, activation):
    acc = jnp.dot(x_ref[...], w_ref[...], preferred_element_type=jnp.float32)
    acc = acc + b_ref[...].astype(jnp.float32)        # (1, TN) broadcast
    if activation == "relu":
        acc = jnp.maximum(acc, 0.0)
    o_ref[...] = acc.astype(o_ref.dtype)


# Kernel 1b: fused linear + residual-add + LayerNorm epilogue (full-N blocks)
def _linear_add_ln_kernel(x_ref, w_ref, b_ref, r_ref, g_ref, bt_ref, o_ref, *, eps):
    acc = jnp.dot(x_ref[...], w_ref[...], preferred_element_type=jnp.float32)
    acc = acc + b_ref[...].astype(jnp.float32)
    y = acc + r_ref[...].astype(jnp.float32)
    mean = jnp.mean(y, axis=-1, keepdims=True)
    cent = y - mean
    var = jnp.mean(cent * cent, axis=-1, keepdims=True)
    inv = jax.lax.rsqrt(var + eps)
    o_ref[...] = (cent * inv * g_ref[...] + bt_ref[...]).astype(o_ref.dtype)


def linear(x, w, b, activation=None, residual=None, ln_gamma=None, ln_beta=None,
           eps=1e-5, tile_m=512, tile_n=1024):
    """y = x @ w + b  [+ ReLU]  or  LayerNorm(residual + x @ w + b)."""
    M0, K = x.shape
    N = w.shape[1]
    TM, Mp = _tile_rows(M0, tile_m)
    pad = Mp - M0
    if pad:
        x = jnp.pad(x, ((0, pad), (0, 0)))
        if residual is not None:
            residual = jnp.pad(residual, ((0, pad), (0, 0)))
    b2 = b.reshape(1, N)

    if residual is None:
        TN = _tile_cols(N, tile_n)
        out = pl.pallas_call(
            functools.partial(_linear_kernel, activation=activation),
            out_shape=jax.ShapeDtypeStruct((Mp, N), x.dtype),
            grid_spec=pltpu.PrefetchScalarGridSpec(
                num_scalar_prefetch=0,
                grid=(Mp // TM, N // TN),
                in_specs=[
                    pl.BlockSpec((TM, K), lambda i, j: (i, 0)),
                    pl.BlockSpec((K, TN), lambda i, j: (0, j)),
                    pl.BlockSpec((1, TN), lambda i, j: (0, j)),
                ],
                out_specs=pl.BlockSpec((TM, TN), lambda i, j: (i, j)),
            ),
            compiler_params=pltpu.CompilerParams(
                dimension_semantics=("parallel", "parallel"),
                vmem_limit_bytes=_vmem_limit(TM * K, K * TN, TN, TM * TN),
            ),
        )(x, w, b2)
    else:
        out = pl.pallas_call(
            functools.partial(_linear_add_ln_kernel, eps=eps),
            out_shape=jax.ShapeDtypeStruct((Mp, N), x.dtype),
            grid_spec=pltpu.PrefetchScalarGridSpec(
                num_scalar_prefetch=0,
                grid=(Mp // TM,),
                in_specs=[
                    pl.BlockSpec((TM, K), lambda i: (i, 0)),
                    pl.BlockSpec((K, N), lambda i: (0, 0)),
                    pl.BlockSpec((1, N), lambda i: (0, 0)),
                    pl.BlockSpec((TM, N), lambda i: (i, 0)),
                    pl.BlockSpec((1, N), lambda i: (0, 0)),
                    pl.BlockSpec((1, N), lambda i: (0, 0)),
                ],
                out_specs=pl.BlockSpec((TM, N), lambda i: (i, 0)),
            ),
            compiler_params=pltpu.CompilerParams(
                dimension_semantics=("parallel",),
                vmem_limit_bytes=_vmem_limit(TM * K, K * N, 3 * N, 2 * TM * N),
            ),
        )(x, w, b2, residual, ln_gamma.reshape(1, N), ln_beta.reshape(1, N))

    if pad:
        out = out[:M0]
    return out


# ----------------------------------------------------------------------------
# Kernel 2: multi-head attention core — one batch element per grid step,
#           lane-dense (1, T, D) blocks, heads split inside the kernel
# ----------------------------------------------------------------------------
def _mha_kernel(q_ref, k_ref, v_ref, bias_ref, o_ref, *, num_heads, scale):
    D = q_ref.shape[2]
    Dh = D // num_heads
    q = q_ref[0].astype(jnp.float32)            # (Tq, D)
    k = k_ref[0].astype(jnp.float32)            # (Tk, D)
    v = v_ref[0].astype(jnp.float32)            # (Tk, D)
    bias = bias_ref[0]                          # (1, Tk) additive mask bias
    outs = []
    for h in range(num_heads):                  # static unroll over heads
        sl = slice(h * Dh, (h + 1) * Dh)
        s = jax.lax.dot_general(q[:, sl], k[:, sl], (((1,), (1,)), ((), ())),
                                preferred_element_type=jnp.float32) * scale
        s = s + bias                            # (Tq, Tk)
        m = jnp.max(s, axis=-1, keepdims=True)
        p = jnp.exp(s - m)
        p = p * pl.reciprocal(jnp.sum(p, axis=-1, keepdims=True), approx=True)
        outs.append(jnp.dot(p, v[:, sl], preferred_element_type=jnp.float32))
    o_ref[0] = jnp.concatenate(outs, axis=-1).astype(o_ref.dtype)


def attention_core(q, k, v, bias, num_heads):
    """q: (B,Tq,D), k/v: (B,Tk,D), bias: (B,1,Tk) additive -> (B,Tq,D)."""
    B, Tq, D = q.shape
    Tk = k.shape[1]
    Dh = D // num_heads
    return pl.pallas_call(
        functools.partial(_mha_kernel, num_heads=num_heads, scale=1.0 / math.sqrt(Dh)),
        out_shape=jax.ShapeDtypeStruct((B, Tq, D), q.dtype),
        grid_spec=pltpu.PrefetchScalarGridSpec(
            num_scalar_prefetch=0,
            grid=(B,),
            in_specs=[
                pl.BlockSpec((1, Tq, D), lambda b: (b, 0, 0)),
                pl.BlockSpec((1, Tk, D), lambda b: (b, 0, 0)),
                pl.BlockSpec((1, Tk, D), lambda b: (b, 0, 0)),
                pl.BlockSpec((1, 1, Tk), lambda b: (b, 0, 0)),
            ],
            out_specs=pl.BlockSpec((1, Tq, D), lambda b: (b, 0, 0)),
        ),
        compiler_params=pltpu.CompilerParams(
            dimension_semantics=("parallel",),
            vmem_limit_bytes=_vmem_limit(2 * Tq * D, 2 * Tk * D, Tk, num_heads * Tq * Tk),
        ),
    )(q, k, v, bias)


# ----------------------------------------------------------------------------
# Kernel 3: fused (forward+backward)/2 combine + DynamicAttention pooling
# ----------------------------------------------------------------------------
def _combine_pool_kernel(f_ref, b_ref, w_ref, o_ref):
    c = (f_ref[0].astype(jnp.float32) + b_ref[0].astype(jnp.float32)) * 0.5   # (T, D)
    s = jnp.sum(c * w_ref[...], axis=-1, keepdims=True)                       # (T, 1)
    m = jnp.max(s, axis=0, keepdims=True)
    p = jnp.exp(s - m)
    p = p * pl.reciprocal(jnp.sum(p, axis=0, keepdims=True), approx=True)     # softmax over T
    o_ref[0] = jnp.sum(c * p, axis=0, keepdims=True).astype(o_ref.dtype)      # (1, D)


def combine_and_pool(f_out, b_out, dyn_w):
    B, T, D = f_out.shape
    out = pl.pallas_call(
        _combine_pool_kernel,
        out_shape=jax.ShapeDtypeStruct((B, 1, D), f_out.dtype),
        grid_spec=pltpu.PrefetchScalarGridSpec(
            num_scalar_prefetch=0,
            grid=(B,),
            in_specs=[
                pl.BlockSpec((1, T, D), lambda i: (i, 0, 0)),
                pl.BlockSpec((1, T, D), lambda i: (i, 0, 0)),
                pl.BlockSpec((1, D), lambda i: (0, 0)),
            ],
            out_specs=pl.BlockSpec((1, 1, D), lambda i: (i, 0, 0)),
        ),
        compiler_params=pltpu.CompilerParams(
            dimension_semantics=("parallel",),
            vmem_limit_bytes=_vmem_limit(4 * T * D, 2 * D),
        ),
    )(f_out, b_out, dyn_w)
    return out.reshape(B, D)


# ----------------------------------------------------------------------------
# TransformerDecoderLayer (post-norm, ReLU FFN, eval mode) and full module
# ----------------------------------------------------------------------------
def decoder_layer_forward(x, memory, lp, self_bias, mem_bias, num_heads, eps=1e-5):
    B, T, D = x.shape
    S = memory.shape[1]
    x2 = x.reshape(B * T, D)

    # ---- self-attention block (fused QKV; out-proj fused with residual+LN1)
    sa = lp["self_attn"]
    qkv = linear(x2, sa["w_qkv"], sa["b_qkv"]).reshape(B, T, 3 * D)
    q, k, v = qkv[..., :D], qkv[..., D:2 * D], qkv[..., 2 * D:]
    attn = attention_core(q, k, v, self_bias, num_heads)
    x2 = linear(attn.reshape(B * T, D), sa["wo"], sa["bo"],
                residual=x2, ln_gamma=lp["norm1"]["g"], ln_beta=lp["norm1"]["b"], eps=eps)

    # ---- cross-attention block (fused KV on memory; out-proj fused with residual+LN2)
    ca = lp["cross_attn"]
    q = linear(x2, ca["wq"], ca["bq"]).reshape(B, T, D)
    kv = linear(memory.reshape(B * S, D), ca["w_kv"], ca["b_kv"]).reshape(B, S, 2 * D)
    k, v = kv[..., :D], kv[..., D:]
    attn = attention_core(q, k, v, mem_bias, num_heads)
    x2 = linear(attn.reshape(B * T, D), ca["wo"], ca["bo"],
                residual=x2, ln_gamma=lp["norm2"]["g"], ln_beta=lp["norm2"]["b"], eps=eps)

    # ---- feed-forward block (ReLU fused into w1; w2 fused with residual+LN3)
    h = linear(x2, lp["w1"], lp["b1"], activation="relu")
    x2 = linear(h, lp["w2"], lp["b2"],
                residual=x2, ln_gamma=lp["norm3"]["g"], ln_beta=lp["norm3"]["b"], eps=eps)
    return x2.reshape(B, T, D)


def bidirectional_dynamic_decoder_forward(tgt, memory, tgt_key_padding_mask, fparams,
                                          num_heads):
    B, T, D = tgt.shape
    S = memory.shape[1]

    # key-padding biases hoisted out of all layers (computed once per direction)
    bias_f = jnp.where(tgt_key_padding_mask, -1e9, 0.0).astype(jnp.float32)[:, None, :]
    bias_b = jnp.flip(bias_f, axis=2)
    mem_bias = jnp.zeros((B, 1, S), jnp.float32)   # no memory mask in original forward

    # forward decoder stack
    f = tgt
    for lp in fparams["forward_layers"]:
        f = decoder_layer_forward(f, memory, lp, bias_f, mem_bias, num_heads)

    # backward decoder stack on the sequence-flipped target (not flipped back,
    # exactly like the original PyTorch code)
    b = jnp.flip(tgt, axis=1)
    for lp in fparams["backward_layers"]:
        b = decoder_layer_forward(b, memory, lp, bias_b, mem_bias, num_heads)

    # fused (f + b) / 2 + DynamicAttention pooling over the sequence axis
    return combine_and_pool(f, b, fparams["dyn_w"])            # (B, D)


# ----------------------------------------------------------------------------
# parameter construction (random but deterministic) + kernel-side fusion
# ----------------------------------------------------------------------------
def init_params(key, d_model, num_heads, dim_ff, num_layers):
    s = 1.0 / math.sqrt(d_model)
    sf = 1.0 / math.sqrt(dim_ff)

    def attn_params(k):
        ks = jax.random.split(k, 8)
        return {
            "wq": jax.random.normal(ks[0], (d_model, d_model), jnp.float32) * s,
            "bq": jax.random.normal(ks[1], (d_model,), jnp.float32) * 0.02,
            "wk": jax.random.normal(ks[2], (d_model, d_model), jnp.float32) * s,
            "bk": jax.random.normal(ks[3], (d_model,), jnp.float32) * 0.02,
            "wv": jax.random.normal(ks[4], (d_model, d_model), jnp.float32) * s,
            "bv": jax.random.normal(ks[5], (d_model,), jnp.float32) * 0.02,
            "wo": jax.random.normal(ks[6], (d_model, d_model), jnp.float32) * s,
            "bo": jax.random.normal(ks[7], (d_model,), jnp.float32) * 0.02,
        }

    def norm_params():
        return {"g": jnp.ones((d_model,), jnp.float32),
                "b": jnp.zeros((d_model,), jnp.float32)}

    def layer_params(k):
        ks = jax.random.split(k, 6)
        return {
            "self_attn": attn_params(ks[0]),
            "cross_attn": attn_params(ks[1]),
            "w1": jax.random.normal(ks[2], (d_model, dim_ff), jnp.float32) * s,
            "b1": jax.random.normal(ks[3], (dim_ff,), jnp.float32) * 0.02,
            "w2": jax.random.normal(ks[4], (dim_ff, d_model), jnp.float32) * sf,
            "b2": jax.random.normal(ks[5], (d_model,), jnp.float32) * 0.02,
            "norm1": norm_params(), "norm2": norm_params(), "norm3": norm_params(),
        }

    kf, kb, kd = jax.random.split(key, 3)
    return {
        "forward_layers": [layer_params(k) for k in jax.random.split(kf, num_layers)],
        "backward_layers": [layer_params(k) for k in jax.random.split(kb, num_layers)],
        "dyn_w": jax.random.normal(kd, (1, d_model), jnp.float32) * s,
    }


def fuse_params(params):
    """Build the kernel-side parameter tree with concatenated QKV / KV weights."""
    def fuse_self(a):
        return {"w_qkv": jnp.concatenate([a["wq"], a["wk"], a["wv"]], axis=1),
                "b_qkv": jnp.concatenate([a["bq"], a["bk"], a["bv"]], axis=0),
                "wo": a["wo"], "bo": a["bo"]}

    def fuse_cross(a):
        return {"wq": a["wq"], "bq": a["bq"],
                "w_kv": jnp.concatenate([a["wk"], a["wv"]], axis=1),
                "b_kv": jnp.concatenate([a["bk"], a["bv"]], axis=0),
                "wo": a["wo"], "bo": a["bo"]}

    def fuse_layer(lp):
        return {"self_attn": fuse_self(lp["self_attn"]),
                "cross_attn": fuse_cross(lp["cross_attn"]),
                "w1": lp["w1"], "b1": lp["b1"], "w2": lp["w2"], "b2": lp["b2"],
                "norm1": lp["norm1"], "norm2": lp["norm2"], "norm3": lp["norm3"]}

    return {
        "forward_layers": [fuse_layer(lp) for lp in params["forward_layers"]],
        "backward_layers": [fuse_layer(lp) for lp in params["backward_layers"]],
        "dyn_w": params["dyn_w"],
    }


# ----------------------------------------------------------------------------
# pure-JAX reference (same math, HIGHEST-precision matmuls) for validation
# ----------------------------------------------------------------------------
def _ref_forward(tgt, memory, mask, params, num_heads, eps=1e-5):
    P = jax.lax.Precision.HIGHEST

    def lin(x, w, b):
        return jnp.dot(x, w, precision=P) + b

    def ln(x, g, bt):
        mu = x.mean(-1, keepdims=True)
        var = ((x - mu) ** 2).mean(-1, keepdims=True)
        return (x - mu) / jnp.sqrt(var + eps) * g + bt

    def mha(xq, xkv, p, kpm):
        B, Tq, D = xq.shape
        Tk = xkv.shape[1]
        H, Dh = num_heads, D // num_heads
        q = lin(xq, p["wq"], p["bq"]).reshape(B, Tq, H, Dh).transpose(0, 2, 1, 3)
        k = lin(xkv, p["wk"], p["bk"]).reshape(B, Tk, H, Dh).transpose(0, 2, 1, 3)
        v = lin(xkv, p["wv"], p["bv"]).reshape(B, Tk, H, Dh).transpose(0, 2, 1, 3)
        s = jnp.einsum("bhqd,bhkd->bhqk", q, k, precision=P) / math.sqrt(Dh)
        if kpm is not None:
            s = s + jnp.where(kpm, -1e9, 0.0)[:, None, None, :]
        a = jax.nn.softmax(s, axis=-1)
        o = jnp.einsum("bhqk,bhkd->bhqd", a, v, precision=P)
        o = o.transpose(0, 2, 1, 3).reshape(B, Tq, D)
        return lin(o, p["wo"], p["bo"])

    def layer(x, lp, kpm):
        x = ln(x + mha(x, x, lp["self_attn"], kpm), lp["norm1"]["g"], lp["norm1"]["b"])
        x = ln(x + mha(x, memory, lp["cross_attn"], None), lp["norm2"]["g"], lp["norm2"]["b"])
        h = jnp.maximum(lin(x, lp["w1"], lp["b1"]), 0.0)
        x = ln(x + lin(h, lp["w2"], lp["b2"]), lp["norm3"]["g"], lp["norm3"]["b"])
        return x

    f = tgt
    for lp in params["forward_layers"]:
        f = layer(f, lp, mask)
    bt, bm = jnp.flip(tgt, axis=1), jnp.flip(mask, axis=1)
    b = bt
    for lp in params["backward_layers"]:
        b = layer(b, lp, bm)
    c = (f + b) * 0.5
    scores = jnp.einsum("btd,d->bt", c, params["dyn_w"][0], precision=P)
    w = jax.nn.softmax(scores, axis=1)
    return jnp.einsum("btd,bt->bd", c, w, precision=P)


# ----------------------------------------------------------------------------
if __name__ == "__main__":
    B, T, S, D = 2, 8, 10, 32          # batch, tgt seq, memory seq, d_model
    NUM_HEADS, DIM_FF, NUM_LAYERS = 4, 64, 2

    key = jax.random.PRNGKey(0)
    k_tgt, k_mem, k_par = jax.random.split(key, 3)
    tgt = jax.random.normal(k_tgt, (B, T, D), dtype=jnp.float32)
    memory = jax.random.normal(k_mem, (B, S, D), dtype=jnp.float32)
    # True = padded; pad the last two positions of batch element 1
    tgt_key_padding_mask = jnp.zeros((B, T), dtype=bool).at[1, -2:].set(True)

    params = init_params(k_par, D, NUM_HEADS, DIM_FF, NUM_LAYERS)
    fused_params = fuse_params(params)     # concatenated QKV / KV weights, once

    fwd = jax.jit(
        lambda t, m, msk, p: bidirectional_dynamic_decoder_forward(t, m, msk, p, NUM_HEADS)
    )
    out = jax.block_until_ready(fwd(tgt, memory, tgt_key_padding_mask, fused_params))

    ref = _ref_forward(tgt, memory, tgt_key_padding_mask, params, NUM_HEADS)
    assert out.shape == (B, D), out.shape
    assert jnp.allclose(out, ref, atol=2e-3, rtol=2e-3), float(jnp.max(jnp.abs(out - ref)))

    # TODO(synk): dropout inside TransformerDecoderLayer is identity here (eval mode);
    #             bf16 MXU operands (v6e/v7x) left as an opt-in — kept f32 for validation.
    print("KERNEL_OK")
</pallas_src>

<mosaic_0001>
module attributes {stable_mosaic.version = 11 : i64} {
  func.func @_linear_kernel(%arg0: i32, %arg1: i32, %arg2: memref<16x32xf32, #tpu.memory_space<vmem>>, %arg3: memref<32x96xf32, #tpu.memory_space<vmem>>, %arg4: memref<1x96xf32, #tpu.memory_space<vmem>>, %arg5: memref<16x96xf32, #tpu.memory_space<vmem>>) attributes {dimension_semantics = [#tpu.dimension_semantics<parallel>, #tpu.dimension_semantics<parallel>], iteration_bounds = array<i64: 1, 1>, scalar_prefetch = 0 : i64, scratch_operands = 0 : i64, tpu.core_type = #tpu.core_type<tc>, window_params = [{transform_indices = @transform_0, window_bounds = array<i64: 16, 32>}, {transform_indices = @transform_1, window_bounds = array<i64: 32, 96>}, {transform_indices = @transform_2, window_bounds = array<i64: 1, 96>}, {transform_indices = @transform_3, window_bounds = array<i64: 16, 96>}]} {
    %c0 = arith.constant 0 : index
    %c0_0 = arith.constant 0 : index
    %0 = vector.load %arg2[%c0, %c0_0] : memref<16x32xf32, #tpu.memory_space<vmem>>, vector<16x32xf32>
    %c0_1 = arith.constant 0 : index
    %c0_2 = arith.constant 0 : index
    %1 = vector.load %arg3[%c0_1, %c0_2] : memref<32x96xf32, #tpu.memory_space<vmem>>, vector<32x96xf32>
    %cst = arith.constant dense<0.000000e+00> : vector<16x96xf32>
    %2 = tpu.matmul %0, %1, %cst {dimension_numbers = #tpu.dot_dimension_numbers<[1], [0], [0], [1], [0, 0, 1, 1], [], []>} : vector<16x32xf32>, vector<32x96xf32>, vector<16x96xf32> -> vector<16x96xf32>
    %c0_3 = arith.constant 0 : index
    %c0_4 = arith.constant 0 : index
    %3 = vector.load %arg4[%c0_3, %c0_4] : memref<1x96xf32, #tpu.memory_space<vmem>>, vector<1x96xf32>
    %4 = vector.broadcast %3 : vector<1x96xf32> to vector<16x96xf32>
    %5 = arith.addf %2, %4 : vector<16x96xf32>
    %c0_5 = arith.constant 0 : index
    %c0_6 = arith.constant 0 : index
    %6 = vector.load %arg5[%c0_5, %c0_6] : memref<16x96xf32, #tpu.memory_space<vmem>>, vector<16x96xf32>
    tpu.vector_store %arg5[%c0_5, %c0_6], %5 {strides = array<i32>} : memref<16x96xf32, #tpu.memory_space<vmem>>, vector<16x96xf32>,
    return
  }
  func.func @transform_0(%arg0: i32, %arg1: i32) -> (i32, i32) {
    %c0_i32 = arith.constant 0 : i32
    %c0_i32_0 = arith.constant 0 : i32
    return %arg0, %c0_i32 : i32, i32
  }
  func.func @transform_1(%arg0: i32, %arg1: i32) -> (i32, i32) {
    %c0_i32 = arith.constant 0 : i32
    %c0_i32_0 = arith.constant 0 : i32
    return %c0_i32, %arg1 : i32, i32
  }
  func.func @transform_2(%arg0: i32, %arg1: i32) -> (i32, i32) {
    %c0_i32 = arith.constant 0 : i32
    %c0_i32_0 = arith.constant 0 : i32
    return %c0_i32, %arg1 : i32, i32
  }
  func.func @transform_3(%arg0: i32, %arg1: i32) -> (i32, i32) {
    %c0_i32 = arith.constant 0 : i32
    return %arg0, %arg1 : i32, i32
  }
}

module attributes {stable_mosaic.version = 11 : i64} {
  func.func @_linear_add_ln_kernel(%arg0: i32, %arg1: memref<16x32xf32, #tpu.memory_space<vmem>>, %arg2: memref<32x32xf32, #tpu.memory_space<vmem>>, %arg3: memref<1x32xf32, #tpu.memory_space<vmem>>, %arg4: memref<16x32xf32, #tpu.memory_space<vmem>>, %arg5: memref<1x32xf32, #tpu.memory_space<vmem>>, %arg6: memref<1x32xf32, #tpu.memory_space<vmem>>, %arg7: memref<16x32xf32, #tpu.memory_space<vmem>>) attributes {dimension_semantics = [#tpu.dimension_semantics<parallel>], iteration_bounds = array<i64: 1>, scalar_prefetch = 0 : i64, scratch_operands = 0 : i64, tpu.core_type = #tpu.core_type<tc>, window_params = [{transform_indices = @transform_0, window_bounds = array<i64: 16, 32>}, {pipeline_mode = #tpu.pipeline_mode<synchronous>, transform_indices = @transform_1, window_bounds = array<i64: 32, 32>}, {pipeline_mode = #tpu.pipeline_mode<synchronous>, transform_indices = @transform_2, window_bounds = array<i64: 1, 32>}, {transform_indices = @transform_3, window_bounds = array<i64: 16, 32>}, {pipeline_mode = #tpu.pipeline_mode<synchronous>, transform_indices = @transform_4, window_bounds = array<i64: 1, 32>}, {pipeline_mode = #tpu.pipeline_mode<synchronous>, transform_indices = @transform_5, window_bounds = array<i64: 1, 32>}, {transform_indices = @transform_6, window_bounds = array<i64: 16, 32>}]} {
    %c0 = arith.constant 0 : index
    %c0_0 = arith.constant 0 : index
    %0 = vector.load %arg1[%c0, %c0_0] : memref<16x32xf32, #tpu.memory_space<vmem>>, vector<16x32xf32>
    %c0_1 = arith.constant 0 : index
    %c0_2 = arith.constant 0 : index
    %1 = vector.load %arg2[%c0_1, %c0_2] : memref<32x32xf32, #tpu.memory_space<vmem>>, vector<32x32xf32>
    %cst = arith.constant dense<0.000000e+00> : vector<16x32xf32>
    %2 = tpu.matmul %0, %1, %cst {dimension_numbers = #tpu.dot_dimension_numbers<[1], [0], [0], [1], [0, 0, 1, 1], [], []>} : vector<16x32xf32>, vector<32x32xf32>, vector<16x32xf32> -> vector<16x32xf32>
    %c0_3 = arith.constant 0 : index
    %c0_4 = arith.constant 0 : index
    %3 = vector.load %arg3[%c0_3, %c0_4] : memref<1x32xf32, #tpu.memory_space<vmem>>, vector<1x32xf32>
    %4 = vector.broadcast %3 : vector<1x32xf32> to vector<16x32xf32>
    %5 = arith.addf %2, %4 : vector<16x32xf32>
    %c0_5 = arith.constant 0 : index
    %c0_6 = arith.constant 0 : index
    %6 = vector.load %arg4[%c0_5, %c0_6] : memref<16x32xf32, #tpu.memory_space<vmem>>, vector<16x32xf32>
    %7 = arith.addf %5, %6 : vector<16x32xf32>
    %cst_7 = arith.constant dense<0.000000e+00> : vector<16xf32>
    %8 = vector.multi_reduction <add>, %7, %cst_7 [1] : vector<16x32xf32> to vector<16xf32>
    %9 = vector.shape_cast %8 : vector<16xf32> to vector<16x1xf32>
    %cst_8 = arith.constant 3.200000e+01 : f32
    %10 = vector.broadcast %cst_8 : f32 to vector<16x1xf32>
    %11 = arith.divf %9, %10 : vector<16x1xf32>
    %12 = vector.broadcast %11 : vector<16x1xf32> to vector<16x32xf32>
    %13 = arith.subf %7, %12 : vector<16x32xf32>
    %14 = arith.mulf %13, %13 : vector<16x32xf32>
    %cst_9 = arith.constant dense<0.000000e+00> : vector<16xf32>
    %15 = vector.multi_reduction <add>, %14, %cst_9 [1] : vector<16x32xf32> to vector<16xf32>
    %16 = vector.shape_cast %15 : vector<16xf32> to vector<16x1xf32>
    %cst_10 = arith.constant 3.200000e+01 : f32
    %17 = vector.broadcast %cst_10 : f32 to vector<16x1xf32>
    %18 = arith.divf %16, %17 : vector<16x1xf32>
    %cst_11 = arith.constant 9.99999974E-6 : f32
    %19 = vector.broadcast %cst_11 : f32 to vector<16x1xf32>
    %20 = arith.addf %18, %19 : vector<16x1xf32>
    %21 = math.rsqrt %20 : vector<16x1xf32>
    %22 = vector.broadcast %21 : vector<16x1xf32> to vector<16x32xf32>
    %23 = arith.mulf %13, %22 : vector<16x32xf32>
    %c0_12 = arith.constant 0 : index
    %c0_13 = arith.constant 0 : index
    %24 = vector.load %arg5[%c0_12, %c0_13] : memref<1x32xf32, #tpu.memory_space<vmem>>, vector<1x32xf32>
    %25 = vector.broadcast %24 : vector<1x32xf32> to vector<16x32xf32>
    %26 = arith.mulf %23, %25 : vector<16x32xf32>
    %c0_14 = arith.constant 0 : index
    %c0_15 = arith.constant 0 : index
    %27 = vector.load %arg6[%c0_14, %c0_15] : memref<1x32xf32, #tpu.memory_space<vmem>>, vector<1x32xf32>
    %28 = vector.broadcast %27 : vector<1x32xf32> to vector<16x32xf32>
    %29 = arith.addf %26, %28 : vector<16x32xf32>
    %c0_16 = arith.constant 0 : index
    %c0_17 = arith.constant 0 : index
    %30 = vector.load %arg7[%c0_16, %c0_17] : memref<16x32xf32, #tpu.memory_space<vmem>>, vector<16x32xf32>
    tpu.vector_store %arg7[%c0_16, %c0_17], %29 {strides = array<i32>} : memref<16x32xf32, #tpu.memory_space<vmem>>, vector<16x32xf32>,
    return
  }
  func.func @transform_0(%arg0: i32) -> (i32, i32) {
    %c0_i32 = arith.constant 0 : i32
    %c0_i32_0 = arith.constant 0 : i32
    return %arg0, %c0_i32 : i32, i32
  }
  func.func @transform_1(%arg0: i32) -> (i32, i32) {
    %c0_i32 = arith.constant 0 : i32
    %c0_i32_0 = arith.constant 0 : i32
    %c0_i32_1 = arith.constant 0 : i32
    return %c0_i32, %c0_i32_0 : i32, i32
  }
  func.func @transform_2(%arg0: i32) -> (i32, i32) {
    %c0_i32 = arith.constant 0 : i32
    %c0_i32_0 = arith.constant 0 : i32
    %c0_i32_1 = arith.constant 0 : i32
    return %c0_i32, %c0_i32_0 : i32, i32
  }
  func.func @transform_3(%arg0: i32) -> (i32, i32) {
    %c0_i32 = arith.constant 0 : i32
    %c0_i32_0 = arith.constant 0 : i32
    return %arg0, %c0_i32 : i32, i32
  }
  func.func @transform_4(%arg0: i32) -> (i32, i32) {
    %c0_i32 = arith.constant 0 : i32
    %c0_i32_0 = arith.constant 0 : i32
    %c0_i32_1 = arith.constant 0 : i32
    return %c0_i32, %c0_i32_0 : i32, i32
  }
  func.func @transform_5(%arg0: i32) -> (i32, i32) {
    %c0_i32 = arith.constant 0 : i32
    %c0_i32_0 = arith.constant 0 : i32
    %c0_i32_1 = arith.constant 0 : i32
    return %c0_i32, %c0_i32_0 : i32, i32
  }
  func.func @transform_6(%arg0: i32) -> (i32, i32) {
    %c0_i32 = arith.constant 0 : i32
    %c0_i32_0 = arith.constant 0 : i32
    return %arg0, %c0_i32 : i32, i32
  }
}

module attributes {stable_mosaic.version = 11 : i64} {
  func.func @_mha_kernel(%arg0: i32, %arg1: memref<1x8x32xf32, #tpu.memory_space<vmem>>, %arg2: memref<1x8x32xf32, #tpu.memory_space<vmem>>, %arg3: memref<1x8x32xf32, #tpu.memory_space<vmem>>, %arg4: memref<1x1x8xf32, #tpu.memory_space<vmem>>, %arg5: memref<1x8x32xf32, #tpu.memory_space<vmem>>) attributes {dimension_semantics = [#tpu.dimension_semantics<parallel>], iteration_bounds = array<i64: 2>, scalar_prefetch = 0 : i64, scratch_operands = 0 : i64, tpu.core_type = #tpu.core_type<tc>, window_params = [{transform_indices = @transform_0, window_bounds = array<i64: 1, 8, 32>}, {transform_indices = @transform_1, window_bounds = array<i64: 1, 8, 32>}, {transform_indices = @transform_2, window_bounds = array<i64: 1, 8, 32>}, {transform_indices = @transform_3, window_bounds = array<i64: 1, 1, 8>}, {transform_indices = @transform_4, window_bounds = array<i64: 1, 8, 32>}]} {
    %c0 = arith.constant 0 : index
    %c0_0 = arith.constant 0 : index
    %c0_1 = arith.constant 0 : index
    %0 = vector.load %arg1[%c0, %c0_0, %c0_1] : memref<1x8x32xf32, #tpu.memory_space<vmem>>, vector<1x8x32xf32>
    %1 = vector.shape_cast %0 : vector<1x8x32xf32> to vector<8x32xf32>
    %c0_2 = arith.constant 0 : index
    %c0_3 = arith.constant 0 : index
    %c0_4 = arith.constant 0 : index
    %2 = vector.load %arg2[%c0_2, %c0_3, %c0_4] : memref<1x8x32xf32, #tpu.memory_space<vmem>>, vector<1x8x32xf32>
    %3 = vector.shape_cast %2 : vector<1x8x32xf32> to vector<8x32xf32>
    %c0_5 = arith.constant 0 : index
    %c0_6 = arith.constant 0 : index
    %c0_7 = arith.constant 0 : index
    %4 = vector.load %arg3[%c0_5, %c0_6, %c0_7] : memref<1x8x32xf32, #tpu.memory_space<vmem>>, vector<1x8x32xf32>
    %5 = vector.shape_cast %4 : vector<1x8x32xf32> to vector<8x32xf32>
    %c0_8 = arith.constant 0 : index
    %c0_9 = arith.constant 0 : index
    %c0_10 = arith.constant 0 : index
    %6 = vector.load %arg4[%c0_8, %c0_9, %c0_10] : memref<1x1x8xf32, #tpu.memory_space<vmem>>, vector<1x1x8xf32>
    %7 = vector.shape_cast %6 : vector<1x1x8xf32> to vector<1x8xf32>
    %8 = vector.extract_strided_slice %1 {offsets = [0, 0], sizes = [8, 8], strides = [1, 1]} : vector<8x32xf32> to vector<8x8xf32>
    %9 = vector.extract_strided_slice %3 {offsets = [0, 0], sizes = [8, 8], strides = [1, 1]} : vector<8x32xf32> to vector<8x8xf32>
    %cst = arith.constant dense<0.000000e+00> : vector<8x8xf32>
    %10 = tpu.matmul %8, %9, %cst {dimension_numbers = #tpu.dot_dimension_numbers<[1], [1], [0], [0], [0, 0, 1, 0], [], []>} : vector<8x8xf32>, vector<8x8xf32>, vector<8x8xf32> -> vector<8x8xf32>
    %cst_11 = arith.constant 0.353553385 : f32
    %11 = vector.broadcast %cst_11 : f32 to vector<8x8xf32>
    %12 = arith.mulf %10, %11 : vector<8x8xf32>
    %13 = vector.broadcast %7 : vector<1x8xf32> to vector<8x8xf32>
    %14 = arith.addf %12, %13 : vector<8x8xf32>
    %cst_12 = arith.constant dense<0xFF800000> : vector<8xf32>
    %15 = vector.multi_reduction <maximumf>, %14, %cst_12 [1] : vector<8x8xf32> to vector<8xf32>
    %16 = vector.shape_cast %15 : vector<8xf32> to vector<8x1xf32>
    %17 = vector.broadcast %16 : vector<8x1xf32> to vector<8x8xf32>
    %18 = arith.subf %14, %17 : vector<8x8xf32>
    %19 = math.exp %18 : vector<8x8xf32>
    %cst_13 = arith.constant dense<0.000000e+00> : vector<8xf32>
    %20 = vector.multi_reduction <add>, %19, %cst_13 [1] : vector<8x8xf32> to vector<8xf32>
    %21 = vector.shape_cast %20 : vector<8xf32> to vector<8x1xf32>
    %22 = tpu.reciprocal %21 {approx = true} : vector<8x1xf32> -> vector<8x1xf32>
    %23 = vector.broadcast %22 : vector<8x1xf32> to vector<8x8xf32>
    %24 = arith.mulf %19, %23 : vector<8x8xf32>
    %25 = vector.extract_strided_slice %5 {offsets = [0, 0], sizes = [8, 8], strides = [1, 1]} : vector<8x32xf32> to vector<8x8xf32>
    %cst_14 = arith.constant dense<0.000000e+00> : vector<8x8xf32>
    %26 = tpu.matmul %24, %25, %cst_14 {dimension_numbers = #tpu.dot_dimension_numbers<[1], [0], [0], [1], [0, 0, 1, 1], [], []>} : vector<8x8xf32>, vector<8x8xf32>, vector<8x8xf32> -> vector<8x8xf32>
    %27 = vector.extract_strided_slice %1 {offsets = [0, 8], sizes = [8, 8], strides = [1, 1]} : vector<8x32xf32> to vector<8x8xf32>
    %28 = vector.extract_strided_slice %3 {offsets = [0, 8], sizes = [8, 8], strides = [1, 1]} : vector<8x32xf32> to vector<8x8xf32>
    %cst_15 = arith.constant dense<0.000000e+00> : vector<8x8xf32>
    %29 = tpu.matmul %27, %28, %cst_15 {dimension_numbers = #tpu.dot_dimension_numbers<[1], [1], [0], [0], [0, 0, 1, 0], [], []>} : vector<8x8xf32>, vector<8x8xf32>, vector<8x8xf32> -> vector<8x8xf32>
    %cst_16 = arith.constant 0.353553385 : f32
    %30 = vector.broadcast %cst_16 : f32 to vector<8x8xf32>
    %31 = arith.mulf %29, %30 : vector<8x8xf32>
    %32 = vector.broadcast %7 : vector<1x8xf32> to vector<8x8xf32>
    %33 = arith.addf %31, %32 : vector<8x8xf32>
    %cst_17 = arith.constant dense<0xFF800000> : vector<8xf32>
    %34 = vector.multi_reduction <maximumf>, %33, %cst_17 [1] : vector<8x8xf32> to vector<8xf32>
    %35 = vector.shape_cast %34 : vector<8xf32> to vector<8x1xf32>
    %36 = vector.broadcast %35 : vector<8x1xf32> to vector<8x8xf32>
    %37 = arith.subf %33, %36 : vector<8x8xf32>
    %38 = math.exp %37 : vector<8x8xf32>
    %cst_18 = arith.constant dense<0.000000e+00> : vector<8xf32>
    %39 = vector.multi_reduction <add>, %38, %cst_18 [1] : vector<8x8xf32> to vector<8xf32>
    %40 = vector.shape_cast %39 : vector<8xf32> to vector<8x1xf32>
    %41 = tpu.reciprocal %40 {approx = true} : vector<8x1xf32> -> vector<8x1xf32>
    %42 = vector.broadcast %41 : vector<8x1xf32> to vector<8x8xf32>
    %43 = arith.mulf %38, %42 : vector<8x8xf32>
    %44 = vector.extract_strided_slice %5 {offsets = [0, 8], sizes = [8, 8], strides = [1, 1]} : vector<8x32xf32> to vector<8x8xf32>
    %cst_19 = arith.constant dense<0.000000e+00> : vector<8x8xf32>
    %45 = tpu.matmul %43, %44, %cst_19 {dimension_numbers = #tpu.dot_dimension_numbers<[1], [0], [0], [1], [0, 0, 1, 1], [], []>} : vector<8x8xf32>, vector<8x8xf32>, vector<8x8xf32> -> vector<8x8xf32>
    %46 = vector.extract_strided_slice %1 {offsets = [0, 16], sizes = [8, 8], strides = [1, 1]} : vector<8x32xf32> to vector<8x8xf32>
    %47 = vector.extract_strided_slice %3 {offsets = [0, 16], sizes = [8, 8], strides = [1, 1]} : vector<8x32xf32> to vector<8x8xf32>
    %cst_20 = arith.constant dense<0.000000e+00> : vector<8x8xf32>
    %48 = tpu.matmul %46, %47, %cst_20 {dimension_numbers = #tpu.dot_dimension_numbers<[1], [1], [0], [0], [0, 0, 1, 0], [], []>} : vector<8x8xf32>, vector<8x8xf32>, vector<8x8xf32> -> vector<8x8xf32>
    %cst_21 = arith.constant 0.353553385 : f32
    %49 = vector.broadcast %cst_21 : f32 to vector<8x8xf32>
    %50 = arith.mulf %48, %49 : vector<8x8xf32>
    %51 = vector.broadcast %7 : vector<1x8xf32> to vector<8x8xf32>
    %52 = arith.addf %50, %51 : vector<8x8xf32>
    %cst_22 = arith.constant dense<0xFF800000> : vector<8xf32>
    %53 = vector.multi_reduction <maximumf>, %52, %cst_22 [1] : vector<8x8xf32> to vector<8xf32>
    %54 = vector.shape_cast %53 : vector<8xf32> to vector<8x1xf32>
    %55 = vector.broadcast %54 : vector<8x1xf32> to vector<8x8xf32>
    %56 = arith.subf %52, %55 : vector<8x8xf32>
    %57 = math.exp %56 : vector<8x8xf32>
    %cst_23 = arith.constant dense<0.000000e+00> : vector<8xf32>
    %58 = vector.multi_reduction <add>, %57, %cst_23 [1] : vector<8x8xf32> to vector<8xf32>
    %59 = vector.shape_cast %58 : vector<8xf32> to vector<8x1xf32>
    %60 = tpu.reciprocal %59 {approx = true} : vector<8x1xf32> -> vector<8x1xf32>
    %61 = vector.broadcast %60 : vector<8x1xf32> to vector<8x8xf32>
    %62 = arith.mulf %57, %61 : vector<8x8xf32>
    %63 = vector.extract_strided_slice %5 {offsets = [0, 16], sizes = [8, 8], strides = [1, 1]} : vector<8x32xf32> to vector<8x8xf32>
    %cst_24 = arith.constant dense<0.000000e+00> : vector<8x8xf32>
    %64 = tpu.matmul %62, %63, %cst_24 {dimension_numbers = #tpu.dot_dimension_numbers<[1], [0], [0], [1], [0, 0, 1, 1], [], []>} : vector<8x8xf32>, vector<8x8xf32>, vector<8x8xf32> -> vector<8x8xf32>
    %65 = vector.extract_strided_slice %1 {offsets = [0, 24], sizes = [8, 8], strides = [1, 1]} : vector<8x32xf32> to vector<8x8xf32>
    %66 = vector.extract_strided_slice %3 {offsets = [0, 24], sizes = [8, 8], strides = [1, 1]} : vector<8x32xf32> to vector<8x8xf32>
    %cst_25 = arith.constant dense<0.000000e+00> : vector<8x8xf32>
    %67 = tpu.matmul %65, %66, %cst_25 {dimension_numbers = #tpu.dot_dimension_numbers<[1], [1], [0], [0], [0, 0, 1, 0], [], []>} : vector<8x8xf32>, vector<8x8xf32>, vector<8x8xf32> -> vector<8x8xf32>
    %cst_26 = arith.constant 0.353553385 : f32
    %68 = vector.broadcast %cst_26 : f32 to vector<8x8xf32>
    %69 = arith.mulf %67, %68 : vector<8x8xf32>
    %70 = vector.broadcast %7 : vector<1x8xf32> to vector<8x8xf32>
    %71 = arith.addf %69, %70 : vector<8x8xf32>
    %cst_27 = arith.constant dense<0xFF800000> : vector<8xf32>
    %72 = vector.multi_reduction <maximumf>, %71, %cst_27 [1] : vector<8x8xf32> to vector<8xf32>
    %73 = vector.shape_cast %72 : vector<8xf32> to vector<8x1xf32>
    %74 = vector.broadcast %73 : vector<8x1xf32> to vector<8x8xf32>
    %75 = arith.subf %71, %74 : vector<8x8xf32>
    %76 = math.exp %75 : vector<8x8xf32>
    %cst_28 = arith.constant dense<0.000000e+00> : vector<8xf32>
    %77 = vector.multi_reduction <add>, %76, %cst_28 [1] : vector<8x8xf32> to vector<8xf32>
    %78 = vector.shape_cast %77 : vector<8xf32> to vector<8x1xf32>
    %79 = tpu.reciprocal %78 {approx = true} : vector<8x1xf32> -> vector<8x1xf32>
    %80 = vector.broadcast %79 : vector<8x1xf32> to vector<8x8xf32>
    %81 = arith.mulf %76, %80 : vector<8x8xf32>
    %82 = vector.extract_strided_slice %5 {offsets = [0, 24], sizes = [8, 8], strides = [1, 1]} : vector<8x32xf32> to vector<8x8xf32>
    %cst_29 = arith.constant dense<0.000000e+00> : vector<8x8xf32>
    %83 = tpu.matmul %81, %82, %cst_29 {dimension_numbers = #tpu.dot_dimension_numbers<[1], [0], [0], [1], [0, 0, 1, 1], [], []>} : vector<8x8xf32>, vector<8x8xf32>, vector<8x8xf32> -> vector<8x8xf32>
    %84 = tpu.concatenate %26, %45, %64, %83 in 1 : vector<8x8xf32>, vector<8x8xf32>, vector<8x8xf32>, vector<8x8xf32> -> vector<8x32xf32>
    %c0_30 = arith.constant 0 : index
    %c0_31 = arith.constant 0 : index
    %c0_32 = arith.constant 0 : index
    %85 = vector.load %arg5[%c0_30, %c0_31, %c0_32] : memref<1x8x32xf32, #tpu.memory_space<vmem>>, vector<1x8x32xf32>
    %86 = vector.shape_cast %85 : vector<1x8x32xf32> to vector<8x32xf32>
    %87 = vector.shape_cast %84 : vector<8x32xf32> to vector<1x8x32xf32>
    tpu.vector_store %arg5[%c0_30, %c0_31, %c0_32], %87 {strides = array<i32>} : memref<1x8x32xf32, #tpu.memory_space<vmem>>, vector<1x8x32xf32>,
    return
  }
  func.func @transform_0(%arg0: i32) -> (i32, i32, i32) {
    %c0_i32 = arith.constant 0 : i32
    %c0_i32_0 = arith.constant 0 : i32
    %c0_i32_1 = arith.constant 0 : i32
    return %arg0, %c0_i32, %c0_i32_0 : i32, i32, i32
  }
  func.func @transform_1(%arg0: i32) -> (i32, i32, i32) {
    %c0_i32 = arith.constant 0 : i32
    %c0_i32_0 = arith.constant 0 : i32
    %c0_i32_1 = arith.constant 0 : i32
    return %arg0, %c0_i32, %c0_i32_0 : i32, i32, i32
  }
  func.func @transform_2(%arg0: i32) -> (i32, i32, i32) {
    %c0_i32 = arith.constant 0 : i32
    %c0_i32_0 = arith.constant 0 : i32
    %c0_i32_1 = arith.constant 0 : i32
    return %arg0, %c0_i32, %c0_i32_0 : i32, i32, i32
  }
  func.func @transform_3(%arg0: i32) -> (i32, i32, i32) {
    %c0_i32 = arith.constant 0 : i32
    %c0_i32_0 = arith.constant 0 : i32
    %c0_i32_1 = arith.constant 0 : i32
    return %arg0, %c0_i32, %c0_i32_0 : i32, i32, i32
  }
  func.func @transform_4(%arg0: i32) -> (i32, i32, i32) {
    %c0_i32 = arith.constant 0 : i32
    %c0_i32_0 = arith.constant 0 : i32
    %c0_i32_1 = arith.constant 0 : i32
    return %arg0, %c0_i32, %c0_i32_0 : i32, i32, i32
  }
}

module attributes {stable_mosaic.version = 11 : i64} {
  func.func @_linear_kernel(%arg0: i32, %arg1: i32, %arg2: memref<16x32xf32, #tpu.memory_space<vmem>>, %arg3: memref<32x32xf32, #tpu.memory_space<vmem>>, %arg4: memref<1x32xf32, #tpu.memory_space<vmem>>, %arg5: memref<16x32xf32, #tpu.memory_space<vmem>>) attributes {dimension_semantics = [#tpu.dimension_semantics<parallel>, #tpu.dimension_semantics<parallel>], iteration_bounds = array<i64: 1, 1>, scalar_prefetch = 0 : i64, scratch_operands = 0 : i64, tpu.core_type = #tpu.core_type<tc>, window_params = [{transform_indices = @transform_0, window_bounds = array<i64: 16, 32>}, {transform_indices = @transform_1, window_bounds = array<i64: 32, 32>}, {transform_indices = @transform_2, window_bounds = array<i64: 1, 32>}, {transform_indices = @transform_3, window_bounds = array<i64: 16, 32>}]} {
    %c0 = arith.constant 0 : index
    %c0_0 = arith.constant 0 : index
    %0 = vector.load %arg2[%c0, %c0_0] : memref<16x32xf32, #tpu.memory_space<vmem>>, vector<16x32xf32>
    %c0_1 = arith.constant 0 : index
    %c0_2 = arith.constant 0 : index
    %1 = vector.load %arg3[%c0_1, %c0_2] : memref<32x32xf32, #tpu.memory_space<vmem>>, vector<32x32xf32>
    %cst = arith.constant dense<0.000000e+00> : vector<16x32xf32>
    %2 = tpu.matmul %0, %1, %cst {dimension_numbers = #tpu.dot_dimension_numbers<[1], [0], [0], [1], [0, 0, 1, 1], [], []>} : vector<16x32xf32>, vector<32x32xf32>, vector<16x32xf32> -> vector<16x32xf32>
    %c0_3 = arith.constant 0 : index
    %c0_4 = arith.constant 0 : index
    %3 = vector.load %arg4[%c0_3, %c0_4] : memref<1x32xf32, #tpu.memory_space<vmem>>, vector<1x32xf32>
    %4 = vector.broadcast %3 : vector<1x32xf32> to vector<16x32xf32>
    %5 = arith.addf %2, %4 : vector<16x32xf32>
    %c0_5 = arith.constant 0 : index
    %c0_6 = arith.constant 0 : index
    %6 = vector.load %arg5[%c0_5, %c0_6] : memref<16x32xf32, #tpu.memory_space<vmem>>, vector<16x32xf32>
    tpu.vector_store %arg5[%c0_5, %c0_6], %5 {strides = array<i32>} : memref<16x32xf32, #tpu.memory_space<vmem>>, vector<16x32xf32>,
    return
  }
  func.func @transform_0(%arg0: i32, %arg1: i32) -> (i32, i32) {
    %c0_i32 = arith.constant 0 : i32
    %c0_i32_0 = arith.constant 0 : i32
    return %arg0, %c0_i32 : i32, i32
  }
  func.func @transform_1(%arg0: i32, %arg1: i32) -> (i32, i32) {
    %c0_i32 = arith.constant 0 : i32
    %c0_i32_0 = arith.constant 0 : i32
    return %c0_i32, %arg1 : i32, i32
  }
  func.func @transform_2(%arg0: i32, %arg1: i32) -> (i32, i32) {
    %c0_i32 = arith.constant 0 : i32
    %c0_i32_0 = arith.constant 0 : i32
    return %c0_i32, %arg1 : i32, i32
  }
  func.func @transform_3(%arg0: i32, %arg1: i32) -> (i32, i32) {
    %c0_i32 = arith.constant 0 : i32
    return %arg0, %arg1 : i32, i32
  }
}

module attributes {stable_mosaic.version = 11 : i64} {
  func.func @_linear_add_ln_kernel(%arg0: i32, %arg1: memref<16x64xf32, #tpu.memory_space<vmem>>, %arg2: memref<64x32xf32, #tpu.memory_space<vmem>>, %arg3: memref<1x32xf32, #tpu.memory_space<vmem>>, %arg4: memref<16x32xf32, #tpu.memory_space<vmem>>, %arg5: memref<1x32xf32, #tpu.memory_space<vmem>>, %arg6: memref<1x32xf32, #tpu.memory_space<vmem>>, %arg7: memref<16x32xf32, #tpu.memory_space<vmem>>) attributes {dimension_semantics = [#tpu.dimension_semantics<parallel>], iteration_bounds = array<i64: 1>, scalar_prefetch = 0 : i64, scratch_operands = 0 : i64, tpu.core_type = #tpu.core_type<tc>, window_params = [{transform_indices = @transform_0, window_bounds = array<i64: 16, 64>}, {pipeline_mode = #tpu.pipeline_mode<synchronous>, transform_indices = @transform_1, window_bounds = array<i64: 64, 32>}, {pipeline_mode = #tpu.pipeline_mode<synchronous>, transform_indices = @transform_2, window_bounds = array<i64: 1, 32>}, {transform_indices = @transform_3, window_bounds = array<i64: 16, 32>}, {pipeline_mode = #tpu.pipeline_mode<synchronous>, transform_indices = @transform_4, window_bounds = array<i64: 1, 32>}, {pipeline_mode = #tpu.pipeline_mode<synchronous>, transform_indices = @transform_5, window_bounds = array<i64: 1, 32>}, {transform_indices = @transform_6, window_bounds = array<i64: 16, 32>}]} {
    %c0 = arith.constant 0 : index
    %c0_0 = arith.constant 0 : index
    %0 = vector.load %arg1[%c0, %c0_0] : memref<16x64xf32, #tpu.memory_space<vmem>>, vector<16x64xf32>
    %c0_1 = arith.constant 0 : index
    %c0_2 = arith.constant 0 : index
    %1 = vector.load %arg2[%c0_1, %c0_2] : memref<64x32xf32, #tpu.memory_space<vmem>>, vector<64x32xf32>
    %cst = arith.constant dense<0.000000e+00> : vector<16x32xf32>
    %2 = tpu.matmul %0, %1, %cst {dimension_numbers = #tpu.dot_dimension_numbers<[1], [0], [0], [1], [0, 0, 1, 1], [], []>} : vector<16x64xf32>, vector<64x32xf32>, vector<16x32xf32> -> vector<16x32xf32>
    %c0_3 = arith.constant 0 : index
    %c0_4 = arith.constant 0 : index
    %3 = vector.load %arg3[%c0_3, %c0_4] : memref<1x32xf32, #tpu.memory_space<vmem>>, vector<1x32xf32>
    %4 = vector.broadcast %3 : vector<1x32xf32> to vector<16x32xf32>
    %5 = arith.addf %2, %4 : vector<16x32xf32>
    %c0_5 = arith.constant 0 : index
    %c0_6 = arith.constant 0 : index
    %6 = vector.load %arg4[%c0_5, %c0_6] : memref<16x32xf32, #tpu.memory_space<vmem>>, vector<16x32xf32>
    %7 = arith.addf %5, %6 : vector<16x32xf32>
    %cst_7 = arith.constant dense<0.000000e+00> : vector<16xf32>
    %8 = vector.multi_reduction <add>, %7, %cst_7 [1] : vector<16x32xf32> to vector<16xf32>
    %9 = vector.shape_cast %8 : vector<16xf32> to vector<16x1xf32>
    %cst_8 = arith.constant 3.200000e+01 : f32
    %10 = vector.broadcast %cst_8 : f32 to vector<16x1xf32>
    %11 = arith.divf %9, %10 : vector<16x1xf32>
    %12 = vector.broadcast %11 : vector<16x1xf32> to vector<16x32xf32>
    %13 = arith.subf %7, %12 : vector<16x32xf32>
    %14 = arith.mulf %13, %13 : vector<16x32xf32>
    %cst_9 = arith.constant dense<0.000000e+00> : vector<16xf32>
    %15 = vector.multi_reduction <add>, %14, %cst_9 [1] : vector<16x32xf32> to vector<16xf32>
    %16 = vector.shape_cast %15 : vector<16xf32> to vector<16x1xf32>
    %cst_10 = arith.constant 3.200000e+01 : f32
    %17 = vector.broadcast %cst_10 : f32 to vector<16x1xf32>
    %18 = arith.divf %16, %17 : vector<16x1xf32>
    %cst_11 = arith.constant 9.99999974E-6 : f32
    %19 = vector.broadcast %cst_11 : f32 to vector<16x1xf32>
    %20 = arith.addf %18, %19 : vector<16x1xf32>
    %21 = math.rsqrt %20 : vector<16x1xf32>
    %22 = vector.broadcast %21 : vector<16x1xf32> to vector<16x32xf32>
    %23 = arith.mulf %13, %22 : vector<16x32xf32>
    %c0_12 = arith.constant 0 : index
    %c0_13 = arith.constant 0 : index
    %24 = vector.load %arg5[%c0_12, %c0_13] : memref<1x32xf32, #tpu.memory_space<vmem>>, vector<1x32xf32>
    %25 = vector.broadcast %24 : vector<1x32xf32> to vector<16x32xf32>
    %26 = arith.mulf %23, %25 : vector<16x32xf32>
    %c0_14 = arith.constant 0 : index
    %c0_15 = arith.constant 0 : index
    %27 = vector.load %arg6[%c0_14, %c0_15] : memref<1x32xf32, #tpu.memory_space<vmem>>, vector<1x32xf32>
    %28 = vector.broadcast %27 : vector<1x32xf32> to vector<16x32xf32>
    %29 = arith.addf %26, %28 : vector<16x32xf32>
    %c0_16 = arith.constant 0 : index
    %c0_17 = arith.constant 0 : index
    %30 = vector.load %arg7[%c0_16, %c0_17] : memref<16x32xf32, #tpu.memory_space<vmem>>, vector<16x32xf32>
    tpu.vector_store %arg7[%c0_16, %c0_17], %29 {strides = array<i32>} : memref<16x32xf32, #tpu.memory_space<vmem>>, vector<16x32xf32>,
    return
  }
  func.func @transform_0(%arg0: i32) -> (i32, i32) {
    %c0_i32 = arith.constant 0 : i32
    %c0_i32_0 = arith.constant 0 : i32
    return %arg0, %c0_i32 : i32, i32
  }
  func.func @transform_1(%arg0: i32) -> (i32, i32) {
    %c0_i32 = arith.constant 0 : i32
    %c0_i32_0 = arith.constant 0 : i32
    %c0_i32_1 = arith.constant 0 : i32
    return %c0_i32, %c0_i32_0 : i32, i32
  }
  func.func @transform_2(%arg0: i32) -> (i32, i32) {
    %c0_i32 = arith.constant 0 : i32
    %c0_i32_0 = arith.constant 0 : i32
    %c0_i32_1 = arith.constant 0 : i32
    return %c0_i32, %c0_i32_0 : i32, i32
  }
  func.func @transform_3(%arg0: i32) -> (i32, i32) {
    %c0_i32 = arith.constant 0 : i32
    %c0_i32_0 = arith.constant 0 : i32
    return %arg0, %c0_i32 : i32, i32
  }
  func.func @transform_4(%arg0: i32) -> (i32, i32) {
    %c0_i32 = arith.constant 0 : i32
    %c0_i32_0 = arith.constant 0 : i32
    %c0_i32_1 = arith.constant 0 : i32
    return %c0_i32, %c0_i32_0 : i32, i32
  }
  func.func @transform_5(%arg0: i32) -> (i32, i32) {
    %c0_i32 = arith.constant 0 : i32
    %c0_i32_0 = arith.constant 0 : i32
    %c0_i32_1 = arith.constant 0 : i32
    return %c0_i32, %c0_i32_0 : i32, i32
  }
  func.func @transform_6(%arg0: i32) -> (i32, i32) {
    %c0_i32 = arith.constant 0 : i32
    %c0_i32_0 = arith.constant 0 : i32
    return %arg0, %c0_i32 : i32, i32
  }
}

module attributes {stable_mosaic.version = 11 : i64} {
  func.func @_mha_kernel(%arg0: i32, %arg1: memref<1x8x32xf32, #tpu.memory_space<vmem>>, %arg2: memref<1x10x32xf32, #tpu.memory_space<vmem>>, %arg3: memref<1x10x32xf32, #tpu.memory_space<vmem>>, %arg4: memref<1x1x10xf32, #tpu.memory_space<vmem>>, %arg5: memref<1x8x32xf32, #tpu.memory_space<vmem>>) attributes {dimension_semantics = [#tpu.dimension_semantics<parallel>], iteration_bounds = array<i64: 2>, scalar_prefetch = 0 : i64, scratch_operands = 0 : i64, tpu.core_type = #tpu.core_type<tc>, window_params = [{transform_indices = @transform_0, window_bounds = array<i64: 1, 8, 32>}, {transform_indices = @transform_1, window_bounds = array<i64: 1, 10, 32>}, {transform_indices = @transform_2, window_bounds = array<i64: 1, 10, 32>}, {transform_indices = @transform_3, window_bounds = array<i64: 1, 1, 10>}, {transform_indices = @transform_4, window_bounds = array<i64: 1, 8, 32>}]} {
    %c0 = arith.constant 0 : index
    %c0_0 = arith.constant 0 : index
    %c0_1 = arith.constant 0 : index
    %0 = vector.load %arg1[%c0, %c0_0, %c0_1] : memref<1x8x32xf32, #tpu.memory_space<vmem>>, vector<1x8x32xf32>
    %1 = vector.shape_cast %0 : vector<1x8x32xf32> to vector<8x32xf32>
    %c0_2 = arith.constant 0 : index
    %c0_3 = arith.constant 0 : index
    %c0_4 = arith.constant 0 : index
    %2 = vector.load %arg2[%c0_2, %c0_3, %c0_4] : memref<1x10x32xf32, #tpu.memory_space<vmem>>, vector<1x10x32xf32>
    %3 = vector.shape_cast %2 : vector<1x10x32xf32> to vector<10x32xf32>
    %c0_5 = arith.constant 0 : index
    %c0_6 = arith.constant 0 : index
    %c0_7 = arith.constant 0 : index
    %4 = vector.load %arg3[%c0_5, %c0_6, %c0_7] : memref<1x10x32xf32, #tpu.memory_space<vmem>>, vector<1x10x32xf32>
    %5 = vector.shape_cast %4 : vector<1x10x32xf32> to vector<10x32xf32>
    %c0_8 = arith.constant 0 : index
    %c0_9 = arith.constant 0 : index
    %c0_10 = arith.constant 0 : index
    %6 = vector.load %arg4[%c0_8, %c0_9, %c0_10] : memref<1x1x10xf32, #tpu.memory_space<vmem>>, vector<1x1x10xf32>
    %7 = vector.shape_cast %6 : vector<1x1x10xf32> to vector<1x10xf32>
    %8 = vector.extract_strided_slice %1 {offsets = [0, 0], sizes = [8, 8], strides = [1, 1]} : vector<8x32xf32> to vector<8x8xf32>
    %9 = vector.extract_strided_slice %3 {offsets = [0, 0], sizes = [10, 8], strides = [1, 1]} : vector<10x32xf32> to vector<10x8xf32>
    %cst = arith.constant dense<0.000000e+00> : vector<8x10xf32>
    %10 = tpu.matmul %8, %9, %cst {dimension_numbers = #tpu.dot_dimension_numbers<[1], [1], [0], [0], [0, 0, 1, 0], [], []>} : vector<8x8xf32>, vector<10x8xf32>, vector<8x10xf32> -> vector<8x10xf32>
    %cst_11 = arith.constant 0.353553385 : f32
    %11 = vector.broadcast %cst_11 : f32 to vector<8x10xf32>
    %12 = arith.mulf %10, %11 : vector<8x10xf32>
    %13 = vector.broadcast %7 : vector<1x10xf32> to vector<8x10xf32>
    %14 = arith.addf %12, %13 : vector<8x10xf32>
    %cst_12 = arith.constant dense<0xFF800000> : vector<8xf32>
    %15 = vector.multi_reduction <maximumf>, %14, %cst_12 [1] : vector<8x10xf32> to vector<8xf32>
    %16 = vector.shape_cast %15 : vector<8xf32> to vector<8x1xf32>
    %17 = vector.broadcast %16 : vector<8x1xf32> to vector<8x10xf32>
    %18 = arith.subf %14, %17 : vector<8x10xf32>
    %19 = math.exp %18 : vector<8x10xf32>
    %cst_13 = arith.constant dense<0.000000e+00> : vector<8xf32>
    %20 = vector.multi_reduction <add>, %19, %cst_13 [1] : vector<8x10xf32> to vector<8xf32>
    %21 = vector.shape_cast %20 : vector<8xf32> to vector<8x1xf32>
    %22 = tpu.reciprocal %21 {approx = true} : vector<8x1xf32> -> vector<8x1xf32>
    %23 = vector.broadcast %22 : vector<8x1xf32> to vector<8x10xf32>
    %24 = arith.mulf %19, %23 : vector<8x10xf32>
    %25 = vector.extract_strided_slice %5 {offsets = [0, 0], sizes = [10, 8], strides = [1, 1]} : vector<10x32xf32> to vector<10x8xf32>
    %cst_14 = arith.constant dense<0.000000e+00> : vector<8x8xf32>
    %26 = tpu.matmul %24, %25, %cst_14 {dimension_numbers = #tpu.dot_dimension_numbers<[1], [0], [0], [1], [0, 0, 1, 1], [], []>} : vector<8x10xf32>, vector<10x8xf32>, vector<8x8xf32> -> vector<8x8xf32>
    %27 = vector.extract_strided_slice %1 {offsets = [0, 8], sizes = [8, 8], strides = [1, 1]} : vector<8x32xf32> to vector<8x8xf32>
    %28 = vector.extract_strided_slice %3 {offsets = [0, 8], sizes = [10, 8], strides = [1, 1]} : vector<10x32xf32> to vector<10x8xf32>
    %cst_15 = arith.constant dense<0.000000e+00> : vector<8x10xf32>
    %29 = tpu.matmul %27, %28, %cst_15 {dimension_numbers = #tpu.dot_dimension_numbers<[1], [1], [0], [0], [0, 0, 1, 0], [], []>} : vector<8x8xf32>, vector<10x8xf32>, vector<8x10xf32> -> vector<8x10xf32>
    %cst_16 = arith.constant 0.353553385 : f32
    %30 = vector.broadcast %cst_16 : f32 to vector<8x10xf32>
    %31 = arith.mulf %29, %30 : vector<8x10xf32>
    %32 = vector.broadcast %7 : vector<1x10xf32> to vector<8x10xf32>
    %33 = arith.addf %31, %32 : vector<8x10xf32>
    %cst_17 = arith.constant dense<0xFF800000> : vector<8xf32>
    %34 = vector.multi_reduction <maximumf>, %33, %cst_17 [1] : vector<8x10xf32> to vector<8xf32>
    %35 = vector.shape_cast %34 : vector<8xf32> to vector<8x1xf32>
    %36 = vector.broadcast %35 : vector<8x1xf32> to vector<8x10xf32>
    %37 = arith.subf %33, %36 : vector<8x10xf32>
    %38 = math.exp %37 : vector<8x10xf32>
    %cst_18 = arith.constant dense<0.000000e+00> : vector<8xf32>
    %39 = vector.multi_reduction <add>, %38, %cst_18 [1] : vector<8x10xf32> to vector<8xf32>
    %40 = vector.shape_cast %39 : vector<8xf32> to vector<8x1xf32>
    %41 = tpu.reciprocal %40 {approx = true} : vector<8x1xf32> -> vector<8x1xf32>
    %42 = vector.broadcast %41 : vector<8x1xf32> to vector<8x10xf32>
    %43 = arith.mulf %38, %42 : vector<8x10xf32>
    %44 = vector.extract_strided_slice %5 {offsets = [0, 8], sizes = [10, 8], strides = [1, 1]} : vector<10x32xf32> to vector<10x8xf32>
    %cst_19 = arith.constant dense<0.000000e+00> : vector<8x8xf32>
    %45 = tpu.matmul %43, %44, %cst_19 {dimension_numbers = #tpu.dot_dimension_numbers<[1], [0], [0], [1], [0, 0, 1, 1], [], []>} : vector<8x10xf32>, vector<10x8xf32>, vector<8x8xf32> -> vector<8x8xf32>
    %46 = vector.extract_strided_slice %1 {offsets = [0, 16], sizes = [8, 8], strides = [1, 1]} : vector<8x32xf32> to vector<8x8xf32>
    %47 = vector.extract_strided_slice %3 {offsets = [0, 16], sizes = [10, 8], strides = [1, 1]} : vector<10x32xf32> to vector<10x8xf32>
    %cst_20 = arith.constant dense<0.000000e+00> : vector<8x10xf32>
    %48 = tpu.matmul %46, %47, %cst_20 {dimension_numbers = #tpu.dot_dimension_numbers<[1], [1], [0], [0], [0, 0, 1, 0], [], []>} : vector<8x8xf32>, vector<10x8xf32>, vector<8x10xf32> -> vector<8x10xf32>
    %cst_21 = arith.constant 0.353553385 : f32
    %49 = vector.broadcast %cst_21 : f32 to vector<8x10xf32>
    %50 = arith.mulf %48, %49 : vector<8x10xf32>
    %51 = vector.broadcast %7 : vector<1x10xf32> to vector<8x10xf32>
    %52 = arith.addf %50, %51 : vector<8x10xf32>
    %cst_22 = arith.constant dense<0xFF800000> : vector<8xf32>
    %53 = vector.multi_reduction <maximumf>, %52, %cst_22 [1] : vector<8x10xf32> to vector<8xf32>
    %54 = vector.shape_cast %53 : vector<8xf32> to vector<8x1xf32>
    %55 = vector.broadcast %54 : vector<8x1xf32> to vector<8x10xf32>
    %56 = arith.subf %52, %55 : vector<8x10xf32>
    %57 = math.exp %56 : vector<8x10xf32>
    %cst_23 = arith.constant dense<0.000000e+00> : vector<8xf32>
    %58 = vector.multi_reduction <add>, %57, %cst_23 [1] : vector<8x10xf32> to vector<8xf32>
    %59 = vector.shape_cast %58 : vector<8xf32> to vector<8x1xf32>
    %60 = tpu.reciprocal %59 {approx = true} : vector<8x1xf32> -> vector<8x1xf32>
    %61 = vector.broadcast %60 : vector<8x1xf32> to vector<8x10xf32>
    %62 = arith.mulf %57, %61 : vector<8x10xf32>
    %63 = vector.extract_strided_slice %5 {offsets = [0, 16], sizes = [10, 8], strides = [1, 1]} : vector<10x32xf32> to vector<10x8xf32>
    %cst_24 = arith.constant dense<0.000000e+00> : vector<8x8xf32>
    %64 = tpu.matmul %62, %63, %cst_24 {dimension_numbers = #tpu.dot_dimension_numbers<[1], [0], [0], [1], [0, 0, 1, 1], [], []>} : vector<8x10xf32>, vector<10x8xf32>, vector<8x8xf32> -> vector<8x8xf32>
    %65 = vector.extract_strided_slice %1 {offsets = [0, 24], sizes = [8, 8], strides = [1, 1]} : vector<8x32xf32> to vector<8x8xf32>
    %66 = vector.extract_strided_slice %3 {offsets = [0, 24], sizes = [10, 8], strides = [1, 1]} : vector<10x32xf32> to vector<10x8xf32>
    %cst_25 = arith.constant dense<0.000000e+00> : vector<8x10xf32>
    %67 = tpu.matmul %65, %66, %cst_25 {dimension_numbers = #tpu.dot_dimension_numbers<[1], [1], [0], [0], [0, 0, 1, 0], [], []>} : vector<8x8xf32>, vector<10x8xf32>, vector<8x10xf32> -> vector<8x10xf32>
    %cst_26 = arith.constant 0.353553385 : f32
    %68 = vector.broadcast %cst_26 : f32 to vector<8x10xf32>
    %69 = arith.mulf %67, %68 : vector<8x10xf32>
    %70 = vector.broadcast %7 : vector<1x10xf32> to vector<8x10xf32>
    %71 = arith.addf %69, %70 : vector<8x10xf32>
    %cst_27 = arith.constant dense<0xFF800000> : vector<8xf32>
    %72 = vector.multi_reduction <maximumf>, %71, %cst_27 [1] : vector<8x10xf32> to vector<8xf32>
    %73 = vector.shape_cast %72 : vector<8xf32> to vector<8x1xf32>
    %74 = vector.broadcast %73 : vector<8x1xf32> to vector<8x10xf32>
    %75 = arith.subf %71, %74 : vector<8x10xf32>
    %76 = math.exp %75 : vector<8x10xf32>
    %cst_28 = arith.constant dense<0.000000e+00> : vector<8xf32>
    %77 = vector.multi_reduction <add>, %76, %cst_28 [1] : vector<8x10xf32> to vector<8xf32>
    %78 = vector.shape_cast %77 : vector<8xf32> to vector<8x1xf32>
    %79 = tpu.reciprocal %78 {approx = true} : vector<8x1xf32> -> vector<8x1xf32>
    %80 = vector.broadcast %79 : vector<8x1xf32> to vector<8x10xf32>
    %81 = arith.mulf %76, %80 : vector<8x10xf32>
    %82 = vector.extract_strided_slice %5 {offsets = [0, 24], sizes = [10, 8], strides = [1, 1]} : vector<10x32xf32> to vector<10x8xf32>
    %cst_29 = arith.constant dense<0.000000e+00> : vector<8x8xf32>
    %83 = tpu.matmul %81, %82, %cst_29 {dimension_numbers = #tpu.dot_dimension_numbers<[1], [0], [0], [1], [0, 0, 1, 1], [], []>} : vector<8x10xf32>, vector<10x8xf32>, vector<8x8xf32> -> vector<8x8xf32>
    %84 = tpu.concatenate %26, %45, %64, %83 in 1 : vector<8x8xf32>, vector<8x8xf32>, vector<8x8xf32>, vector<8x8xf32> -> vector<8x32xf32>
    %c0_30 = arith.constant 0 : index
    %c0_31 = arith.constant 0 : index
    %c0_32 = arith.constant 0 : index
    %85 = vector.load %arg5[%c0_30, %c0_31, %c0_32] : memref<1x8x32xf32, #tpu.memory_space<vmem>>, vector<1x8x32xf32>
    %86 = vector.shape_cast %85 : vector<1x8x32xf32> to vector<8x32xf32>
    %87 = vector.shape_cast %84 : vector<8x32xf32> to vector<1x8x32xf32>
    tpu.vector_store %arg5[%c0_30, %c0_31, %c0_32], %87 {strides = array<i32>} : memref<1x8x32xf32, #tpu.memory_space<vmem>>, vector<1x8x32xf32>,
    return
  }
  func.func @transform_0(%arg0: i32) -> (i32, i32, i32) {
    %c0_i32 = arith.constant 0 : i32
    %c0_i32_0 = arith.constant 0 : i32
    %c0_i32_1 = arith.constant 0 : i32
    return %arg0, %c0_i32, %c0_i32_0 : i32, i32, i32
  }
  func.func @transform_1(%arg0: i32) -> (i32, i32, i32) {
    %c0_i32 = arith.constant 0 : i32
    %c0_i32_0 = arith.constant 0 : i32
    %c0_i32_1 = arith.constant 0 : i32
    return %arg0, %c0_i32, %c0_i32_0 : i32, i32, i32
  }
  func.func @transform_2(%arg0: i32) -> (i32, i32, i32) {
    %c0_i32 = arith.constant 0 : i32
    %c0_i32_0 = arith.constant 0 : i32
    %c0_i32_1 = arith.constant 0 : i32
    return %arg0, %c0_i32, %c0_i32_0 : i32, i32, i32
  }
  func.func @transform_3(%arg0: i32) -> (i32, i32, i32) {
    %c0_i32 = arith.constant 0 : i32
    %c0_i32_0 = arith.constant 0 : i32
    %c0_i32_1 = arith.constant 0 : i32
    return %arg0, %c0_i32, %c0_i32_0 : i32, i32, i32
  }
  func.func @transform_4(%arg0: i32) -> (i32, i32, i32) {
    %c0_i32 = arith.constant 0 : i32
    %c0_i32_0 = arith.constant 0 : i32
    %c0_i32_1 = arith.constant 0 : i32
    return %arg0, %c0_i32, %c0_i32_0 : i32, i32, i32
  }
}

module attributes {stable_mosaic.version = 11 : i64} {
  func.func @_linear_kernel(%arg0: i32, %arg1: i32, %arg2: memref<16x32xf32, #tpu.memory_space<vmem>>, %arg3: memref<32x64xf32, #tpu.memory_space<vmem>>, %arg4: memref<1x64xf32, #tpu.memory_space<vmem>>, %arg5: memref<16x64xf32, #tpu.memory_space<vmem>>) attributes {dimension_semantics = [#tpu.dimension_semantics<parallel>, #tpu.dimension_semantics<parallel>], iteration_bounds = array<i64: 1, 1>, scalar_prefetch = 0 : i64, scratch_operands = 0 : i64, tpu.core_type = #tpu.core_type<tc>, window_params = [{transform_indices = @transform_0, window_bounds = array<i64: 16, 32>}, {transform_indices = @transform_1, window_bounds = array<i64: 32, 64>}, {transform_indices = @transform_2, window_bounds = array<i64: 1, 64>}, {transform_indices = @transform_3, window_bounds = array<i64: 16, 64>}]} {
    %c0 = arith.constant 0 : index
    %c0_0 = arith.constant 0 : index
    %0 = vector.load %arg2[%c0, %c0_0] : memref<16x32xf32, #tpu.memory_space<vmem>>, vector<16x32xf32>
    %c0_1 = arith.constant 0 : index
    %c0_2 = arith.constant 0 : index
    %1 = vector.load %arg3[%c0_1, %c0_2] : memref<32x64xf32, #tpu.memory_space<vmem>>, vector<32x64xf32>
    %cst = arith.constant dense<0.000000e+00> : vector<16x64xf32>
    %2 = tpu.matmul %0, %1, %cst {dimension_numbers = #tpu.dot_dimension_numbers<[1], [0], [0], [1], [0, 0, 1, 1], [], []>} : vector<16x32xf32>, vector<32x64xf32>, vector<16x64xf32> -> vector<16x64xf32>
    %c0_3 = arith.constant 0 : index
    %c0_4 = arith.constant 0 : index
    %3 = vector.load %arg4[%c0_3, %c0_4] : memref<1x64xf32, #tpu.memory_space<vmem>>, vector<1x64xf32>
    %4 = vector.broadcast %3 : vector<1x64xf32> to vector<16x64xf32>
    %5 = arith.addf %2, %4 : vector<16x64xf32>
    %cst_5 = arith.constant 0.000000e+00 : f32
    %6 = vector.broadcast %cst_5 : f32 to vector<16x64xf32>
    %7 = arith.maximumf %5, %6 : vector<16x64xf32>
    %c0_6 = arith.constant 0 : index
    %c0_7 = arith.constant 0 : index
    %8 = vector.load %arg5[%c0_6, %c0_7] : memref<16x64xf32, #tpu.memory_space<vmem>>, vector<16x64xf32>
    tpu.vector_store %arg5[%c0_6, %c0_7], %7 {strides = array<i32>} : memref<16x64xf32, #tpu.memory_space<vmem>>, vector<16x64xf32>,
    return
  }
  func.func @transform_0(%arg0: i32, %arg1: i32) -> (i32, i32) {
    %c0_i32 = arith.constant 0 : i32
    %c0_i32_0 = arith.constant 0 : i32
    return %arg0, %c0_i32 : i32, i32
  }
  func.func @transform_1(%arg0: i32, %arg1: i32) -> (i32, i32) {
    %c0_i32 = arith.constant 0 : i32
    %c0_i32_0 = arith.constant 0 : i32
    return %c0_i32, %arg1 : i32, i32
  }
  func.func @transform_2(%arg0: i32, %arg1: i32) -> (i32, i32) {
    %c0_i32 = arith.constant 0 : i32
    %c0_i32_0 = arith.constant 0 : i32
    return %c0_i32, %arg1 : i32, i32
  }
  func.func @transform_3(%arg0: i32, %arg1: i32) -> (i32, i32) {
    %c0_i32 = arith.constant 0 : i32
    return %arg0, %arg1 : i32, i32
  }
}

module attributes {stable_mosaic.version = 11 : i64} {
  func.func @_linear_kernel(%arg0: i32, %arg1: i32, %arg2: memref<24x32xf32, #tpu.memory_space<vmem>>, %arg3: memref<32x64xf32, #tpu.memory_space<vmem>>, %arg4: memref<1x64xf32, #tpu.memory_space<vmem>>, %arg5: memref<24x64xf32, #tpu.memory_space<vmem>>) attributes {dimension_semantics = [#tpu.dimension_semantics<parallel>, #tpu.dimension_semantics<parallel>], iteration_bounds = array<i64: 1, 1>, scalar_prefetch = 0 : i64, scratch_operands = 0 : i64, tpu.core_type = #tpu.core_type<tc>, window_params = [{transform_indices = @transform_0, window_bounds = array<i64: 24, 32>}, {transform_indices = @transform_1, window_bounds = array<i64: 32, 64>}, {transform_indices = @transform_2, window_bounds = array<i64: 1, 64>}, {transform_indices = @transform_3, window_bounds = array<i64: 24, 64>}]} {
    %c0 = arith.constant 0 : index
    %c0_0 = arith.constant 0 : index
    %0 = vector.load %arg2[%c0, %c0_0] : memref<24x32xf32, #tpu.memory_space<vmem>>, vector<24x32xf32>
    %c0_1 = arith.constant 0 : index
    %c0_2 = arith.constant 0 : index
    %1 = vector.load %arg3[%c0_1, %c0_2] : memref<32x64xf32, #tpu.memory_space<vmem>>, vector<32x64xf32>
    %cst = arith.constant dense<0.000000e+00> : vector<24x64xf32>
    %2 = tpu.matmul %0, %1, %cst {dimension_numbers = #tpu.dot_dimension_numbers<[1], [0], [0], [1], [0, 0, 1, 1], [], []>} : vector<24x32xf32>, vector<32x64xf32>, vector<24x64xf32> -> vector<24x64xf32>
    %c0_3 = arith.constant 0 : index
    %c0_4 = arith.constant 0 : index
    %3 = vector.load %arg4[%c0_3, %c0_4] : memref<1x64xf32, #tpu.memory_space<vmem>>, vector<1x64xf32>
    %4 = vector.broadcast %3 : vector<1x64xf32> to vector<24x64xf32>
    %5 = arith.addf %2, %4 : vector<24x64xf32>
    %c0_5 = arith.constant 0 : index
    %c0_6 = arith.constant 0 : index
    %6 = vector.load %arg5[%c0_5, %c0_6] : memref<24x64xf32, #tpu.memory_space<vmem>>, vector<24x64xf32>
    tpu.vector_store %arg5[%c0_5, %c0_6], %5 {strides = array<i32>} : memref<24x64xf32, #tpu.memory_space<vmem>>, vector<24x64xf32>,
    return
  }
  func.func @transform_0(%arg0: i32, %arg1: i32) -> (i32, i32) {
    %c0_i32 = arith.constant 0 : i32
    %c0_i32_0 = arith.constant 0 : i32
    return %arg0, %c0_i32 : i32, i32
  }
  func.func @transform_1(%arg0: i32, %arg1: i32) -> (i32, i32) {
    %c0_i32 = arith.constant 0 : i32
    %c0_i32_0 = arith.constant 0 : i32
    return %c0_i32, %arg1 : i32, i32
  }
  func.func @transform_2(%arg0: i32, %arg1: i32) -> (i32, i32) {
    %c0_i32 = arith.constant 0 : i32
    %c0_i32_0 = arith.constant 0 : i32
    return %c0_i32, %arg1 : i32, i32
  }
  func.func @transform_3(%arg0: i32, %arg1: i32) -> (i32, i32) {
    %c0_i32 = arith.constant 0 : i32
    return %arg0, %arg1 : i32, i32
  }
}

module attributes {stable_mosaic.version = 11 : i64} {
  func.func @_combine_pool_kernel(%arg0: i32, %arg1: memref<1x8x32xf32, #tpu.memory_space<vmem>>, %arg2: memref<1x8x32xf32, #tpu.memory_space<vmem>>, %arg3: memref<1x32xf32, #tpu.memory_space<vmem>>, %arg4: memref<1x1x32xf32, #tpu.memory_space<vmem>>) attributes {dimension_semantics = [#tpu.dimension_semantics<parallel>], iteration_bounds = array<i64: 2>, scalar_prefetch = 0 : i64, scratch_operands = 0 : i64, tpu.core_type = #tpu.core_type<tc>, window_params = [{transform_indices = @transform_0, window_bounds = array<i64: 1, 8, 32>}, {transform_indices = @transform_1, window_bounds = array<i64: 1, 8, 32>}, {pipeline_mode = #tpu.pipeline_mode<synchronous>, transform_indices = @transform_2, window_bounds = array<i64: 1, 32>}, {transform_indices = @transform_3, window_bounds = array<i64: 1, 1, 32>}]} {
    %c0 = arith.constant 0 : index
    %c0_0 = arith.constant 0 : index
    %c0_1 = arith.constant 0 : index
    %0 = vector.load %arg1[%c0, %c0_0, %c0_1] : memref<1x8x32xf32, #tpu.memory_space<vmem>>, vector<1x8x32xf32>
    %1 = vector.shape_cast %0 : vector<1x8x32xf32> to vector<8x32xf32>
    %c0_2 = arith.constant 0 : index
    %c0_3 = arith.constant 0 : index
    %c0_4 = arith.constant 0 : index
    %2 = vector.load %arg2[%c0_2, %c0_3, %c0_4] : memref<1x8x32xf32, #tpu.memory_space<vmem>>, vector<1x8x32xf32>
    %3 = vector.shape_cast %2 : vector<1x8x32xf32> to vector<8x32xf32>
    %4 = arith.addf %1, %3 : vector<8x32xf32>
    %cst = arith.constant 5.000000e-01 : f32
    %5 = vector.broadcast %cst : f32 to vector<8x32xf32>
    %6 = arith.mulf %4, %5 : vector<8x32xf32>
    %c0_5 = arith.constant 0 : index
    %c0_6 = arith.constant 0 : index
    %7 = vector.load %arg3[%c0_5, %c0_6] : memref<1x32xf32, #tpu.memory_space<vmem>>, vector<1x32xf32>
    %8 = vector.broadcast %7 : vector<1x32xf32> to vector<8x32xf32>
    %9 = arith.mulf %6, %8 : vector<8x32xf32>
    %cst_7 = arith.constant dense<0.000000e+00> : vector<8xf32>
    %10 = vector.multi_reduction <add>, %9, %cst_7 [1] : vector<8x32xf32> to vector<8xf32>
    %11 = vector.shape_cast %10 : vector<8xf32> to vector<8x1xf32>
    %cst_8 = arith.constant dense<0xFF800000> : vector<1xf32>
    %12 = vector.multi_reduction <maximumf>, %11, %cst_8 [0] : vector<8x1xf32> to vector<1xf32>
    %13 = vector.shape_cast %12 : vector<1xf32> to vector<1x1xf32>
    %14 = vector.broadcast %13 : vector<1x1xf32> to vector<8x1xf32>
    %15 = arith.subf %11, %14 : vector<8x1xf32>
    %16 = math.exp %15 : vector<8x1xf32>
    %cst_9 = arith.constant dense<0.000000e+00> : vector<1xf32>
    %17 = vector.multi_reduction <add>, %16, %cst_9 [0] : vector<8x1xf32> to vector<1xf32>
    %18 = vector.shape_cast %17 : vector<1xf32> to vector<1x1xf32>
    %19 = tpu.reciprocal %18 {approx = true} : vector<1x1xf32> -> vector<1x1xf32>
    %20 = vector.broadcast %19 : vector<1x1xf32> to vector<8x1xf32>
    %21 = arith.mulf %16, %20 : vector<8x1xf32>
    %22 = vector.broadcast %21 : vector<8x1xf32> to vector<8x32xf32>
    %23 = arith.mulf %6, %22 : vector<8x32xf32>
    %cst_10 = arith.constant dense<0.000000e+00> : vector<32xf32>
    %24 = vector.multi_reduction <add>, %23, %cst_10 [0] : vector<8x32xf32> to vector<32xf32>
    %25 = vector.shape_cast %24 : vector<32xf32> to vector<1x32xf32>
    %c0_11 = arith.constant 0 : index
    %c0_12 = arith.constant 0 : index
    %c0_13 = arith.constant 0 : index
    %26 = vector.load %arg4[%c0_11, %c0_12, %c0_13] : memref<1x1x32xf32, #tpu.memory_space<vmem>>, vector<1x1x32xf32>
    %27 = vector.shape_cast %26 : vector<1x1x32xf32> to vector<1x32xf32>
    %28 = vector.shape_cast %25 : vector<1x32xf32> to vector<1x1x32xf32>
    tpu.vector_store %arg4[%c0_11, %c0_12, %c0_13], %28 {strides = array<i32>} : memref<1x1x32xf32, #tpu.memory_space<vmem>>, vector<1x1x32xf32>,
    return
  }
  func.func @transform_0(%arg0: i32) -> (i32, i32, i32) {
    %c0_i32 = arith.constant 0 : i32
    %c0_i32_0 = arith.constant 0 : i32
    %c0_i32_1 = arith.constant 0 : i32
    return %arg0, %c0_i32, %c0_i32_0 : i32, i32, i32
  }
  func.func @transform_1(%arg0: i32) -> (i32, i32, i32) {
    %c0_i32 = arith.constant 0 : i32
    %c0_i32_0 = arith.constant 0 : i32
    %c0_i32_1 = arith.constant 0 : i32
    return %arg0, %c0_i32, %c0_i32_0 : i32, i32, i32
  }
  func.func @transform_2(%arg0: i32) -> (i32, i32) {
    %c0_i32 = arith.constant 0 : i32
    %c0_i32_0 = arith.constant 0 : i32
    %c0_i32_1 = arith.constant 0 : i32
    return %c0_i32, %c0_i32_0 : i32, i32
  }
  func.func @transform_3(%arg0: i32) -> (i32, i32, i32) {
    %c0_i32 = arith.constant 0 : i32
    %c0_i32_0 = arith.constant 0 : i32
    %c0_i32_1 = arith.constant 0 : i32
    return %arg0, %c0_i32, %c0_i32_0 : i32, i32, i32
  }
}

</mosaic_0001>

<llo_original>
// kernel: reverse
$region0: #{reverse}
  %s0 = inlined_call_operand.vmem [shape: f32[2,8], index: 0, kind: input, shape index: {}]
  %s1 = inlined_call_operand.vmem [shape: f32[2,8], index: 1, kind: output, shape index: {}]
  %v2 = vlaneseq
  %v3 = vsub.s32 7, %v2
  %4 = vset.pattern.permute.xlu0 %v3
  $region1: #{reverse} parent=0
    #allocation0 [shape = 'u8[4096]{0}', space=vmem, size = 0x1000, scoped, tag = 'operand span for operand 0']
    #allocation1 [shape = 'u8[1024]{0}', space=vmem, size = 0x400, scoped, tag = 'packed  for operand 0']
    #allocation2 [shape = 'u8[4096]{0}', space=vmem, size = 0x1000, scoped, tag = 'operand span for operand 1']
    #allocation3 [shape = 'u8[1024]{0}', space=vmem, size = 0x400, scoped, tag = 'packed  for operand 1']
    // Predicated region
    $region2: #{reverse} parent=1 // pred_check
      _
    $region3: #{reverse} parent=1 // pred_check_branch
      %6 = sbr.rel (0) target = $region5
    $region4: #{reverse} parent=1 // pred_region
      // Predicated region
      $region6: #{reverse} parent=4 // pred_check
        _
      $region7: #{reverse} parent=4 // pred_check_branch
        %8 = sbr.rel target = $region9
      $region8: #{reverse} parent=4 // pred_region
        // Predicated region
        $region21: #{reverse} parent=8 // pred_check
          _
        $region22: #{reverse} parent=8 // pred_check_branch
          %23 = sbr.rel (0) target = $region24
        $region23: #{reverse} parent=8 // pred_region
          loop: start=0, step=1, limit=1
          $region25: #{reverse} parent=23 // loop_pre_header
            _
          $region26: #{reverse} parent=23 // loop_header
            %s26 = sphi 0, %s30
            %p27 = scmp.ge.s32.totalorder %s26, 1
            %s31 = sphi %s0, %s0
            %s32 = sphi [#allocation1], [#allocation1]
          $region27: #{reverse} parent=23 // loop_header_branch
            %29 = sbr.rel (%p27) target = $region31
          $region28: #{reverse} parent=23 // loop_body
            %v33 = vld [vmem:[%s31] sm:$0x3]
            %34 = vst [vmem:[%s32] sm:$0x3] %v33
          $region29: #{reverse} parent=23 // loop_footer
            %s30 = sadd.s32 1, %s26
          $region30: #{reverse} parent=23 // loop_footer_branch
            %25 = sbr.rel target = $region26
          $region31: #{reverse} parent=23 // loop_exit
            _
        $region24: #{reverse} parent=8 // pred_fallthru
          _
      $region9: #{reverse} parent=4 // pred_fallthru
        _
      // Predicated region
      $region10: #{reverse} parent=4 // pred_check
        _
      $region11: #{reverse} parent=4 // pred_check_branch
        %10 = sbr.rel (0) target = $region13
      $region12: #{reverse} parent=4 // pred_region
        loop: start=0, step=1, limit=1
        $region14: #{reverse} parent=12 // loop_pre_header
          _
        $region15: #{reverse} parent=12 // loop_header
          %s13 = sphi 0, %s17
          %p14 = scmp.ge.s32.totalorder %s13, 1
          %s18 = sphi %s0, %s0
          %s19 = sphi [#allocation1], [#allocation1]
        $region16: #{reverse} parent=12 // loop_header_branch
          %16 = sbr.rel (%p14) target = $region20
        $region17: #{reverse} parent=12 // loop_body
          %v20 = vld [vmem:[%s18] sm:$0x3]
          %21 = vst [vmem:[%s19] sm:$0x3] %v20
        $region18: #{reverse} parent=12 // loop_footer
          %s17 = sadd.s32 1, %s13
        $region19: #{reverse} parent=12 // loop_footer_branch
          %12 = sbr.rel target = $region15
        $region20: #{reverse} parent=12 // loop_exit
          _
      $region13: #{reverse} parent=4 // pred_fallthru
        _
    $region5: #{reverse} parent=1 // pred_fallthru
      _
    %35 = vnop
    %s37 = sshllo.u32 0, 2
    %v38 = vld [vmem:[#allocation1] sm:%s37]
    %39 = vst [vmem:[#allocation0] sm:%s37] %v38
    %v40 = vld [vmem:[#allocation0] sm:$0xff]
    %41 = vperm.xlu0 %4, %v40
    %v42 = vpop.permute.xlu0 %41
    %43 = vst [vmem:[#allocation2] sm:$0xff] %v42
    %s45 = sshllo.u32 0, 2
    %v47 = vld [vmem:[#allocation2] sm:%s45]
    %s48 = sshllo.u32 0, 2
    %49 = vst [vmem:[#allocation3] sm:%s48] %v47
    // Predicated region
    $region32: #{reverse} parent=1 // pred_check
      _
    $region33: #{reverse} parent=1 // pred_check_branch
      %51 = sbr.rel (0) target = $region35
    $region34: #{reverse} parent=1 // pred_region
      // Predicated region
      $region36: #{reverse} parent=34 // pred_check
        _
      $region37: #{reverse} parent=34 // pred_check_branch
        %53 = sbr.rel target = $region39
      $region38: #{reverse} parent=34 // pred_region
        // Predicated region
        $region51: #{reverse} parent=38 // pred_check
          _
        $region52: #{reverse} parent=38 // pred_check_branch
          %68 = sbr.rel (0) target = $region54
        $region53: #{reverse} parent=38 // pred_region
          loop: start=0, step=1, limit=1
          $region55: #{reverse} parent=53 // loop_pre_header
            _
          $region56: #{reverse} parent=53 // loop_header
            %s71 = sphi 0, %s75
            %p72 = scmp.ge.s32.totalorder %s71, 1
            %s76 = sphi [#allocation3], [#allocation3]
            %s77 = sphi %s1, %s1
          $region57: #{reverse} parent=53 // loop_header_branch
            %74 = sbr.rel (%p72) target = $region61
          $region58: #{reverse} parent=53 // loop_body
            %v78 = vld [vmem:[%s76] sm:$0x3]
            %79 = vst [vmem:[%s77] sm:$0x3] %v78
          $region59: #{reverse} parent=53 // loop_footer
            %s75 = sadd.s32 1, %s71
          $region60: #{reverse} parent=53 // loop_footer_branch
            %70 = sbr.rel target = $region56
          $region61: #{reverse} parent=53 // loop_exit
            _
        $region54: #{reverse} parent=38 // pred_fallthru
          _
      $region39: #{reverse} parent=34 // pred_fallthru
        _
      // Predicated region
      $region40: #{reverse} parent=34 // pred_check
        _
      $region41: #{reverse} parent=34 // pred_check_branch
        %55 = sbr.rel (0) target = $region43
      $region42: #{reverse} parent=34 // pred_region
        loop: start=0, step=1, limit=1
        $region44: #{reverse} parent=42 // loop_pre_header
          _
        $region45: #{reverse} parent=42 // loop_header
          %s58 = sphi 0, %s62
          %p59 = scmp.ge.s32.totalorder %s58, 1
          %s63 = sphi [#allocation3], [#allocation3]
          %s64 = sphi %s1, %s1
        $region46: #{reverse} parent=42 // loop_header_branch
          %61 = sbr.rel (%p59) target = $region50
        $region47: #{reverse} parent=42 // loop_body
          %v65 = vld [vmem:[%s63] sm:$0x3]
          %66 = vst [vmem:[%s64] sm:$0x3] %v65
        $region48: #{reverse} parent=42 // loop_footer
          %s62 = sadd.s32 1, %s58
        $region49: #{reverse} parent=42 // loop_footer_branch
          %57 = sbr.rel target = $region45
        $region50: #{reverse} parent=42 // loop_exit
          _
      $region43: #{reverse} parent=34 // pred_fallthru
        _
    $region35: #{reverse} parent=1 // pred_fallthru
      _
    %80 = vnop

// kernel: _lambda_.57
$region0: #{_lambda_.57}
  #allocation0 [shape = 'u32[]', space=smem, size = 0x4, offset = 0x4, fixed_abs, tag = 'smem constant byte address 0x4 - core index']
  #allocation1 [shape = 'u32[144,128]{1,0:T(1,128)}', space=vmem, size = 0x12000, scoped, tag = 'internal scratch']
  %s0 = inlined_call_operand.vmem [shape: f32[16,32], index: 0, kind: input, shape index: {}]
  %s1 = inlined_call_operand.vmem [shape: f32[32,32], index: 1, kind: input, shape index: {}]
  %s2 = inlined_call_operand.vmem [shape: f32[1,32], index: 2, kind: input, shape index: {}]
  %s3 = inlined_call_operand.vmem [shape: f32[16,32], index: 3, kind: input, shape index: {}]
  %s4 = inlined_call_operand.vmem [shape: f32[1,32], index: 4, kind: input, shape index: {}]
  %s5 = inlined_call_operand.vmem [shape: f32[1,32], index: 5, kind: input, shape index: {}]
  %s6 = inlined_call_operand.vmem [shape: f32[16,32], index: 6, kind: output, shape index: {}]
  %s7 = sld [smem:[#allocation0]]
  $region34: #{_lambda_.57} parent=0
    _
  %s9 = ssub.s32 1, %s7
  %s10 = scalar_select 0, %s9, %s7
  // Predicated region
  $region2: #{_lambda_.57} parent=0 // pred_check
    _
  $region3: #{_lambda_.57} parent=0 // pred_check_branch
    %12 = sbr.rel (0) target = $region5
  $region4: #{_lambda_.57} parent=0 // pred_region
    _
  $region5: #{_lambda_.57} parent=0 // pred_fallthru
    _
  // Predicated region
  $region6: #{_lambda_.57} parent=0 // pred_check
    _
  $region7: #{_lambda_.57} parent=0 // pred_check_branch
    %14 = sbr.rel (0) target = $region9
  $region8: #{_lambda_.57} parent=0 // pred_region
    _
  $region9: #{_lambda_.57} parent=0 // pred_fallthru
    _
  // Predicated region
  $region10: #{_lambda_.57} parent=0 // pred_check
    _
  $region11: #{_lambda_.57} parent=0 // pred_check_branch
    %16 = sbr.rel (0) target = $region13
  $region12: #{_lambda_.57} parent=0 // pred_region
    _
  $region13: #{_lambda_.57} parent=0 // pred_fallthru
    _
  // Predicated region
  $region14: #{_lambda_.57} parent=0 // pred_check
    _
  $region15: #{_lambda_.57} parent=0 // pred_check_branch
    %18 = sbr.rel (0) target = $region17
  $region16: #{_lambda_.57} parent=0 // pred_region
    _
  $region17: #{_lambda_.57} parent=0 // pred_fallthru
    _
  // Predicated region
  $region18: #{_lambda_.57} parent=0 // pred_check
    _
  $region19: #{_lambda_.57} parent=0 // pred_check_branch
    %20 = sbr.rel (0) target = $region21
  $region20: #{_lambda_.57} parent=0 // pred_region
    _
  $region21: #{_lambda_.57} parent=0 // pred_fallthru
    _
  // Predicated region
  $region22: #{_lambda_.57} parent=0 // pred_check
    _
  $region23: #{_lambda_.57} parent=0 // pred_check_branch
    %22 = sbr.rel (0) target = $region25
  $region24: #{_lambda_.57} parent=0 // pred_region
    _
  $region25: #{_lambda_.57} parent=0 // pred_fallthru
    _
  %v23 = vld [vmem:[%s0] sm:$0xff]
  %v24 = vld [vmem:[%s0 + $0x8] sm:$0xff]
  %v25 = vld [vmem:[%s1] sm:$0xff]
  %v26 = vld [vmem:[%s1 + $0x8] sm:$0xff]
  %v27 = vld [vmem:[%s1 + $0x10] sm:$0xff]
  %v28 = vld [vmem:[%s1 + $0x18] sm:$0xff]
  %v29 = vld [vmem:[%s2] sm:$0x1]
  %v31 = vlaneseq
  %v32 = vshrl.u32 %v31, 7
  %v33 = vsub.s32 0, %v32
  %v34 = vrot.slane %v29, %v33
  %vm36 = vcmask 261120
  %v38 = vsel %vm36, %v23, 0
  %v41 = vsel %vm36, %v24, 0
  %43 = vmatprep.subr.mxu0 0.0
  %44 = vmatpush1.msra.mxu0 %v25
  %45 = vmatprep.subr.mxu0 0.0
  %46 = vmatpush1.msra.mxu0 %v26
  %47 = vmatprep.subr.mxu0 0.0
  %48 = vmatpush1.msra.mxu0 %v27
  %49 = vmatprep.subr.mxu0 0.0
  %50 = vmatpush1.msra.mxu0 %v28
  %51 = vmatprep.subr.mxu0 0.0
  %52 = vmatpush1.msra.mxu0 0.0
  %53 = vmatprep.subr.mxu0 0.0
  %54 = vmatpush1.msra.mxu0 0.0
  %55 = vmatprep.subr.mxu0 0.0
  %56 = vmatpush1.msra.mxu0 0.0
  %57 = vmatprep.subr.mxu0 0.0
  %58 = vmatpush1.msra.mxu0 0.0
  %59 = vmatprep.subr.mxu0 0.0
  %60 = vmatpush1.msra.mxu0 0.0
  %61 = vmatprep.subr.mxu0 0.0
  %62 = vmatpush1.msra.mxu0 0.0
  %63 = vmatprep.subr.mxu0 0.0
  %64 = vmatpush1.msra.mxu0 0.0
  %65 = vmatprep.subr.mxu0 0.0
  %66 = vmatpush1.msra.mxu0 0.0
  %67 = vmatprep.subr.mxu0 0.0
  %68 = vmatpush1.msra.mxu0 0.0
  %69 = vmatprep.subr.mxu0 0.0
  %70 = vmatpush1.msra.mxu0 0.0
  %71 = vmatprep.subr.mxu0 0.0
  %72 = vmatpush1.msra.mxu0 0.0
  %73 = vmatprep.subr.mxu0 0.0
  %74 = vmatpush1.msra.mxu0 0.0
  %75 = vmatprep.subr.mxu0 0.0
  %76 = vmatpush1.msra.mxu0 0.0
  %77 = vmatprep.subr.mxu0 0.0
  %78 = vmatpush1.msra.mxu0 0.0
  %79 = vmatprep.subr.mxu0 0.0
  %80 = vmatpush1.msra.mxu0 0.0
  %81 = vmatprep.subr.mxu0 0.0
  %82 = vmatpush1.msra.mxu0 0.0
  %83 = vmatprep.subr.mxu0 0.0
  %84 = vmatpush1.msra.mxu0 0.0
  %85 = vmatprep.subr.mxu0 0.0
  %86 = vmatpush1.msra.mxu0 0.0
  %87 = vmatprep.subr.mxu0 0.0
  %88 = vmatpush1.msra.mxu0 0.0
  %89 = vmatprep.subr.mxu0 0.0
  %90 = vmatpush1.msra.mxu0 0.0
  %91 = vmatprep.subr.mxu0 0.0
  %92 = vmatpush1.msra.mxu0 0.0
  %93 = vmatprep.subr.mxu0 0.0
  %94 = vmatpush1.msra.mxu0 0.0
  %95 = vmatprep.subr.mxu0 0.0
  %96 = vmatpush1.msra.mxu0 0.0
  %97 = vmatprep.subr.mxu0 0.0
  %98 = vmatpush1.msra.mxu0 0.0
  %99 = vmatprep.subr.mxu0 0.0
  %100 = vmatpush1.msra.mxu0 0.0
  %101 = vmatprep.subr.mxu0 0.0
  %102 = vmatpush1.msra.mxu0 0.0
  %103 = vmatprep.subr.mxu0 0.0
  %104 = vmatpush1.msra.mxu0 0.0
  %105 = vmatprep.subr.mxu0 0.0
  %106 = vmatpush1.msra.mxu0 0.0
  %107 = vmatprep.mubr.f32.mxu0 0.0
  %108 = vmatmul.mubr.f32.gmra.mrb[0].mxu0 %v38
  %v109 = vpop.f32.mrb[0].mxu0
  %v110 = vadd.f32 %v34, %v109
  %v111 = vpop.f32.mrb[0].mxu0
  %112 = vmatprep.mubr.f32.mxu0 0.0
  %113 = vmatmul.mubr.f32.gmra.mrb[0].mxu0 %v41
  %v114 = vpop.f32.mrb[0].mxu0
  %v115 = vadd.f32 %v34, %v114
  %v116 = vpop.f32.mrb[0].mxu0
  %117 = vdwg.mxu0
  %v118 = vld [vmem:[%s3] sm:$0xff]
  %v119 = vld [vmem:[%s3 + $0x8] sm:$0xff]
  %v120 = vadd.f32 %v110, %v118
  %v121 = vadd.f32 %v115, %v119
  %v122 = vsel %vm36, %v120, 0.0
  %123 = vadd.xlane.f32.xlu0 %v122
  %v124 = vpop.xlane.xlu0 %123
  %v125 = vsel %vm36, %v121, 0.0
  %126 = vadd.xlane.f32.xlu0 %v125
  %v127 = vpop.xlane.xlu0 %126
  %v128 = vrcp.pop 32.0
  %v129 = vmul.f32 %v124, %v128
  %v130 = vmul.f32 %v127, %v128
  %v131 = vsub.f32 %v120, %v129
  %v132 = vsub.f32 %v121, %v130
  %v133 = vmul.f32 %v131, %v131
  %v134 = vmul.f32 %v132, %v132
  %v135 = vsel %vm36, %v133, 0.0
  %136 = vadd.xlane.f32.xlu0 %v135
  %v137 = vpop.xlane.xlu0 %136
  %v138 = vsel %vm36, %v134, 0.0
  %139 = vadd.xlane.f32.xlu0 %v138
  %v140 = vpop.xlane.xlu0 %139
  %v141 = vmul.f32 %v137, %v128
  %v142 = vmul.f32 %v140, %v128
  %v143 = vadd.f32 %v141, 1e-05
  %v144 = vadd.f32 %v142, 1e-05
  %v145 = vrsqrt.pop %v143
  %v146 = vrsqrt.pop %v144
  %v147 = vmul.f32 %v131, %v145
  %v148 = vmul.f32 %v132, %v146
  %v149 = vld [vmem:[%s4] sm:$0x1]
  %v151 = vlaneseq
  %v152 = vshrl.u32 %v151, 7
  %v153 = vsub.s32 0, %v152
  %v154 = vrot.slane %v149, %v153
  %v156 = vmul.f32 %v147, %v154
  %v157 = vmul.f32 %v148, %v154
  %v158 = vld [vmem:[%s5] sm:$0x1]
  %v160 = vlaneseq
  %v161 = vshrl.u32 %v160, 7
  %v162 = vsub.s32 0, %v161
  %v163 = vrot.slane %v158, %v162
  %v165 = vadd.f32 %v156, %v163
  %v166 = vadd.f32 %v157, %v163
  %167 = vst.msk [vmem:[%s6] sm:$0xff] %vm36, %v165
  %168 = vst.msk [vmem:[%s6 + $0x8] sm:$0xff] %vm36, %v166
  // Predicated region
  $region26: #{_lambda_.57} parent=0 // pred_check
    _
  $region27: #{_lambda_.57} parent=0 // pred_check_branch
    %170 = sbr.rel (0) target = $region29
  $region28: #{_lambda_.57} parent=0 // pred_region
    _
  $region29: #{_lambda_.57} parent=0 // pred_fallthru
    _
  // Predicated region
  $region30: #{_lambda_.57} parent=0 // pred_check
    _
  $region31: #{_lambda_.57} parent=0 // pred_check_branch
    %172 = sbr.rel (0) target = $region33
  $region32: #{_lambda_.57} parent=0 // pred_region
    _
  $region33: #{_lambda_.57} parent=0 // pred_fallthru
    _

// kernel: _lambda_.55
$region0: #{_lambda_.55}
  #allocation0 [shape = 'u32[]', space=smem, size = 0x4, offset = 0x4, fixed_abs, tag = 'smem constant byte address 0x4 - core index']
  #allocation1 [shape = 'u32[144,128]{1,0:T(1,128)}', space=vmem, size = 0x12000, scoped, tag = 'internal scratch']
  %s0 = inlined_call_operand.vmem [shape: f32[16,32], index: 0, kind: input, shape index: {}]
  %s1 = inlined_call_operand.vmem [shape: f32[32,96], index: 1, kind: input, shape index: {}]
  %s2 = inlined_call_operand.vmem [shape: f32[1,96], index: 2, kind: input, shape index: {}]
  %s3 = inlined_call_operand.vmem [shape: f32[16,96], index: 3, kind: output, shape index: {}]
  %s4 = sld [smem:[#allocation0]]
  $region22: #{_lambda_.55} parent=0
    _
  %s6 = ssub.s32 1, %s4
  %s7 = scalar_select 0, %s6, %s4
  // Predicated region
  $region2: #{_lambda_.55} parent=0 // pred_check
    _
  $region3: #{_lambda_.55} parent=0 // pred_check_branch
    %9 = sbr.rel (0) target = $region5
  $region4: #{_lambda_.55} parent=0 // pred_region
    _
  $region5: #{_lambda_.55} parent=0 // pred_fallthru
    _
  // Predicated region
  $region6: #{_lambda_.55} parent=0 // pred_check
    _
  $region7: #{_lambda_.55} parent=0 // pred_check_branch
    %11 = sbr.rel (0) target = $region9
  $region8: #{_lambda_.55} parent=0 // pred_region
    _
  $region9: #{_lambda_.55} parent=0 // pred_fallthru
    _
  // Predicated region
  $region10: #{_lambda_.55} parent=0 // pred_check
    _
  $region11: #{_lambda_.55} parent=0 // pred_check_branch
    %13 = sbr.rel (0) target = $region13
  $region12: #{_lambda_.55} parent=0 // pred_region
    _
  $region13: #{_lambda_.55} parent=0 // pred_fallthru
    _
  %v14 = vld [vmem:[%s0] sm:$0xff]
  %v15 = vld [vmem:[%s0 + $0x8] sm:$0xff]
  %v16 = vld [vmem:[%s1] sm:$0xff]
  %v17 = vld [vmem:[%s1 + $0x8] sm:$0xff]
  %v18 = vld [vmem:[%s1 + $0x10] sm:$0xff]
  %v19 = vld [vmem:[%s1 + $0x18] sm:$0xff]
  %v20 = vld [vmem:[%s2] sm:$0x1]
  %v22 = vlaneseq
  %v23 = vshrl.u32 %v22, 7
  %v24 = vsub.s32 0, %v23
  %v25 = vrot.slane %v20, %v24
  %vm27 = vcmask 261120
  %v29 = vsel %vm27, %v14, 0
  %v32 = vsel %vm27, %v15, 0
  %34 = vmatprep.subr.mxu0 0.0
  %35 = vmatpush1.msra.mxu0 %v16
  %36 = vmatprep.subr.mxu0 0.0
  %37 = vmatpush1.msra.mxu0 %v17
  %38 = vmatprep.subr.mxu0 0.0
  %39 = vmatpush1.msra.mxu0 %v18
  %40 = vmatprep.subr.mxu0 0.0
  %41 = vmatpush1.msra.mxu0 %v19
  %42 = vmatprep.subr.mxu0 0.0
  %43 = vmatpush1.msra.mxu0 0.0
  %44 = vmatprep.subr.mxu0 0.0
  %45 = vmatpush1.msra.mxu0 0.0
  %46 = vmatprep.subr.mxu0 0.0
  %47 = vmatpush1.msra.mxu0 0.0
  %48 = vmatprep.subr.mxu0 0.0
  %49 = vmatpush1.msra.mxu0 0.0
  %50 = vmatprep.subr.mxu0 0.0
  %51 = vmatpush1.msra.mxu0 0.0
  %52 = vmatprep.subr.mxu0 0.0
  %53 = vmatpush1.msra.mxu0 0.0
  %54 = vmatprep.subr.mxu0 0.0
  %55 = vmatpush1.msra.mxu0 0.0
  %56 = vmatprep.subr.mxu0 0.0
  %57 = vmatpush1.msra.mxu0 0.0
  %58 = vmatprep.subr.mxu0 0.0
  %59 = vmatpush1.msra.mxu0 0.0
  %60 = vmatprep.subr.mxu0 0.0
  %61 = vmatpush1.msra.mxu0 0.0
  %62 = vmatprep.subr.mxu0 0.0
  %63 = vmatpush1.msra.mxu0 0.0
  %64 = vmatprep.subr.mxu0 0.0
  %65 = vmatpush1.msra.mxu0 0.0
  %66 = vmatprep.subr.mxu0 0.0
  %67 = vmatpush1.msra.mxu0 0.0
  %68 = vmatprep.subr.mxu0 0.0
  %69 = vmatpush1.msra.mxu0 0.0
  %70 = vmatprep.subr.mxu0 0.0
  %71 = vmatpush1.msra.mxu0 0.0
  %72 = vmatprep.subr.mxu0 0.0
  %73 = vmatpush1.msra.mxu0 0.0
  %74 = vmatprep.subr.mxu0 0.0
  %75 = vmatpush1.msra.mxu0 0.0
  %76 = vmatprep.subr.mxu0 0.0
  %77 = vmatpush1.msra.mxu0 0.0
  %78 = vmatprep.subr.mxu0 0.0
  %79 = vmatpush1.msra.mxu0 0.0
  %80 = vmatprep.subr.mxu0 0.0
  %81 = vmatpush1.msra.mxu0 0.0
  %82 = vmatprep.subr.mxu0 0.0
  %83 = vmatpush1.msra.mxu0 0.0
  %84 = vmatprep.subr.mxu0 0.0
  %85 = vmatpush1.msra.mxu0 0.0
  %86 = vmatprep.subr.mxu0 0.0
  %87 = vmatpush1.msra.mxu0 0.0
  %88 = vmatprep.subr.mxu0 0.0
  %89 = vmatpush1.msra.mxu0 0.0
  %90 = vmatprep.subr.mxu0 0.0
  %91 = vmatpush1.msra.mxu0 0.0
  %92 = vmatprep.subr.mxu0 0.0
  %93 = vmatpush1.msra.mxu0 0.0
  %94 = vmatprep.subr.mxu0 0.0
  %95 = vmatpush1.msra.mxu0 0.0
  %96 = vmatprep.subr.mxu0 0.0
  %97 = vmatpush1.msra.mxu0 0.0
  %98 = vmatprep.mubr.f32.mxu0 0.0
  %99 = vmatmul.mubr.f32.gmra.mrb[0].mxu0 %v29
  %v100 = vpop.f32.mrb[0].mxu0
  %v101 = vadd.f32 %v25, %v100
  %v102 = vpop.f32.mrb[0].mxu0
  %103 = vmatprep.mubr.f32.mxu0 0.0
  %104 = vmatmul.mubr.f32.gmra.mrb[0].mxu0 %v32
  %v105 = vpop.f32.mrb[0].mxu0
  %v106 = vadd.f32 %v25, %v105
  %v107 = vpop.f32.mrb[0].mxu0
  %108 = vdwg.mxu0
  %vm109 = vcmask 785408
  %110 = vst.msk [vmem:[%s3] sm:$0xff] %vm109, %v101
  %111 = vst.msk [vmem:[%s3 + $0x8] sm:$0xff] %vm109, %v106
  // Predicated region
  $region14: #{_lambda_.55} parent=0 // pred_check
    _
  $region15: #{_lambda_.55} parent=0 // pred_check_branch
    %113 = sbr.rel (0) target = $region17
  $region16: #{_lambda_.55} parent=0 // pred_region
    _
  $region17: #{_lambda_.55} parent=0 // pred_fallthru
    _
  // Predicated region
  $region18: #{_lambda_.55} parent=0 // pred_check
    _
  $region19: #{_lambda_.55} parent=0 // pred_check_branch
    %115 = sbr.rel (0) target = $region21
  $region20: #{_lambda_.55} parent=0 // pred_region
    _
  $region21: #{_lambda_.55} parent=0 // pred_fallthru
    _

// kernel: _lambda_.56
$region0: #{_lambda_.56}
  #allocation0 [shape = 'u32[]', space=smem, size = 0x4, offset = 0x4, fixed_abs, tag = 'smem constant byte address 0x4 - core index']
  #allocation1 [shape = 'u32[144,128]{1,0:T(1,128)}', space=vmem, size = 0x12000, scoped, tag = 'internal scratch']
  %s0 = inlined_call_operand.vmem [shape: f32[2,8,32], index: 0, kind: input, shape index: {}]
  %s1 = inlined_call_operand.vmem [shape: f32[2,8,32], index: 1, kind: input, shape index: {}]
  %s2 = inlined_call_operand.vmem [shape: f32[2,8,32], index: 2, kind: input, shape index: {}]
  %s3 = inlined_call_operand.vmem [shape: f32[2,1,8], index: 3, kind: input, shape index: {}]
  %s4 = inlined_call_operand.vmem [shape: f32[2,8,32], index: 4, kind: output, shape index: {}]
  %s5 = sld [smem:[#allocation0]]
  $region49: #{_lambda_.56} parent=0
    _
  %s7 = ssub.s32 1, %s5
  %s8 = scalar_select 0, %s7, %s5
  loop: start=0, step=1, limit=4
  $region2: #{_lambda_.56} parent=0 // loop_pre_header
    _
  $region3: #{_lambda_.56} parent=0 // loop_header
    %s10 = sphi 0, %s14
    %p11 = scmp.ge.s32.totalorder %s10, 4
    %s20 = sphi 0, %s22
    %s23 = sphi 0, %s20
    %s24 = sphi 0, %s23
    %s40 = sphi 0, %s24
    %s46 = sphi 0, %s48
    %s49 = sphi 0, %s46
    %s50 = sphi 0, %s49
    %s66 = sphi 0, %s50
    %s72 = sphi 0, %s74
    %s75 = sphi 0, %s72
    %s76 = sphi 0, %s75
    %s92 = sphi 0, %s76
    %s98 = sphi 0, %s100
    %s101 = sphi 0, %s98
    %s102 = sphi 0, %s101
    %s118 = sphi 0, %s102
    %s124 = sphi 0, %s126
    %s127 = sphi 0, %s124
    %s128 = sphi 0, %s127
    %s144 = sphi 0, %s128
  $region4: #{_lambda_.56} parent=0 // loop_header_branch
    %13 = sbr.rel (%p11) target = $region8
  $region5: #{_lambda_.56} parent=0 // loop_body
    %s15 = ssub.s32 %s10, 1
    %s16 = ssub.s32 %s10, 2
    %s17 = sadd.s32 %s10, 1
    %s18 = ssub.s32 %s10, %s17
    %p19 = scmp.eq.s32.totalorder %s18, 0
    %s21 = sadd.s32 %s20, 1
    %s22 = scalar_select %p19, %s20, %s21
    %p25 = pneg %p19
    %p26 = scmp.eq.s32.totalorder %s10, 1
    %p27 = por %p25, %p26
    %p28 = scmp.ne.s32.totalorder %s20, %s23
    %p29 = scmp.eq.s32.totalorder %s10, 0
    %p30 = por %p28, %p29
    %p31 = scmp.ne.s32.totalorder %s20, %s23
    %p32 = scmp.eq.s32.totalorder %s15, 1
    %p33 = por %p31, %p32
    %p34 = scmp.ne.s32.totalorder %s23, %s24
    %p35 = scmp.eq.s32.totalorder %s15, 0
    %p36 = por %p34, %p35
    %p37 = scmp.ne.s32.totalorder %s23, %s24
    %p38 = scmp.eq.s32.totalorder %s16, 1
    %p39 = por %p37, %p38
    %p41 = scmp.ne.s32.totalorder %s24, %s40
    %p42 = scmp.eq.s32.totalorder %s16, 0
    %p43 = por %p41, %p42
    %s44 = ssub.s32 %s10, %s17
    %p45 = scmp.eq.s32.totalorder %s44, 0
    %s47 = sadd.s32 %s46, 1
    %s48 = scalar_select %p45, %s46, %s47
    %p51 = pneg %p45
    %p52 = scmp.eq.s32.totalorder %s10, 1
    %p53 = por %p51, %p52
    %p54 = scmp.ne.s32.totalorder %s46, %s49
    %p55 = scmp.eq.s32.totalorder %s10, 0
    %p56 = por %p54, %p55
    %p57 = scmp.ne.s32.totalorder %s46, %s49
    %p58 = scmp.eq.s32.totalorder %s15, 1
    %p59 = por %p57, %p58
    %p60 = scmp.ne.s32.totalorder %s49, %s50
    %p61 = scmp.eq.s32.totalorder %s15, 0
    %p62 = por %p60, %p61
    %p63 = scmp.ne.s32.totalorder %s49, %s50
    %p64 = scmp.eq.s32.totalorder %s16, 1
    %p65 = por %p63, %p64
    %p67 = scmp.ne.s32.totalorder %s50, %s66
    %p68 = scmp.eq.s32.totalorder %s16, 0
    %p69 = por %p67, %p68
    %s70 = ssub.s32 %s10, %s17
    %p71 = scmp.eq.s32.totalorder %s70, 0
    %s73 = sadd.s32 %s72, 1
    %s74 = scalar_select %p71, %s72, %s73
    %p77 = pneg %p71
    %p78 = scmp.eq.s32.totalorder %s10, 1
    %p79 = por %p77, %p78
    %p80 = scmp.ne.s32.totalorder %s72, %s75
    %p81 = scmp.eq.s32.totalorder %s10, 0
    %p82 = por %p80, %p81
    %p83 = scmp.ne.s32.totalorder %s72, %s75
    %p84 = scmp.eq.s32.totalorder %s15, 1
    %p85 = por %p83, %p84
    %p86 = scmp.ne.s32.totalorder %s75, %s76
    %p87 = scmp.eq.s32.totalorder %s15, 0
    %p88 = por %p86, %p87
    %p89 = scmp.ne.s32.totalorder %s75, %s76
    %p90 = scmp.eq.s32.totalorder %s16, 1
    %p91 = por %p89, %p90
    %p93 = scmp.ne.s32.totalorder %s76, %s92
    %p94 = scmp.eq.s32.totalorder %s16, 0
    %p95 = por %p93, %p94
    %s96 = ssub.s32 %s10, %s17
    %p97 = scmp.eq.s32.totalorder %s96, 0
    %s99 = sadd.s32 %s98, 1
    %s100 = scalar_select %p97, %s98, %s99
    %p103 = pneg %p97
    %p104 = scmp.eq.s32.totalorder %s10, 1
    %p105 = por %p103, %p104
    %p106 = scmp.ne.s32.totalorder %s98, %s101
    %p107 = scmp.eq.s32.totalorder %s10, 0
    %p108 = por %p106, %p107
    %p109 = scmp.ne.s32.totalorder %s98, %s101
    %p110 = scmp.eq.s32.totalorder %s15, 1
    %p111 = por %p109, %p110
    %p112 = scmp.ne.s32.totalorder %s101, %s102
    %p113 = scmp.eq.s32.totalorder %s15, 0
    %p114 = por %p112, %p113
    %p115 = scmp.ne.s32.totalorder %s101, %s102
    %p116 = scmp.eq.s32.totalorder %s16, 1
    %p117 = por %p115, %p116
    %p119 = scmp.ne.s32.totalorder %s102, %s118
    %p120 = scmp.eq.s32.totalorder %s16, 0
    %p121 = por %p119, %p120
    %s122 = ssub.s32 %s10, %s17
    %p123 = scmp.eq.s32.totalorder %s122, 0
    %s125 = sadd.s32 %s124, 1
    %s126 = scalar_select %p123, %s124, %s125
    %p129 = pneg %p123
    %p130 = scmp.eq.s32.totalorder %s10, 1
    %p131 = por %p129, %p130
    %p132 = scmp.ne.s32.totalorder %s124, %s127
    %p133 = scmp.eq.s32.totalorder %s10, 0
    %p134 = por %p132, %p133
    %p135 = scmp.ne.s32.totalorder %s124, %s127
    %p136 = scmp.eq.s32.totalorder %s15, 1
    %p137 = por %p135, %p136
    %p138 = scmp.ne.s32.totalorder %s127, %s128
    %p139 = scmp.eq.s32.totalorder %s15, 0
    %p140 = por %p138, %p139
    %p141 = scmp.ne.s32.totalorder %s127, %s128
    %p142 = scmp.eq.s32.totalorder %s16, 1
    %p143 = por %p141, %p142
    %p145 = scmp.ne.s32.totalorder %s128, %s144
    %p146 = scmp.eq.s32.totalorder %s16, 0
    %p147 = por %p145, %p146
    %p148 = scmp.le.s32.totalorder 1, %s10
    %p149 = scmp.lt.s32.totalorder %s10, 3
    %p150 = pnand %p148, %p149
    %p151 = pneg %p150
    // Predicated region
    $region9: #{_lambda_.56} parent=5 // pred_check
      _
    $region10: #{_lambda_.56} parent=5 // pred_check_branch
      %153 = sbr.rel (%p150) target = $region12
    $region11: #{_lambda_.56} parent=5 // pred_region
      %s154 = ssub.s32 %s10, 1
    $region12: #{_lambda_.56} parent=5 // pred_fallthru
      _
    %p155 = scmp.lt.s32.totalorder %s10, 2
    // Predicated region
    $region13: #{_lambda_.56} parent=5 // pred_check
      %p156 = pneg %p155
    $region14: #{_lambda_.56} parent=5 // pred_check_branch
      %158 = sbr.rel (%p156) target = $region16
    $region15: #{_lambda_.56} parent=5 // pred_region
      // Predicated region
      $region17: #{_lambda_.56} parent=15 // pred_check
        %p159 = pneg %p30
      $region18: #{_lambda_.56} parent=15 // pred_check_branch
        %161 = sbr.rel (%p159) target = $region20
      $region19: #{_lambda_.56} parent=15 // pred_region
        %p162 = scmp.lt.s32.totalorder %s10, 1
        %s163 = scalar_select %p162, %s10, 1
        %s164 = smul.addr %s163, 8
        %s165 = scalar_lea.vmem %s0, %s164
      $region20: #{_lambda_.56} parent=15 // pred_fallthru
        _
      // Predicated region
      $region21: #{_lambda_.56} parent=15 // pred_check
        %p166 = pneg %p56
      $region22: #{_lambda_.56} parent=15 // pred_check_branch
        %168 = sbr.rel (%p166) target = $region24
      $region23: #{_lambda_.56} parent=15 // pred_region
        %p169 = scmp.lt.s32.totalorder %s10, 1
        %s170 = scalar_select %p169, %s10, 1
        %s171 = smul.addr %s170, 8
        %s172 = scalar_lea.vmem %s1, %s171
      $region24: #{_lambda_.56} parent=15 // pred_fallthru
        _
      // Predicated region
      $region25: #{_lambda_.56} parent=15 // pred_check
        %p173 = pneg %p82
      $region26: #{_lambda_.56} parent=15 // pred_check_branch
        %175 = sbr.rel (%p173) target = $region28
      $region27: #{_lambda_.56} parent=15 // pred_region
        %p176 = scmp.lt.s32.totalorder %s10, 1
        %s177 = scalar_select %p176, %s10, 1
        %s178 = smul.addr %s177, 8
        %s179 = scalar_lea.vmem %s2, %s178
      $region28: #{_lambda_.56} parent=15 // pred_fallthru
        _
      // Predicated region
      $region29: #{_lambda_.56} parent=15 // pred_check
        %p180 = pneg %p108
      $region30: #{_lambda_.56} parent=15 // pred_check_branch
        %182 = sbr.rel (%p180) target = $region32
      $region31: #{_lambda_.56} parent=15 // pred_region
        %p183 = scmp.lt.s32.totalorder %s10, 1
        %s184 = scalar_select %p183, %s10, 1
        %s185 = scalar_lea.vmem %s3, %s184
      $region32: #{_lambda_.56} parent=15 // pred_fallthru
        _
    $region16: #{_lambda_.56} parent=5 // pred_fallthru
      _
    %p186 = scmp.le.s32.totalorder 1, %s10
    %p187 = scmp.lt.s32.totalorder %s10, 3
    %p188 = pnand %p186, %p187
    %p189 = pneg %p188
    // Predicated region
    $region33: #{_lambda_.56} parent=5 // pred_check
      _
    $region34: #{_lambda_.56} parent=5 // pred_check_branch
      %191 = sbr.rel (%p188) target = $region36
    $region35: #{_lambda_.56} parent=5 // pred_region
      %s192 = ssub.s32 %s10, 1
      %p193 = scmp.lt.s32.totalorder %s15, 1
      %s194 = scalar_select %p193, %s15, 1
      %s195 = smul.addr %s194, 8
      %s196 = scalar_lea.vmem %s0, %s195
      %p197 = pneg %p36
      %p198 = pneg %p33
      %p199 = scmp.lt.s32.totalorder %s15, 1
      %s200 = scalar_select %p199, %s15, 1
      %s201 = smul.addr %s200, 8
      %s202 = scalar_lea.vmem %s1, %s201
      %p203 = pneg %p62
      %p204 = pneg %p59
      %p205 = scmp.lt.s32.totalorder %s15, 1
      %s206 = scalar_select %p205, %s15, 1
      %s207 = smul.addr %s206, 8
      %s208 = scalar_lea.vmem %s2, %s207
      %p209 = pneg %p88
      %p210 = pneg %p85
      %p211 = scmp.lt.s32.totalorder %s15, 1
      %s212 = scalar_select %p211, %s15, 1
      %s213 = scalar_lea.vmem %s3, %s212
      %p214 = pneg %p114
      %p215 = pneg %p111
      %p216 = pneg %p140
      %p217 = pneg %p137
      %p218 = scmp.lt.s32.totalorder %s15, 1
      %s219 = scalar_select %p218, %s15, 1
      %s220 = smul.addr %s219, 8
      %s221 = scalar_lea.vmem %s4, %s220
      %p222 = scmp.lt.s32.totalorder %s15, 1
      %s223 = scalar_select %p222, %s15, 1
      %s224 = smul.addr %s223, 8
      %s225 = scalar_lea.vmem %s0, %s224
      %p226 = scmp.lt.s32.totalorder %s15, 1
      %s227 = scalar_select %p226, %s15, 1
      %s228 = smul.addr %s227, 8
      %s229 = scalar_lea.vmem %s1, %s228
      %p230 = scmp.lt.s32.totalorder %s15, 1
      %s231 = scalar_select %p230, %s15, 1
      %s232 = smul.addr %s231, 8
      %s233 = scalar_lea.vmem %s2, %s232
      %p234 = scmp.lt.s32.totalorder %s15, 1
      %s235 = scalar_select %p234, %s15, 1
      %s236 = scalar_lea.vmem %s3, %s235
      %p237 = scmp.lt.s32.totalorder %s15, 1
      %s238 = scalar_select %p237, %s15, 1
      %s239 = smul.addr %s238, 8
      %s240 = scalar_lea.vmem %s4, %s239
      %v241 = vld [vmem:[%s225] sm:$0xff]
      %v242 = vld [vmem:[%s229] sm:$0xff]
      %v243 = vld [vmem:[%s233] sm:$0xff]
      %v244 = vld [vmem:[%s236] sm:$0x1]
      %vm245 = vcmask 64512
      %v247 = vsel %vm245, %v241, 0
      %v250 = vsel %vm245, %v242, 0
      %252 = vmatprep.subr.mxu0 0.0
      %253 = vmatpush1.xpose.msra.mxu0 %v250
      %254 = vmatprep.subr.mxu0 0.0
      %255 = vmatpush1.xpose.msra.mxu0 0.0
      %256 = vmatprep.subr.mxu0 0.0
      %257 = vmatpush1.xpose.msra.mxu0 0.0
      %258 = vmatprep.subr.mxu0 0.0
      %259 = vmatpush1.xpose.msra.mxu0 0.0
      %260 = vmatprep.subr.mxu0 0.0
      %261 = vmatpush1.xpose.msra.mxu0 0.0
      %262 = vmatprep.subr.mxu0 0.0
      %263 = vmatpush1.xpose.msra.mxu0 0.0
      %264 = vmatprep.subr.mxu0 0.0
      %265 = vmatpush1.xpose.msra.mxu0 0.0
      %266 = vmatprep.subr.mxu0 0.0
      %267 = vmatpush1.xpose.msra.mxu0 0.0
      %268 = vmatprep.subr.mxu0 0.0
      %269 = vmatpush1.xpose.msra.mxu0 0.0
      %270 = vmatprep.subr.mxu0 0.0
      %271 = vmatpush1.xpose.msra.mxu0 0.0
      %272 = vmatprep.subr.mxu0 0.0
      %273 = vmatpush1.xpose.msra.mxu0 0.0
      %274 = vmatprep.subr.mxu0 0.0
      %275 = vmatpush1.xpose.msra.mxu0 0.0
      %276 = vmatprep.subr.mxu0 0.0
      %277 = vmatpush1.xpose.msra.mxu0 0.0
      %278 = vmatprep.subr.mxu0 0.0
      %279 = vmatpush1.xpose.msra.mxu0 0.0
      %280 = vmatprep.subr.mxu0 0.0
      %281 = vmatpush1.xpose.msra.mxu0 0.0
      %282 = vmatprep.subr.mxu0 0.0
      %283 = vmatpush1.xpose.msra.mxu0 0.0
      %284 = vmatprep.subr.mxu0 0.0
      %285 = vmatpush1.xpose.msra.mxu0 0.0
      %286 = vmatprep.subr.mxu0 0.0
      %287 = vmatpush1.xpose.msra.mxu0 0.0
      %288 = vmatprep.subr.mxu0 0.0
      %289 = vmatpush1.xpose.msra.mxu0 0.0
      %290 = vmatprep.subr.mxu0 0.0
      %291 = vmatpush1.xpose.msra.mxu0 0.0
      %292 = vmatprep.subr.mxu0 0.0
      %293 = vmatpush1.xpose.msra.mxu0 0.0
      %294 = vmatprep.subr.mxu0 0.0
      %295 = vmatpush1.xpose.msra.mxu0 0.0
      %296 = vmatprep.subr.mxu0 0.0
      %297 = vmatpush1.xpose.msra.mxu0 0.0
      %298 = vmatprep.subr.mxu0 0.0
      %299 = vmatpush1.xpose.msra.mxu0 0.0
      %300 = vmatprep.subr.mxu0 0.0
      %301 = vmatpush1.xpose.msra.mxu0 0.0
      %302 = vmatprep.subr.mxu0 0.0
      %303 = vmatpush1.xpose.msra.mxu0 0.0
      %304 = vmatprep.subr.mxu0 0.0
      %305 = vmatpush1.xpose.msra.mxu0 0.0
      %306 = vmatprep.subr.mxu0 0.0
      %307 = vmatpush1.xpose.msra.mxu0 0.0
      %308 = vmatprep.subr.mxu0 0.0
      %309 = vmatpush1.xpose.msra.mxu0 0.0
      %310 = vmatprep.subr.mxu0 0.0
      %311 = vmatpush1.xpose.msra.mxu0 0.0
      %312 = vmatprep.subr.mxu0 0.0
      %313 = vmatpush1.xpose.msra.mxu0 0.0
      %314 = vmatprep.subr.mxu0 0.0
      %315 = vmatpush1.xpose.msra.mxu0 0.0
      %316 = vmatprep.mubr.f32.mxu0 0.0
      %317 = vmatmul.mubr.f32.gmra.mrb[0].mxu0 %v247
      %v318 = vpop.f32.mrb[0].mxu0
      %v319 = vadd.f32 0.0, %v318
      %v320 = vpop.f32.mrb[0].mxu0
      %321 = vdwg.mxu0
      %v322 = vmul.f32 %v319, 0.35355338
      %v324 = vlaneseq
      %v325 = vshrl.u32 %v324, 7
      %v326 = vsub.s32 0, %v325
      %v327 = vrot.slane %v244, %v326
      %v329 = vadd.f32 %v322, %v327
      %v330 = vsel %vm245, %v329, -inf
      %331 = vmax.xlane.f32.xlu0 %v330
      %v332 = vpop.xlane.xlu0 %331
      %v333 = vsub.f32 %v329, %v332
      %v334 = vmul.f32 %v333, 1.442695
      %v335 = vpow.pop %v334
      %v336 = vsel %vm245, %v335, 0.0
      %337 = vadd.xlane.f32.xlu0 %v336
      %v338 = vpop.xlane.xlu0 %337
      %v339 = vrcp.pop %v338
      %v340 = vmul.f32 %v335, %v339
      %v342 = vsel %vm245, %v340, 0
      %344 = vmatprep.subr.mxu0 0.0
      %345 = vmatpush1.msra.mxu0 %v243
      %346 = vmatprep.subr.mxu0 0.0
      %347 = vmatpush1.msra.mxu0 0.0
      %348 = vmatprep.subr.mxu0 0.0
      %349 = vmatpush1.msra.mxu0 0.0
      %350 = vmatprep.subr.mxu0 0.0
      %351 = vmatpush1.msra.mxu0 0.0
      %352 = vmatprep.subr.mxu0 0.0
      %353 = vmatpush1.msra.mxu0 0.0
      %354 = vmatprep.subr.mxu0 0.0
      %355 = vmatpush1.msra.mxu0 0.0
      %356 = vmatprep.subr.mxu0 0.0
      %357 = vmatpush1.msra.mxu0 0.0
      %358 = vmatprep.subr.mxu0 0.0
      %359 = vmatpush1.msra.mxu0 0.0
      %360 = vmatprep.subr.mxu0 0.0
      %361 = vmatpush1.msra.mxu0 0.0
      %362 = vmatprep.subr.mxu0 0.0
      %363 = vmatpush1.msra.mxu0 0.0
      %364 = vmatprep.subr.mxu0 0.0
      %365 = vmatpush1.msra.mxu0 0.0
      %366 = vmatprep.subr.mxu0 0.0
      %367 = vmatpush1.msra.mxu0 0.0
      %368 = vmatprep.subr.mxu0 0.0
      %369 = vmatpush1.msra.mxu0 0.0
      %370 = vmatprep.subr.mxu0 0.0
      %371 = vmatpush1.msra.mxu0 0.0
      %372 = vmatprep.subr.mxu0 0.0
      %373 = vmatpush1.msra.mxu0 0.0
      %374 = vmatprep.subr.mxu0 0.0
      %375 = vmatpush1.msra.mxu0 0.0
      %376 = vmatprep.subr.mxu0 0.0
      %377 = vmatpush1.msra.mxu0 0.0
      %378 = vmatprep.subr.mxu0 0.0
      %379 = vmatpush1.msra.mxu0 0.0
      %380 = vmatprep.subr.mxu0 0.0
      %381 = vmatpush1.msra.mxu0 0.0
      %382 = vmatprep.subr.mxu0 0.0
      %383 = vmatpush1.msra.mxu0 0.0
      %384 = vmatprep.subr.mxu0 0.0
      %385 = vmatpush1.msra.mxu0 0.0
      %386 = vmatprep.subr.mxu0 0.0
      %387 = vmatpush1.msra.mxu0 0.0
      %388 = vmatprep.subr.mxu0 0.0
      %389 = vmatpush1.msra.mxu0 0.0
      %390 = vmatprep.subr.mxu0 0.0
      %391 = vmatpush1.msra.mxu0 0.0
      %392 = vmatprep.subr.mxu0 0.0
      %393 = vmatpush1.msra.mxu0 0.0
      %394 = vmatprep.subr.mxu0 0.0
      %395 = vmatpush1.msra.mxu0 0.0
      %396 = vmatprep.subr.mxu0 0.0
      %397 = vmatpush1.msra.mxu0 0.0
      %398 = vmatprep.subr.mxu0 0.0
      %399 = vmatpush1.msra.mxu0 0.0
      %400 = vmatprep.subr.mxu0 0.0
      %401 = vmatpush1.msra.mxu0 0.0
      %402 = vmatprep.subr.mxu0 0.0
      %403 = vmatpush1.msra.mxu0 0.0
      %404 = vmatprep.subr.mxu0 0.0
      %405 = vmatpush1.msra.mxu0 0.0
      %406 = vmatprep.subr.mxu0 0.0
      %407 = vmatpush1.msra.mxu0 0.0
      %408 = vmatprep.mubr.f32.mxu0 0.0
      %409 = vmatmul.mubr.f32.gmra.mrb[0].mxu0 %v342
      %v410 = vpop.f32.mrb[0].mxu0
      %v411 = vadd.f32 0.0, %v410
      %v412 = vpop.f32.mrb[0].mxu0
      %413 = vdwg.mxu0
      %414 = vrot.lane.b32.xlu0 %v241, 120
      %v415 = vpop.permute.xlu0 %414
      %416 = vrot.lane.b32.xlu0 %v242, 120
      %v417 = vpop.permute.xlu0 %416
      %v418 = vsel %vm245, %v415, 0
      %v420 = vsel %vm245, %v417, 0
      %422 = vmatprep.subr.mxu0 0.0
      %423 = vmatpush1.xpose.msra.mxu0 %v420
      %424 = vmatprep.subr.mxu0 0.0
      %425 = vmatpush1.xpose.msra.mxu0 0.0
      %426 = vmatprep.subr.mxu0 0.0
      %427 = vmatpush1.xpose.msra.mxu0 0.0
      %428 = vmatprep.subr.mxu0 0.0
      %429 = vmatpush1.xpose.msra.mxu0 0.0
      %430 = vmatprep.subr.mxu0 0.0
      %431 = vmatpush1.xpose.msra.mxu0 0.0
      %432 = vmatprep.subr.mxu0 0.0
      %433 = vmatpush1.xpose.msra.mxu0 0.0
      %434 = vmatprep.subr.mxu0 0.0
      %435 = vmatpush1.xpose.msra.mxu0 0.0
      %436 = vmatprep.subr.mxu0 0.0
      %437 = vmatpush1.xpose.msra.mxu0 0.0
      %438 = vmatprep.subr.mxu0 0.0
      %439 = vmatpush1.xpose.msra.mxu0 0.0
      %440 = vmatprep.subr.mxu0 0.0
      %441 = vmatpush1.xpose.msra.mxu0 0.0
      %442 = vmatprep.subr.mxu0 0.0
      %443 = vmatpush1.xpose.msra.mxu0 0.0
      %444 = vmatprep.subr.mxu0 0.0
      %445 = vmatpush1.xpose.msra.mxu0 0.0
      %446 = vmatprep.subr.mxu0 0.0
      %447 = vmatpush1.xpose.msra.mxu0 0.0
      %448 = vmatprep.subr.mxu0 0.0
      %449 = vmatpush1.xpose.msra.mxu0 0.0
      %450 = vmatprep.subr.mxu0 0.0
      %451 = vmatpush1.xpose.msra.mxu0 0.0
      %452 = vmatprep.subr.mxu0 0.0
      %453 = vmatpush1.xpose.msra.mxu0 0.0
      %454 = vmatprep.subr.mxu0 0.0
      %455 = vmatpush1.xpose.msra.mxu0 0.0
      %456 = vmatprep.subr.mxu0 0.0
      %457 = vmatpush1.xpose.msra.mxu0 0.0
      %458 = vmatprep.subr.mxu0 0.0
      %459 = vmatpush1.xpose.msra.mxu0 0.0
      %460 = vmatprep.subr.mxu0 0.0
      %461 = vmatpush1.xpose.msra.mxu0 0.0
      %462 = vmatprep.subr.mxu0 0.0
      %463 = vmatpush1.xpose.msra.mxu0 0.0
      %464 = vmatprep.subr.mxu0 0.0
      %465 = vmatpush1.xpose.msra.mxu0 0.0
      %466 = vmatprep.subr.mxu0 0.0
      %467 = vmatpush1.xpose.msra.mxu0 0.0
      %468 = vmatprep.subr.mxu0 0.0
      %469 = vmatpush1.xpose.msra.mxu0 0.0
      %470 = vmatprep.subr.mxu0 0.0
      %471 = vmatpush1.xpose.msra.mxu0 0.0
      %472 = vmatprep.subr.mxu0 0.0
      %473 = vmatpush1.xpose.msra.mxu0 0.0
      %474 = vmatprep.subr.mxu0 0.0
      %475 = vmatpush1.xpose.msra.mxu0 0.0
      %476 = vmatprep.subr.mxu0 0.0
      %477 = vmatpush1.xpose.msra.mxu0 0.0
      %478 = vmatprep.subr.mxu0 0.0
      %479 = vmatpush1.xpose.msra.mxu0 0.0
      %480 = vmatprep.subr.mxu0 0.0
      %481 = vmatpush1.xpose.msra.mxu0 0.0
      %482 = vmatprep.subr.mxu0 0.0
      %483 = vmatpush1.xpose.msra.mxu0 0.0
      %484 = vmatprep.subr.mxu0 0.0
      %485 = vmatpush1.xpose.msra.mxu0 0.0
      %486 = vmatprep.mubr.f32.mxu0 0.0
      %487 = vmatmul.mubr.f32.gmra.mrb[0].mxu0 %v418
      %v488 = vpop.f32.mrb[0].mxu0
      %v489 = vadd.f32 0.0, %v488
      %v490 = vpop.f32.mrb[0].mxu0
      %491 = vdwg.mxu0
      %v492 = vmul.f32 %v489, 0.35355338
      %v493 = vadd.f32 %v492, %v327
      %v494 = vsel %vm245, %v493, -inf
      %495 = vmax.xlane.f32.xlu0 %v494
      %v496 = vpop.xlane.xlu0 %495
      %v497 = vsub.f32 %v493, %v496
      %v498 = vmul.f32 %v497, 1.442695
      %v499 = vpow.pop %v498
      %v500 = vsel %vm245, %v499, 0.0
      %501 = vadd.xlane.f32.xlu0 %v500
      %v502 = vpop.xlane.xlu0 %501
      %v503 = vrcp.pop %v502
      %v504 = vmul.f32 %v499, %v503
      %506 = vrot.lane.b32.xlu0 %v243, 120
      %v507 = vpop.permute.xlu0 %506
      %v510 = vsel %vm245, %v504, 0
      %512 = vmatprep.subr.mxu0 0.0
      %513 = vmatpush1.msra.mxu0 %v507
      %514 = vmatprep.subr.mxu0 0.0
      %515 = vmatpush1.msra.mxu0 0.0
      %516 = vmatprep.subr.mxu0 0.0
      %517 = vmatpush1.msra.mxu0 0.0
      %518 = vmatprep.subr.mxu0 0.0
      %519 = vmatpush1.msra.mxu0 0.0
      %520 = vmatprep.subr.mxu0 0.0
      %521 = vmatpush1.msra.mxu0 0.0
      %522 = vmatprep.subr.mxu0 0.0
      %523 = vmatpush1.msra.mxu0 0.0
      %524 = vmatprep.subr.mxu0 0.0
      %525 = vmatpush1.msra.mxu0 0.0
      %526 = vmatprep.subr.mxu0 0.0
      %527 = vmatpush1.msra.mxu0 0.0
      %528 = vmatprep.subr.mxu0 0.0
      %529 = vmatpush1.msra.mxu0 0.0
      %530 = vmatprep.subr.mxu0 0.0
      %531 = vmatpush1.msra.mxu0 0.0
      %532 = vmatprep.subr.mxu0 0.0
      %533 = vmatpush1.msra.mxu0 0.0
      %534 = vmatprep.subr.mxu0 0.0
      %535 = vmatpush1.msra.mxu0 0.0
      %536 = vmatprep.subr.mxu0 0.0
      %537 = vmatpush1.msra.mxu0 0.0
      %538 = vmatprep.subr.mxu0 0.0
      %539 = vmatpush1.msra.mxu0 0.0
      %540 = vmatprep.subr.mxu0 0.0
      %541 = vmatpush1.msra.mxu0 0.0
      %542 = vmatprep.subr.mxu0 0.0
      %543 = vmatpush1.msra.mxu0 0.0
      %544 = vmatprep.subr.mxu0 0.0
      %545 = vmatpush1.msra.mxu0 0.0
      %546 = vmatprep.subr.mxu0 0.0
      %547 = vmatpush1.msra.mxu0 0.0
      %548 = vmatprep.subr.mxu0 0.0
      %549 = vmatpush1.msra.mxu0 0.0
      %550 = vmatprep.subr.mxu0 0.0
      %551 = vmatpush1.msra.mxu0 0.0
      %552 = vmatprep.subr.mxu0 0.0
      %553 = vmatpush1.msra.mxu0 0.0
      %554 = vmatprep.subr.mxu0 0.0
      %555 = vmatpush1.msra.mxu0 0.0
      %556 = vmatprep.subr.mxu0 0.0
      %557 = vmatpush1.msra.mxu0 0.0
      %558 = vmatprep.subr.mxu0 0.0
      %559 = vmatpush1.msra.mxu0 0.0
      %560 = vmatprep.subr.mxu0 0.0
      %561 = vmatpush1.msra.mxu0 0.0
      %562 = vmatprep.subr.mxu0 0.0
      %563 = vmatpush1.msra.mxu0 0.0
      %564 = vmatprep.subr.mxu0 0.0
      %565 = vmatpush1.msra.mxu0 0.0
      %566 = vmatprep.subr.mxu0 0.0
      %567 = vmatpush1.msra.mxu0 0.0
      %568 = vmatprep.subr.mxu0 0.0
      %569 = vmatpush1.msra.mxu0 0.0
      %570 = vmatprep.subr.mxu0 0.0
      %571 = vmatpush1.msra.mxu0 0.0
      %572 = vmatprep.subr.mxu0 0.0
      %573 = vmatpush1.msra.mxu0 0.0
      %574 = vmatprep.subr.mxu0 0.0
      %575 = vmatpush1.msra.mxu0 0.0
      %576 = vmatprep.mubr.f32.mxu0 0.0
      %577 = vmatmul.mubr.f32.gmra.mrb[0].mxu0 %v510
      %v578 = vpop.f32.mrb[0].mxu0
      %v579 = vadd.f32 0.0, %v578
      %v580 = vpop.f32.mrb[0].mxu0
      %581 = vdwg.mxu0
      %582 = vrot.lane.b32.xlu0 %v241, 112
      %v583 = vpop.permute.xlu0 %582
      %584 = vrot.lane.b32.xlu0 %v242, 112
      %v585 = vpop.permute.xlu0 %584
      %v586 = vsel %vm245, %v583, 0
      %v588 = vsel %vm245, %v585, 0
      %590 = vmatprep.subr.mxu0 0.0
      %591 = vmatpush1.xpose.msra.mxu0 %v588
      %592 = vmatprep.subr.mxu0 0.0
      %593 = vmatpush1.xpose.msra.mxu0 0.0
      %594 = vmatprep.subr.mxu0 0.0
      %595 = vmatpush1.xpose.msra.mxu0 0.0
      %596 = vmatprep.subr.mxu0 0.0
      %597 = vmatpush1.xpose.msra.mxu0 0.0
      %598 = vmatprep.subr.mxu0 0.0
      %599 = vmatpush1.xpose.msra.mxu0 0.0
      %600 = vmatprep.subr.mxu0 0.0
      %601 = vmatpush1.xpose.msra.mxu0 0.0
      %602 = vmatprep.subr.mxu0 0.0
      %603 = vmatpush1.xpose.msra.mxu0 0.0
      %604 = vmatprep.subr.mxu0 0.0
      %605 = vmatpush1.xpose.msra.mxu0 0.0
      %606 = vmatprep.subr.mxu0 0.0
      %607 = vmatpush1.xpose.msra.mxu0 0.0
      %608 = vmatprep.subr.mxu0 0.0
      %609 = vmatpush1.xpose.msra.mxu0 0.0
      %610 = vmatprep.subr.mxu0 0.0
      %611 = vmatpush1.xpose.msra.mxu0 0.0
      %612 = vmatprep.subr.mxu0 0.0
      %613 = vmatpush1.xpose.msra.mxu0 0.0
      %614 = vmatprep.subr.mxu0 0.0
      %615 = vmatpush1.xpose.msra.mxu0 0.0
      %616 = vmatprep.subr.mxu0 0.0
      %617 = vmatpush1.xpose.msra.mxu0 0.0
      %618 = vmatprep.subr.mxu0 0.0
      %619 = vmatpush1.xpose.msra.mxu0 0.0
      %620 = vmatprep.subr.mxu0 0.0
      %621 = vmatpush1.xpose.msra.mxu0 0.0
      %622 = vmatprep.subr.mxu0 0.0
      %623 = vmatpush1.xpose.msra.mxu0 0.0
      %624 = vmatprep.subr.mxu0 0.0
      %625 = vmatpush1.xpose.msra.mxu0 0.0
      %626 = vmatprep.subr.mxu0 0.0
      %627 = vmatpush1.xpose.msra.mxu0 0.0
      %628 = vmatprep.subr.mxu0 0.0
      %629 = vmatpush1.xpose.msra.mxu0 0.0
      %630 = vmatprep.subr.mxu0 0.0
      %631 = vmatpush1.xpose.msra.mxu0 0.0
      %632 = vmatprep.subr.mxu0 0.0
      %633 = vmatpush1.xpose.msra.mxu0 0.0
      %634 = vmatprep.subr.mxu0 0.0
      %635 = vmatpush1.xpose.msra.mxu0 0.0
      %636 = vmatprep.subr.mxu0 0.0
      %637 = vmatpush1.xpose.msra.mxu0 0.0
      %638 = vmatprep.subr.mxu0 0.0
      %639 = vmatpush1.xpose.msra.mxu0 0.0
      %640 = vmatprep.subr.mxu0 0.0
      %641 = vmatpush1.xpose.msra.mxu0 0.0
      %642 = vmatprep.subr.mxu0 0.0
      %643 = vmatpush1.xpose.msra.mxu0 0.0
      %644 = vmatprep.subr.mxu0 0.0
      %645 = vmatpush1.xpose.msra.mxu0 0.0
      %646 = vmatprep.subr.mxu0 0.0
      %647 = vmatpush1.xpose.msra.mxu0 0.0
      %648 = vmatprep.subr.mxu0 0.0
      %649 = vmatpush1.xpose.msra.mxu0 0.0
      %650 = vmatprep.subr.mxu0 0.0
      %651 = vmatpush1.xpose.msra.mxu0 0.0
      %652 = vmatprep.subr.mxu0 0.0
      %653 = vmatpush1.xpose.msra.mxu0 0.0
      %654 = vmatprep.mubr.f32.mxu0 0.0
      %655 = vmatmul.mubr.f32.gmra.mrb[0].mxu0 %v586
      %v656 = vpop.f32.mrb[0].mxu0
      %v657 = vadd.f32 0.0, %v656
      %v658 = vpop.f32.mrb[0].mxu0
      %659 = vdwg.mxu0
      %v660 = vmul.f32 %v657, 0.35355338
      %v661 = vadd.f32 %v660, %v327
      %v662 = vsel %vm245, %v661, -inf
      %663 = vmax.xlane.f32.xlu0 %v662
      %v664 = vpop.xlane.xlu0 %663
      %v665 = vsub.f32 %v661, %v664
      %v666 = vmul.f32 %v665, 1.442695
      %v667 = vpow.pop %v666
      %v668 = vsel %vm245, %v667, 0.0
      %669 = vadd.xlane.f32.xlu0 %v668
      %v670 = vpop.xlane.xlu0 %669
      %v671 = vrcp.pop %v670
      %v672 = vmul.f32 %v667, %v671
      %673 = vrot.lane.b32.xlu0 %v243, 112
      %v674 = vpop.permute.xlu0 %673
      %v677 = vsel %vm245, %v672, 0
      %679 = vmatprep.subr.mxu0 0.0
      %680 = vmatpush1.msra.mxu0 %v674
      %681 = vmatprep.subr.mxu0 0.0
      %682 = vmatpush1.msra.mxu0 0.0
      %683 = vmatprep.subr.mxu0 0.0
      %684 = vmatpush1.msra.mxu0 0.0
      %685 = vmatprep.subr.mxu0 0.0
      %686 = vmatpush1.msra.mxu0 0.0
      %687 = vmatprep.subr.mxu0 0.0
      %688 = vmatpush1.msra.mxu0 0.0
      %689 = vmatprep.subr.mxu0 0.0
      %690 = vmatpush1.msra.mxu0 0.0
      %691 = vmatprep.subr.mxu0 0.0
      %692 = vmatpush1.msra.mxu0 0.0
      %693 = vmatprep.subr.mxu0 0.0
      %694 = vmatpush1.msra.mxu0 0.0
      %695 = vmatprep.subr.mxu0 0.0
      %696 = vmatpush1.msra.mxu0 0.0
      %697 = vmatprep.subr.mxu0 0.0
      %698 = vmatpush1.msra.mxu0 0.0
      %699 = vmatprep.subr.mxu0 0.0
      %700 = vmatpush1.msra.mxu0 0.0
      %701 = vmatprep.subr.mxu0 0.0
      %702 = vmatpush1.msra.mxu0 0.0
      %703 = vmatprep.subr.mxu0 0.0
      %704 = vmatpush1.msra.mxu0 0.0
      %705 = vmatprep.subr.mxu0 0.0
      %706 = vmatpush1.msra.mxu0 0.0
      %707 = vmatprep.subr.mxu0 0.0
      %708 = vmatpush1.msra.mxu0 0.0
      %709 = vmatprep.subr.mxu0 0.0
      %710 = vmatpush1.msra.mxu0 0.0
      %711 = vmatprep.subr.mxu0 0.0
      %712 = vmatpush1.msra.mxu0 0.0
      %713 = vmatprep.subr.mxu0 0.0
      %714 = vmatpush1.msra.mxu0 0.0
      %715 = vmatprep.subr.mxu0 0.0
      %716 = vmatpush1.msra.mxu0 0.0
      %717 = vmatprep.subr.mxu0 0.0
      %718 = vmatpush1.msra.mxu0 0.0
      %719 = vmatprep.subr.mxu0 0.0
      %720 = vmatpush1.msra.mxu0 0.0
      %721 = vmatprep.subr.mxu0 0.0
      %722 = vmatpush1.msra.mxu0 0.0
      %723 = vmatprep.subr.mxu0 0.0
      %724 = vmatpush1.msra.mxu0 0.0
      %725 = vmatprep.subr.mxu0 0.0
      %726 = vmatpush1.msra.mxu0 0.0
      %727 = vmatprep.subr.mxu0 0.0
      %728 = vmatpush1.msra.mxu0 0.0
      %729 = vmatprep.subr.mxu0 0.0
      %730 = vmatpush1.msra.mxu0 0.0
      %731 = vmatprep.subr.mxu0 0.0
      %732 = vmatpush1.msra.mxu0 0.0
      %733 = vmatprep.subr.mxu0 0.0
      %734 = vmatpush1.msra.mxu0 0.0
      %735 = vmatprep.subr.mxu0 0.0
      %736 = vmatpush1.msra.mxu0 0.0
      %737 = vmatprep.subr.mxu0 0.0
      %738 = vmatpush1.msra.mxu0 0.0
      %739 = vmatprep.subr.mxu0 0.0
      %740 = vmatpush1.msra.mxu0 0.0
      %741 = vmatprep.subr.mxu0 0.0
      %742 = vmatpush1.msra.mxu0 0.0
      %743 = vmatprep.mubr.f32.mxu0 0.0
      %744 = vmatmul.mubr.f32.gmra.mrb[0].mxu0 %v677
      %v745 = vpop.f32.mrb[0].mxu0
      %v746 = vadd.f32 0.0, %v745
      %v747 = vpop.f32.mrb[0].mxu0
      %748 = vdwg.mxu0
      %749 = vrot.lane.b32.xlu0 %v241, 104
      %v750 = vpop.permute.xlu0 %749
      %751 = vrot.lane.b32.xlu0 %v242, 104
      %v752 = vpop.permute.xlu0 %751
      %v753 = vsel %vm245, %v750, 0
      %v755 = vsel %vm245, %v752, 0
      %757 = vmatprep.subr.mxu0 0.0
      %758 = vmatpush1.xpose.msra.mxu0 %v755
      %759 = vmatprep.subr.mxu0 0.0
      %760 = vmatpush1.xpose.msra.mxu0 0.0
      %761 = vmatprep.subr.mxu0 0.0
      %762 = vmatpush1.xpose.msra.mxu0 0.0
      %763 = vmatprep.subr.mxu0 0.0
      %764 = vmatpush1.xpose.msra.mxu0 0.0
      %765 = vmatprep.subr.mxu0 0.0
      %766 = vmatpush1.xpose.msra.mxu0 0.0
      %767 = vmatprep.subr.mxu0 0.0
      %768 = vmatpush1.xpose.msra.mxu0 0.0
      %769 = vmatprep.subr.mxu0 0.0
      %770 = vmatpush1.xpose.msra.mxu0 0.0
      %771 = vmatprep.subr.mxu0 0.0
      %772 = vmatpush1.xpose.msra.mxu0 0.0
      %773 = vmatprep.subr.mxu0 0.0
      %774 = vmatpush1.xpose.msra.mxu0 0.0
      %775 = vmatprep.subr.mxu0 0.0
      %776 = vmatpush1.xpose.msra.mxu0 0.0
      %777 = vmatprep.subr.mxu0 0.0
      %778 = vmatpush1.xpose.msra.mxu0 0.0
      %779 = vmatprep.subr.mxu0 0.0
      %780 = vmatpush1.xpose.msra.mxu0 0.0
      %781 = vmatprep.subr.mxu0 0.0
      %782 = vmatpush1.xpose.msra.mxu0 0.0
      %783 = vmatprep.subr.mxu0 0.0
      %784 = vmatpush1.xpose.msra.mxu0 0.0
      %785 = vmatprep.subr.mxu0 0.0
      %786 = vmatpush1.xpose.msra.mxu0 0.0
      %787 = vmatprep.subr.mxu0 0.0
      %788 = vmatpush1.xpose.msra.mxu0 0.0
      %789 = vmatprep.subr.mxu0 0.0
      %790 = vmatpush1.xpose.msra.mxu0 0.0
      %791 = vmatprep.subr.mxu0 0.0
      %792 = vmatpush1.xpose.msra.mxu0 0.0
      %793 = vmatprep.subr.mxu0 0.0
      %794 = vmatpush1.xpose.msra.mxu0 0.0
      %795 = vmatprep.subr.mxu0 0.0
      %796 = vmatpush1.xpose.msra.mxu0 0.0
      %797 = vmatprep.subr.mxu0 0.0
      %798 = vmatpush1.xpose.msra.mxu0 0.0
      %799 = vmatprep.subr.mxu0 0.0
      %800 = vmatpush1.xpose.msra.mxu0 0.0
      %801 = vmatprep.subr.mxu0 0.0
      %802 = vmatpush1.xpose.msra.mxu0 0.0
      %803 = vmatprep.subr.mxu0 0.0
      %804 = vmatpush1.xpose.msra.mxu0 0.0
      %805 = vmatprep.subr.mxu0 0.0
      %806 = vmatpush1.xpose.msra.mxu0 0.0
      %807 = vmatprep.subr.mxu0 0.0
      %808 = vmatpush1.xpose.msra.mxu0 0.0
      %809 = vmatprep.subr.mxu0 0.0
      %810 = vmatpush1.xpose.msra.mxu0 0.0
      %811 = vmatprep.subr.mxu0 0.0
      %812 = vmatpush1.xpose.msra.mxu0 0.0
      %813 = vmatprep.subr.mxu0 0.0
      %814 = vmatpush1.xpose.msra.mxu0 0.0
      %815 = vmatprep.subr.mxu0 0.0
      %816 = vmatpush1.xpose.msra.mxu0 0.0
      %817 = vmatprep.subr.mxu0 0.0
      %818 = vmatpush1.xpose.msra.mxu0 0.0
      %819 = vmatprep.subr.mxu0 0.0
      %820 = vmatpush1.xpose.msra.mxu0 0.0
      %821 = vmatprep.mubr.f32.mxu0 0.0
      %822 = vmatmul.mubr.f32.gmra.mrb[0].mxu0 %v753
      %v823 = vpop.f32.mrb[0].mxu0
      %v824 = vadd.f32 0.0, %v823
      %v825 = vpop.f32.mrb[0].mxu0
      %826 = vdwg.mxu0
      %v827 = vmul.f32 %v824, 0.35355338
      %v828 = vadd.f32 %v827, %v327
      %v829 = vsel %vm245, %v828, -inf
      %830 = vmax.xlane.f32.xlu0 %v829
      %v831 = vpop.xlane.xlu0 %830
      %v832 = vsub.f32 %v828, %v831
      %v833 = vmul.f32 %v832, 1.442695
      %v834 = vpow.pop %v833
      %v835 = vsel %vm245, %v834, 0.0
      %836 = vadd.xlane.f32.xlu0 %v835
      %v837 = vpop.xlane.xlu0 %836
      %v838 = vrcp.pop %v837
      %v839 = vmul.f32 %v834, %v838
      %840 = vrot.lane.b32.xlu0 %v243, 104
      %v841 = vpop.permute.xlu0 %840
      %v844 = vsel %vm245, %v839, 0
      %846 = vmatprep.subr.mxu0 0.0
      %847 = vmatpush1.msra.mxu0 %v841
      %848 = vmatprep.subr.mxu0 0.0
      %849 = vmatpush1.msra.mxu0 0.0
      %850 = vmatprep.subr.mxu0 0.0
      %851 = vmatpush1.msra.mxu0 0.0
      %852 = vmatprep.subr.mxu0 0.0
      %853 = vmatpush1.msra.mxu0 0.0
      %854 = vmatprep.subr.mxu0 0.0
      %855 = vmatpush1.msra.mxu0 0.0
      %856 = vmatprep.subr.mxu0 0.0
      %857 = vmatpush1.msra.mxu0 0.0
      %858 = vmatprep.subr.mxu0 0.0
      %859 = vmatpush1.msra.mxu0 0.0
      %860 = vmatprep.subr.mxu0 0.0
      %861 = vmatpush1.msra.mxu0 0.0
      %862 = vmatprep.subr.mxu0 0.0
      %863 = vmatpush1.msra.mxu0 0.0
      %864 = vmatprep.subr.mxu0 0.0
      %865 = vmatpush1.msra.mxu0 0.0
      %866 = vmatprep.subr.mxu0 0.0
      %867 = vmatpush1.msra.mxu0 0.0
      %868 = vmatprep.subr.mxu0 0.0
      %869 = vmatpush1.msra.mxu0 0.0
      %870 = vmatprep.subr.mxu0 0.0
      %871 = vmatpush1.msra.mxu0 0.0
      %872 = vmatprep.subr.mxu0 0.0
      %873 = vmatpush1.msra.mxu0 0.0
      %874 = vmatprep.subr.mxu0 0.0
      %875 = vmatpush1.msra.mxu0 0.0
      %876 = vmatprep.subr.mxu0 0.0
      %877 = vmatpush1.msra.mxu0 0.0
      %878 = vmatprep.subr.mxu0 0.0
      %879 = vmatpush1.msra.mxu0 0.0
      %880 = vmatprep.subr.mxu0 0.0
      %881 = vmatpush1.msra.mxu0 0.0
      %882 = vmatprep.subr.mxu0 0.0
      %883 = vmatpush1.msra.mxu0 0.0
      %884 = vmatprep.subr.mxu0 0.0
      %885 = vmatpush1.msra.mxu0 0.0
      %886 = vmatprep.subr.mxu0 0.0
      %887 = vmatpush1.msra.mxu0 0.0
      %888 = vmatprep.subr.mxu0 0.0
      %889 = vmatpush1.msra.mxu0 0.0
      %890 = vmatprep.subr.mxu0 0.0
      %891 = vmatpush1.msra.mxu0 0.0
      %892 = vmatprep.subr.mxu0 0.0
      %893 = vmatpush1.msra.mxu0 0.0
      %894 = vmatprep.subr.mxu0 0.0
      %895 = vmatpush1.msra.mxu0 0.0
      %896 = vmatprep.subr.mxu0 0.0
      %897 = vmatpush1.msra.mxu0 0.0
      %898 = vmatprep.subr.mxu0 0.0
      %899 = vmatpush1.msra.mxu0 0.0
      %900 = vmatprep.subr.mxu0 0.0
      %901 = vmatpush1.msra.mxu0 0.0
      %902 = vmatprep.subr.mxu0 0.0
      %903 = vmatpush1.msra.mxu0 0.0
      %904 = vmatprep.subr.mxu0 0.0
      %905 = vmatpush1.msra.mxu0 0.0
      %906 = vmatprep.subr.mxu0 0.0
      %907 = vmatpush1.msra.mxu0 0.0
      %908 = vmatprep.subr.mxu0 0.0
      %909 = vmatpush1.msra.mxu0 0.0
      %910 = vmatprep.mubr.f32.mxu0 0.0
      %911 = vmatmul.mubr.f32.gmra.mrb[0].mxu0 %v844
      %v912 = vpop.f32.mrb[0].mxu0
      %v913 = vadd.f32 0.0, %v912
      %v914 = vpop.f32.mrb[0].mxu0
      %915 = vdwg.mxu0
      %917 = vrot.lane.b32.xlu0 %v579, 8
      %v918 = vpop.permute.xlu0 %917
      %921 = vrot.lane.b32.xlu0 %v746, 16
      %v922 = vpop.permute.xlu0 %921
      %925 = vrot.lane.b32.xlu0 %v913, 24
      %v926 = vpop.permute.xlu0 %925
      %v928 = vsel %vm245, %v411, %v918
      %vm929 = vcmask 130048
      %v930 = vsel %vm929, %v928, %v922
      %vm931 = vcmask 195584
      %v932 = vsel %vm931, %v930, %v926
      %vm933 = vcmask 261120
      %934 = vst.msk [vmem:[%s240] sm:$0xff] %vm933, %v932
      %p935 = scmp.lt.s32.totalorder %s15, 1
      %s936 = scalar_select %p935, %s15, 1
      %s937 = smul.addr %s936, 8
      %s938 = scalar_lea.vmem %s4, %s937
      // Predicated region
      $region37: #{_lambda_.56} parent=35 // pred_check
        %p939 = pneg %p137
      $region38: #{_lambda_.56} parent=35 // pred_check_branch
        %941 = sbr.rel (%p939) target = $region40
      $region39: #{_lambda_.56} parent=35 // pred_region
        _
      $region40: #{_lambda_.56} parent=35 // pred_fallthru
        _
    $region36: #{_lambda_.56} parent=5 // pred_fallthru
      _
    %p942 = scmp.le.s32.totalorder 2, %s10
    // Predicated region
    $region41: #{_lambda_.56} parent=5 // pred_check
      %p943 = pneg %p942
    $region42: #{_lambda_.56} parent=5 // pred_check_branch
      %945 = sbr.rel (%p943) target = $region44
    $region43: #{_lambda_.56} parent=5 // pred_region
      %s946 = ssub.s32 %s10, 2
      // Predicated region
      $region45: #{_lambda_.56} parent=43 // pred_check
        %p947 = pneg %p143
      $region46: #{_lambda_.56} parent=43 // pred_check_branch
        %949 = sbr.rel (%p947) target = $region48
      $region47: #{_lambda_.56} parent=43 // pred_region
        %p950 = scmp.lt.s32.totalorder %s16, 1
        %s951 = scalar_select %p950, %s16, 1
        %s952 = smul.addr %s951, 8
        %s953 = scalar_lea.vmem %s4, %s952
      $region48: #{_lambda_.56} parent=43 // pred_fallthru
        _
    $region44: #{_lambda_.56} parent=5 // pred_fallthru
      _
  $region6: #{_lambda_.56} parent=0 // loop_footer
    %s14 = sadd.s32 1, %s10
  $region7: #{_lambda_.56} parent=0 // loop_footer_branch
    %9 = sbr.rel target = $region3
  $region8: #{_lambda_.56} parent=0 // loop_exit
    _

// kernel: _lambda_.58
$region0: #{_lambda_.58}
  #allocation0 [shape = 'u32[]', space=smem, size = 0x4, offset = 0x4, fixed_abs, tag = 'smem constant byte address 0x4 - core index']
  #allocation1 [shape = 'u32[144,128]{1,0:T(1,128)}', space=vmem, size = 0x12000, scoped, tag = 'internal scratch']
  %s0 = inlined_call_operand.vmem [shape: f32[16,32], index: 0, kind: input, shape index: {}]
  %s1 = inlined_call_operand.vmem [shape: f32[32,32], index: 1, kind: input, shape index: {}]
  %s2 = inlined_call_operand.vmem [shape: f32[1,32], index: 2, kind: input, shape index: {}]
  %s3 = inlined_call_operand.vmem [shape: f32[16,32], index: 3, kind: output, shape index: {}]
  %s4 = sld [smem:[#allocation0]]
  $region22: #{_lambda_.58} parent=0
    _
  %s6 = ssub.s32 1, %s4
  %s7 = scalar_select 0, %s6, %s4
  // Predicated region
  $region2: #{_lambda_.58} parent=0 // pred_check
    _
  $region3: #{_lambda_.58} parent=0 // pred_check_branch
    %9 = sbr.rel (0) target = $region5
  $region4: #{_lambda_.58} parent=0 // pred_region
    _
  $region5: #{_lambda_.58} parent=0 // pred_fallthru
    _
  // Predicated region
  $region6: #{_lambda_.58} parent=0 // pred_check
    _
  $region7: #{_lambda_.58} parent=0 // pred_check_branch
    %11 = sbr.rel (0) target = $region9
  $region8: #{_lambda_.58} parent=0 // pred_region
    _
  $region9: #{_lambda_.58} parent=0 // pred_fallthru
    _
  // Predicated region
  $region10: #{_lambda_.58} parent=0 // pred_check
    _
  $region11: #{_lambda_.58} parent=0 // pred_check_branch
    %13 = sbr.rel (0) target = $region13
  $region12: #{_lambda_.58} parent=0 // pred_region
    _
  $region13: #{_lambda_.58} parent=0 // pred_fallthru
    _
  %v14 = vld [vmem:[%s0] sm:$0xff]
  %v15 = vld [vmem:[%s0 + $0x8] sm:$0xff]
  %v16 = vld [vmem:[%s1] sm:$0xff]
  %v17 = vld [vmem:[%s1 + $0x8] sm:$0xff]
  %v18 = vld [vmem:[%s1 + $0x10] sm:$0xff]
  %v19 = vld [vmem:[%s1 + $0x18] sm:$0xff]
  %v20 = vld [vmem:[%s2] sm:$0x1]
  %v22 = vlaneseq
  %v23 = vshrl.u32 %v22, 7
  %v24 = vsub.s32 0, %v23
  %v25 = vrot.slane %v20, %v24
  %vm27 = vcmask 261120
  %v29 = vsel %vm27, %v14, 0
  %v32 = vsel %vm27, %v15, 0
  %34 = vmatprep.subr.mxu0 0.0
  %35 = vmatpush1.msra.mxu0 %v16
  %36 = vmatprep.subr.mxu0 0.0
  %37 = vmatpush1.msra.mxu0 %v17
  %38 = vmatprep.subr.mxu0 0.0
  %39 = vmatpush1.msra.mxu0 %v18
  %40 = vmatprep.subr.mxu0 0.0
  %41 = vmatpush1.msra.mxu0 %v19
  %42 = vmatprep.subr.mxu0 0.0
  %43 = vmatpush1.msra.mxu0 0.0
  %44 = vmatprep.subr.mxu0 0.0
  %45 = vmatpush1.msra.mxu0 0.0
  %46 = vmatprep.subr.mxu0 0.0
  %47 = vmatpush1.msra.mxu0 0.0
  %48 = vmatprep.subr.mxu0 0.0
  %49 = vmatpush1.msra.mxu0 0.0
  %50 = vmatprep.subr.mxu0 0.0
  %51 = vmatpush1.msra.mxu0 0.0
  %52 = vmatprep.subr.mxu0 0.0
  %53 = vmatpush1.msra.mxu0 0.0
  %54 = vmatprep.subr.mxu0 0.0
  %55 = vmatpush1.msra.mxu0 0.0
  %56 = vmatprep.subr.mxu0 0.0
  %57 = vmatpush1.msra.mxu0 0.0
  %58 = vmatprep.subr.mxu0 0.0
  %59 = vmatpush1.msra.mxu0 0.0
  %60 = vmatprep.subr.mxu0 0.0
  %61 = vmatpush1.msra.mxu0 0.0
  %62 = vmatprep.subr.mxu0 0.0
  %63 = vmatpush1.msra.mxu0 0.0
  %64 = vmatprep.subr.mxu0 0.0
  %65 = vmatpush1.msra.mxu0 0.0
  %66 = vmatprep.subr.mxu0 0.0
  %67 = vmatpush1.msra.mxu0 0.0
  %68 = vmatprep.subr.mxu0 0.0
  %69 = vmatpush1.msra.mxu0 0.0
  %70 = vmatprep.subr.mxu0 0.0
  %71 = vmatpush1.msra.mxu0 0.0
  %72 = vmatprep.subr.mxu0 0.0
  %73 = vmatpush1.msra.mxu0 0.0
  %74 = vmatprep.subr.mxu0 0.0
  %75 = vmatpush1.msra.mxu0 0.0
  %76 = vmatprep.subr.mxu0 0.0
  %77 = vmatpush1.msra.mxu0 0.0
  %78 = vmatprep.subr.mxu0 0.0
  %79 = vmatpush1.msra.mxu0 0.0
  %80 = vmatprep.subr.mxu0 0.0
  %81 = vmatpush1.msra.mxu0 0.0
  %82 = vmatprep.subr.mxu0 0.0
  %83 = vmatpush1.msra.mxu0 0.0
  %84 = vmatprep.subr.mxu0 0.0
  %85 = vmatpush1.msra.mxu0 0.0
  %86 = vmatprep.subr.mxu0 0.0
  %87 = vmatpush1.msra.mxu0 0.0
  %88 = vmatprep.subr.mxu0 0.0
  %89 = vmatpush1.msra.mxu0 0.0
  %90 = vmatprep.subr.mxu0 0.0
  %91 = vmatpush1.msra.mxu0 0.0
  %92 = vmatprep.subr.mxu0 0.0
  %93 = vmatpush1.msra.mxu0 0.0
  %94 = vmatprep.subr.mxu0 0.0
  %95 = vmatpush1.msra.mxu0 0.0
  %96 = vmatprep.subr.mxu0 0.0
  %97 = vmatpush1.msra.mxu0 0.0
  %98 = vmatprep.mubr.f32.mxu0 0.0
  %99 = vmatmul.mubr.f32.gmra.mrb[0].mxu0 %v29
  %v100 = vpop.f32.mrb[0].mxu0
  %v101 = vadd.f32 %v25, %v100
  %v102 = vpop.f32.mrb[0].mxu0
  %103 = vmatprep.mubr.f32.mxu0 0.0
  %104 = vmatmul.mubr.f32.gmra.mrb[0].mxu0 %v32
  %v105 = vpop.f32.mrb[0].mxu0
  %v106 = vadd.f32 %v25, %v105
  %v107 = vpop.f32.mrb[0].mxu0
  %108 = vdwg.mxu0
  %109 = vst.msk [vmem:[%s3] sm:$0xff] %vm27, %v101
  %110 = vst.msk [vmem:[%s3 + $0x8] sm:$0xff] %vm27, %v106
  // Predicated region
  $region14: #{_lambda_.58} parent=0 // pred_check
    _
  $region15: #{_lambda_.58} parent=0 // pred_check_branch
    %112 = sbr.rel (0) target = $region17
  $region16: #{_lambda_.58} parent=0 // pred_region
    _
  $region17: #{_lambda_.58} parent=0 // pred_fallthru
    _
  // Predicated region
  $region18: #{_lambda_.58} parent=0 // pred_check
    _
  $region19: #{_lambda_.58} parent=0 // pred_check_branch
    %114 = sbr.rel (0) target = $region21
  $region20: #{_lambda_.58} parent=0 // pred_region
    _
  $region21: #{_lambda_.58} parent=0 // pred_fallthru
    _

// kernel: _lambda_.63
$region0: #{_lambda_.63}
  #allocation0 [shape = 'u32[]', space=smem, size = 0x4, offset = 0x4, fixed_abs, tag = 'smem constant byte address 0x4 - core index']
  #allocation1 [shape = 'u32[144,128]{1,0:T(1,128)}', space=vmem, size = 0x12000, scoped, tag = 'internal scratch']
  %s0 = inlined_call_operand.vmem [shape: f32[16,64], index: 0, kind: input, shape index: {}]
  %s1 = inlined_call_operand.vmem [shape: f32[64,32], index: 1, kind: input, shape index: {}]
  %s2 = inlined_call_operand.vmem [shape: f32[1,32], index: 2, kind: input, shape index: {}]
  %s3 = inlined_call_operand.vmem [shape: f32[16,32], index: 3, kind: input, shape index: {}]
  %s4 = inlined_call_operand.vmem [shape: f32[1,32], index: 4, kind: input, shape index: {}]
  %s5 = inlined_call_operand.vmem [shape: f32[1,32], index: 5, kind: input, shape index: {}]
  %s6 = inlined_call_operand.vmem [shape: f32[16,32], index: 6, kind: output, shape index: {}]
  %s7 = sld [smem:[#allocation0]]
  $region34: #{_lambda_.63} parent=0
    _
  %s9 = ssub.s32 1, %s7
  %s10 = scalar_select 0, %s9, %s7
  // Predicated region
  $region2: #{_lambda_.63} parent=0 // pred_check
    _
  $region3: #{_lambda_.63} parent=0 // pred_check_branch
    %12 = sbr.rel (0) target = $region5
  $region4: #{_lambda_.63} parent=0 // pred_region
    _
  $region5: #{_lambda_.63} parent=0 // pred_fallthru
    _
  // Predicated region
  $region6: #{_lambda_.63} parent=0 // pred_check
    _
  $region7: #{_lambda_.63} parent=0 // pred_check_branch
    %14 = sbr.rel (0) target = $region9
  $region8: #{_lambda_.63} parent=0 // pred_region
    _
  $region9: #{_lambda_.63} parent=0 // pred_fallthru
    _
  // Predicated region
  $region10: #{_lambda_.63} parent=0 // pred_check
    _
  $region11: #{_lambda_.63} parent=0 // pred_check_branch
    %16 = sbr.rel (0) target = $region13
  $region12: #{_lambda_.63} parent=0 // pred_region
    _
  $region13: #{_lambda_.63} parent=0 // pred_fallthru
    _
  // Predicated region
  $region14: #{_lambda_.63} parent=0 // pred_check
    _
  $region15: #{_lambda_.63} parent=0 // pred_check_branch
    %18 = sbr.rel (0) target = $region17
  $region16: #{_lambda_.63} parent=0 // pred_region
    _
  $region17: #{_lambda_.63} parent=0 // pred_fallthru
    _
  // Predicated region
  $region18: #{_lambda_.63} parent=0 // pred_check
    _
  $region19: #{_lambda_.63} parent=0 // pred_check_branch
    %20 = sbr.rel (0) target = $region21
  $region20: #{_lambda_.63} parent=0 // pred_region
    _
  $region21: #{_lambda_.63} parent=0 // pred_fallthru
    _
  // Predicated region
  $region22: #{_lambda_.63} parent=0 // pred_check
    _
  $region23: #{_lambda_.63} parent=0 // pred_check_branch
    %22 = sbr.rel (0) target = $region25
  $region24: #{_lambda_.63} parent=0 // pred_region
    _
  $region25: #{_lambda_.63} parent=0 // pred_fallthru
    _
  %v23 = vld [vmem:[%s0] sm:$0xff]
  %v24 = vld [vmem:[%s0 + $0x8] sm:$0xff]
  %v25 = vld [vmem:[%s1] sm:$0xff]
  %v26 = vld [vmem:[%s1 + $0x8] sm:$0xff]
  %v27 = vld [vmem:[%s1 + $0x10] sm:$0xff]
  %v28 = vld [vmem:[%s1 + $0x18] sm:$0xff]
  %v29 = vld [vmem:[%s1 + $0x20] sm:$0xff]
  %v30 = vld [vmem:[%s1 + $0x28] sm:$0xff]
  %v31 = vld [vmem:[%s1 + $0x30] sm:$0xff]
  %v32 = vld [vmem:[%s1 + $0x38] sm:$0xff]
  %v33 = vld [vmem:[%s2] sm:$0x1]
  %v35 = vlaneseq
  %v36 = vshrl.u32 %v35, 7
  %v37 = vsub.s32 0, %v36
  %v38 = vrot.slane %v33, %v37
  %vm40 = vcmask 523264
  %v42 = vsel %vm40, %v23, 0
  %v45 = vsel %vm40, %v24, 0
  %47 = vmatprep.subr.mxu0 0.0
  %48 = vmatpush1.msra.mxu0 %v25
  %49 = vmatprep.subr.mxu0 0.0
  %50 = vmatpush1.msra.mxu0 %v26
  %51 = vmatprep.subr.mxu0 0.0
  %52 = vmatpush1.msra.mxu0 %v27
  %53 = vmatprep.subr.mxu0 0.0
  %54 = vmatpush1.msra.mxu0 %v28
  %55 = vmatprep.subr.mxu0 0.0
  %56 = vmatpush1.msra.mxu0 %v29
  %57 = vmatprep.subr.mxu0 0.0
  %58 = vmatpush1.msra.mxu0 %v30
  %59 = vmatprep.subr.mxu0 0.0
  %60 = vmatpush1.msra.mxu0 %v31
  %61 = vmatprep.subr.mxu0 0.0
  %62 = vmatpush1.msra.mxu0 %v32
  %63 = vmatprep.subr.mxu0 0.0
  %64 = vmatpush1.msra.mxu0 0.0
  %65 = vmatprep.subr.mxu0 0.0
  %66 = vmatpush1.msra.mxu0 0.0
  %67 = vmatprep.subr.mxu0 0.0
  %68 = vmatpush1.msra.mxu0 0.0
  %69 = vmatprep.subr.mxu0 0.0
  %70 = vmatpush1.msra.mxu0 0.0
  %71 = vmatprep.subr.mxu0 0.0
  %72 = vmatpush1.msra.mxu0 0.0
  %73 = vmatprep.subr.mxu0 0.0
  %74 = vmatpush1.msra.mxu0 0.0
  %75 = vmatprep.subr.mxu0 0.0
  %76 = vmatpush1.msra.mxu0 0.0
  %77 = vmatprep.subr.mxu0 0.0
  %78 = vmatpush1.msra.mxu0 0.0
  %79 = vmatprep.subr.mxu0 0.0
  %80 = vmatpush1.msra.mxu0 0.0
  %81 = vmatprep.subr.mxu0 0.0
  %82 = vmatpush1.msra.mxu0 0.0
  %83 = vmatprep.subr.mxu0 0.0
  %84 = vmatpush1.msra.mxu0 0.0
  %85 = vmatprep.subr.mxu0 0.0
  %86 = vmatpush1.msra.mxu0 0.0
  %87 = vmatprep.subr.mxu0 0.0
  %88 = vmatpush1.msra.mxu0 0.0
  %89 = vmatprep.subr.mxu0 0.0
  %90 = vmatpush1.msra.mxu0 0.0
  %91 = vmatprep.subr.mxu0 0.0
  %92 = vmatpush1.msra.mxu0 0.0
  %93 = vmatprep.subr.mxu0 0.0
  %94 = vmatpush1.msra.mxu0 0.0
  %95 = vmatprep.subr.mxu0 0.0
  %96 = vmatpush1.msra.mxu0 0.0
  %97 = vmatprep.subr.mxu0 0.0
  %98 = vmatpush1.msra.mxu0 0.0
  %99 = vmatprep.subr.mxu0 0.0
  %100 = vmatpush1.msra.mxu0 0.0
  %101 = vmatprep.subr.mxu0 0.0
  %102 = vmatpush1.msra.mxu0 0.0
  %103 = vmatprep.subr.mxu0 0.0
  %104 = vmatpush1.msra.mxu0 0.0
  %105 = vmatprep.subr.mxu0 0.0
  %106 = vmatpush1.msra.mxu0 0.0
  %107 = vmatprep.subr.mxu0 0.0
  %108 = vmatpush1.msra.mxu0 0.0
  %109 = vmatprep.subr.mxu0 0.0
  %110 = vmatpush1.msra.mxu0 0.0
  %111 = vmatprep.mubr.f32.mxu0 0.0
  %112 = vmatmul.mubr.f32.gmra.mrb[0].mxu0 %v42
  %v113 = vpop.f32.mrb[0].mxu0
  %v114 = vadd.f32 %v38, %v113
  %v115 = vpop.f32.mrb[0].mxu0
  %116 = vmatprep.mubr.f32.mxu0 0.0
  %117 = vmatmul.mubr.f32.gmra.mrb[0].mxu0 %v45
  %v118 = vpop.f32.mrb[0].mxu0
  %v119 = vadd.f32 %v38, %v118
  %v120 = vpop.f32.mrb[0].mxu0
  %121 = vdwg.mxu0
  %v122 = vld [vmem:[%s3] sm:$0xff]
  %v123 = vld [vmem:[%s3 + $0x8] sm:$0xff]
  %v124 = vadd.f32 %v114, %v122
  %v125 = vadd.f32 %v119, %v123
  %vm126 = vcmask 261120
  %v127 = vsel %vm126, %v124, 0.0
  %128 = vadd.xlane.f32.xlu0 %v127
  %v129 = vpop.xlane.xlu0 %128
  %v130 = vsel %vm126, %v125, 0.0
  %131 = vadd.xlane.f32.xlu0 %v130
  %v132 = vpop.xlane.xlu0 %131
  %v133 = vrcp.pop 32.0
  %v134 = vmul.f32 %v129, %v133
  %v135 = vmul.f32 %v132, %v133
  %v136 = vsub.f32 %v124, %v134
  %v137 = vsub.f32 %v125, %v135
  %v138 = vmul.f32 %v136, %v136
  %v139 = vmul.f32 %v137, %v137
  %v140 = vsel %vm126, %v138, 0.0
  %141 = vadd.xlane.f32.xlu0 %v140
  %v142 = vpop.xlane.xlu0 %141
  %v143 = vsel %vm126, %v139, 0.0
  %144 = vadd.xlane.f32.xlu0 %v143
  %v145 = vpop.xlane.xlu0 %144
  %v146 = vmul.f32 %v142, %v133
  %v147 = vmul.f32 %v145, %v133
  %v148 = vadd.f32 %v146, 1e-05
  %v149 = vadd.f32 %v147, 1e-05
  %v150 = vrsqrt.pop %v148
  %v151 = vrsqrt.pop %v149
  %v152 = vmul.f32 %v136, %v150
  %v153 = vmul.f32 %v137, %v151
  %v154 = vld [vmem:[%s4] sm:$0x1]
  %v156 = vlaneseq
  %v157 = vshrl.u32 %v156, 7
  %v158 = vsub.s32 0, %v157
  %v159 = vrot.slane %v154, %v158
  %v161 = vmul.f32 %v152, %v159
  %v162 = vmul.f32 %v153, %v159
  %v163 = vld [vmem:[%s5] sm:$0x1]
  %v165 = vlaneseq
  %v166 = vshrl.u32 %v165, 7
  %v167 = vsub.s32 0, %v166
  %v168 = vrot.slane %v163, %v167
  %v170 = vadd.f32 %v161, %v168
  %v171 = vadd.f32 %v162, %v168
  %172 = vst.msk [vmem:[%s6] sm:$0xff] %vm126, %v170
  %173 = vst.msk [vmem:[%s6 + $0x8] sm:$0xff] %vm126, %v171
  // Predicated region
  $region26: #{_lambda_.63} parent=0 // pred_check
    _
  $region27: #{_lambda_.63} parent=0 // pred_check_branch
    %175 = sbr.rel (0) target = $region29
  $region28: #{_lambda_.63} parent=0 // pred_region
    _
  $region29: #{_lambda_.63} parent=0 // pred_fallthru
    _
  // Predicated region
  $region30: #{_lambda_.63} parent=0 // pred_check
    _
  $region31: #{_lambda_.63} parent=0 // pred_check_branch
    %177 = sbr.rel (0) target = $region33
  $region32: #{_lambda_.63} parent=0 // pred_region
    _
  $region33: #{_lambda_.63} parent=0 // pred_fallthru
    _

// kernel: _lambda_.59
$region0: #{_lambda_.59}
  #allocation0 [shape = 'u32[]', space=smem, size = 0x4, offset = 0x4, fixed_abs, tag = 'smem constant byte address 0x4 - core index']
  #allocation1 [shape = 'u32[144,128]{1,0:T(1,128)}', space=vmem, size = 0x12000, scoped, tag = 'internal scratch']
  %s0 = inlined_call_operand.vmem [shape: f32[24,32], index: 0, kind: input, shape index: {}]
  %s1 = inlined_call_operand.vmem [shape: f32[32,64], index: 1, kind: input, shape index: {}]
  %s2 = inlined_call_operand.vmem [shape: f32[1,64], index: 2, kind: input, shape index: {}]
  %s3 = inlined_call_operand.vmem [shape: f32[24,64], index: 3, kind: output, shape index: {}]
  %s4 = sld [smem:[#allocation0]]
  $region22: #{_lambda_.59} parent=0
    _
  %s6 = ssub.s32 1, %s4
  %s7 = scalar_select 0, %s6, %s4
  // Predicated region
  $region2: #{_lambda_.59} parent=0 // pred_check
    _
  $region3: #{_lambda_.59} parent=0 // pred_check_branch
    %9 = sbr.rel (0) target = $region5
  $region4: #{_lambda_.59} parent=0 // pred_region
    _
  $region5: #{_lambda_.59} parent=0 // pred_fallthru
    _
  // Predicated region
  $region6: #{_lambda_.59} parent=0 // pred_check
    _
  $region7: #{_lambda_.59} parent=0 // pred_check_branch
    %11 = sbr.rel (0) target = $region9
  $region8: #{_lambda_.59} parent=0 // pred_region
    _
  $region9: #{_lambda_.59} parent=0 // pred_fallthru
    _
  // Predicated region
  $region10: #{_lambda_.59} parent=0 // pred_check
    _
  $region11: #{_lambda_.59} parent=0 // pred_check_branch
    %13 = sbr.rel (0) target = $region13
  $region12: #{_lambda_.59} parent=0 // pred_region
    _
  $region13: #{_lambda_.59} parent=0 // pred_fallthru
    _
  %v14 = vld [vmem:[%s0] sm:$0xff]
  %v15 = vld [vmem:[%s0 + $0x8] sm:$0xff]
  %v16 = vld [vmem:[%s0 + $0x10] sm:$0xff]
  %v17 = vld [vmem:[%s1] sm:$0xff]
  %v18 = vld [vmem:[%s1 + $0x8] sm:$0xff]
  %v19 = vld [vmem:[%s1 + $0x10] sm:$0xff]
  %v20 = vld [vmem:[%s1 + $0x18] sm:$0xff]
  %v21 = vld [vmem:[%s2] sm:$0x1]
  %v23 = vlaneseq
  %v24 = vshrl.u32 %v23, 7
  %v25 = vsub.s32 0, %v24
  %v26 = vrot.slane %v21, %v25
  %vm28 = vcmask 261120
  %v30 = vsel %vm28, %v14, 0
  %v33 = vsel %vm28, %v15, 0
  %v36 = vsel %vm28, %v16, 0
  %38 = vmatprep.subr.mxu0 0.0
  %39 = vmatpush1.msra.mxu0 %v17
  %40 = vmatprep.subr.mxu0 0.0
  %41 = vmatpush1.msra.mxu0 %v18
  %42 = vmatprep.subr.mxu0 0.0
  %43 = vmatpush1.msra.mxu0 %v19
  %44 = vmatprep.subr.mxu0 0.0
  %45 = vmatpush1.msra.mxu0 %v20
  %46 = vmatprep.subr.mxu0 0.0
  %47 = vmatpush1.msra.mxu0 0.0
  %48 = vmatprep.subr.mxu0 0.0
  %49 = vmatpush1.msra.mxu0 0.0
  %50 = vmatprep.subr.mxu0 0.0
  %51 = vmatpush1.msra.mxu0 0.0
  %52 = vmatprep.subr.mxu0 0.0
  %53 = vmatpush1.msra.mxu0 0.0
  %54 = vmatprep.subr.mxu0 0.0
  %55 = vmatpush1.msra.mxu0 0.0
  %56 = vmatprep.subr.mxu0 0.0
  %57 = vmatpush1.msra.mxu0 0.0
  %58 = vmatprep.subr.mxu0 0.0
  %59 = vmatpush1.msra.mxu0 0.0
  %60 = vmatprep.subr.mxu0 0.0
  %61 = vmatpush1.msra.mxu0 0.0
  %62 = vmatprep.subr.mxu0 0.0
  %63 = vmatpush1.msra.mxu0 0.0
  %64 = vmatprep.subr.mxu0 0.0
  %65 = vmatpush1.msra.mxu0 0.0
  %66 = vmatprep.subr.mxu0 0.0
  %67 = vmatpush1.msra.mxu0 0.0
  %68 = vmatprep.subr.mxu0 0.0
  %69 = vmatpush1.msra.mxu0 0.0
  %70 = vmatprep.subr.mxu0 0.0
  %71 = vmatpush1.msra.mxu0 0.0
  %72 = vmatprep.subr.mxu0 0.0
  %73 = vmatpush1.msra.mxu0 0.0
  %74 = vmatprep.subr.mxu0 0.0
  %75 = vmatpush1.msra.mxu0 0.0
  %76 = vmatprep.subr.mxu0 0.0
  %77 = vmatpush1.msra.mxu0 0.0
  %78 = vmatprep.subr.mxu0 0.0
  %79 = vmatpush1.msra.mxu0 0.0
  %80 = vmatprep.subr.mxu0 0.0
  %81 = vmatpush1.msra.mxu0 0.0
  %82 = vmatprep.subr.mxu0 0.0
  %83 = vmatpush1.msra.mxu0 0.0
  %84 = vmatprep.subr.mxu0 0.0
  %85 = vmatpush1.msra.mxu0 0.0
  %86 = vmatprep.subr.mxu0 0.0
  %87 = vmatpush1.msra.mxu0 0.0
  %88 = vmatprep.subr.mxu0 0.0
  %89 = vmatpush1.msra.mxu0 0.0
  %90 = vmatprep.subr.mxu0 0.0
  %91 = vmatpush1.msra.mxu0 0.0
  %92 = vmatprep.subr.mxu0 0.0
  %93 = vmatpush1.msra.mxu0 0.0
  %94 = vmatprep.subr.mxu0 0.0
  %95 = vmatpush1.msra.mxu0 0.0
  %96 = vmatprep.subr.mxu0 0.0
  %97 = vmatpush1.msra.mxu0 0.0
  %98 = vmatprep.subr.mxu0 0.0
  %99 = vmatpush1.msra.mxu0 0.0
  %100 = vmatprep.subr.mxu0 0.0
  %101 = vmatpush1.msra.mxu0 0.0
  %102 = vmatprep.mubr.f32.mxu0 0.0
  %103 = vmatmul.mubr.f32.gmra.mrb[0].mxu0 %v30
  %v104 = vpop.f32.mrb[0].mxu0
  %v105 = vadd.f32 %v26, %v104
  %v106 = vpop.f32.mrb[0].mxu0
  %107 = vmatprep.mubr.f32.mxu0 0.0
  %108 = vmatmul.mubr.f32.gmra.mrb[0].mxu0 %v33
  %v109 = vpop.f32.mrb[0].mxu0
  %v110 = vadd.f32 %v26, %v109
  %v111 = vpop.f32.mrb[0].mxu0
  %112 = vmatprep.mubr.f32.mxu0 0.0
  %113 = vmatmul.mubr.f32.gmra.mrb[0].mxu0 %v36
  %v114 = vpop.f32.mrb[0].mxu0
  %v115 = vadd.f32 %v26, %v114
  %v116 = vpop.f32.mrb[0].mxu0
  %117 = vdwg.mxu0
  %vm118 = vcmask 523264
  %119 = vst.msk [vmem:[%s3] sm:$0xff] %vm118, %v105
  %120 = vst.msk [vmem:[%s3 + $0x8] sm:$0xff] %vm118, %v110
  %121 = vst.msk [vmem:[%s3 + $0x10] sm:$0xff] %vm118, %v115
  // Predicated region
  $region14: #{_lambda_.59} parent=0 // pred_check
    _
  $region15: #{_lambda_.59} parent=0 // pred_check_branch
    %123 = sbr.rel (0) target = $region17
  $region16: #{_lambda_.59} parent=0 // pred_region
    _
  $region17: #{_lambda_.59} parent=0 // pred_fallthru
    _
  // Predicated region
  $region18: #{_lambda_.59} parent=0 // pred_check
    _
  $region19: #{_lambda_.59} parent=0 // pred_check_branch
    %125 = sbr.rel (0) target = $region21
  $region20: #{_lambda_.59} parent=0 // pred_region
    _
  $region21: #{_lambda_.59} parent=0 // pred_fallthru
    _

// kernel: _lambda_.62
$region0: #{_lambda_.62}
  #allocation0 [shape = 'u32[]', space=smem, size = 0x4, offset = 0x4, fixed_abs, tag = 'smem constant byte address 0x4 - core index']
  #allocation1 [shape = 'u32[144,128]{1,0:T(1,128)}', space=vmem, size = 0x12000, scoped, tag = 'internal scratch']
  %s0 = inlined_call_operand.vmem [shape: f32[16,32], index: 0, kind: input, shape index: {}]
  %s1 = inlined_call_operand.vmem [shape: f32[32,64], index: 1, kind: input, shape index: {}]
  %s2 = inlined_call_operand.vmem [shape: f32[1,64], index: 2, kind: input, shape index: {}]
  %s3 = inlined_call_operand.vmem [shape: f32[16,64], index: 3, kind: output, shape index: {}]
  %s4 = sld [smem:[#allocation0]]
  $region22: #{_lambda_.62} parent=0
    _
  %s6 = ssub.s32 1, %s4
  %s7 = scalar_select 0, %s6, %s4
  // Predicated region
  $region2: #{_lambda_.62} parent=0 // pred_check
    _
  $region3: #{_lambda_.62} parent=0 // pred_check_branch
    %9 = sbr.rel (0) target = $region5
  $region4: #{_lambda_.62} parent=0 // pred_region
    _
  $region5: #{_lambda_.62} parent=0 // pred_fallthru
    _
  // Predicated region
  $region6: #{_lambda_.62} parent=0 // pred_check
    _
  $region7: #{_lambda_.62} parent=0 // pred_check_branch
    %11 = sbr.rel (0) target = $region9
  $region8: #{_lambda_.62} parent=0 // pred_region
    _
  $region9: #{_lambda_.62} parent=0 // pred_fallthru
    _
  // Predicated region
  $region10: #{_lambda_.62} parent=0 // pred_check
    _
  $region11: #{_lambda_.62} parent=0 // pred_check_branch
    %13 = sbr.rel (0) target = $region13
  $region12: #{_lambda_.62} parent=0 // pred_region
    _
  $region13: #{_lambda_.62} parent=0 // pred_fallthru
    _
  %v14 = vld [vmem:[%s0] sm:$0xff]
  %v15 = vld [vmem:[%s0 + $0x8] sm:$0xff]
  %v16 = vld [vmem:[%s1] sm:$0xff]
  %v17 = vld [vmem:[%s1 + $0x8] sm:$0xff]
  %v18 = vld [vmem:[%s1 + $0x10] sm:$0xff]
  %v19 = vld [vmem:[%s1 + $0x18] sm:$0xff]
  %v20 = vld [vmem:[%s2] sm:$0x1]
  %v22 = vlaneseq
  %v23 = vshrl.u32 %v22, 7
  %v24 = vsub.s32 0, %v23
  %v25 = vrot.slane %v20, %v24
  %vm27 = vcmask 261120
  %v29 = vsel %vm27, %v14, 0
  %v32 = vsel %vm27, %v15, 0
  %34 = vmatprep.subr.mxu0 0.0
  %35 = vmatpush1.msra.mxu0 %v16
  %36 = vmatprep.subr.mxu0 0.0
  %37 = vmatpush1.msra.mxu0 %v17
  %38 = vmatprep.subr.mxu0 0.0
  %39 = vmatpush1.msra.mxu0 %v18
  %40 = vmatprep.subr.mxu0 0.0
  %41 = vmatpush1.msra.mxu0 %v19
  %42 = vmatprep.subr.mxu0 0.0
  %43 = vmatpush1.msra.mxu0 0.0
  %44 = vmatprep.subr.mxu0 0.0
  %45 = vmatpush1.msra.mxu0 0.0
  %46 = vmatprep.subr.mxu0 0.0
  %47 = vmatpush1.msra.mxu0 0.0
  %48 = vmatprep.subr.mxu0 0.0
  %49 = vmatpush1.msra.mxu0 0.0
  %50 = vmatprep.subr.mxu0 0.0
  %51 = vmatpush1.msra.mxu0 0.0
  %52 = vmatprep.subr.mxu0 0.0
  %53 = vmatpush1.msra.mxu0 0.0
  %54 = vmatprep.subr.mxu0 0.0
  %55 = vmatpush1.msra.mxu0 0.0
  %56 = vmatprep.subr.mxu0 0.0
  %57 = vmatpush1.msra.mxu0 0.0
  %58 = vmatprep.subr.mxu0 0.0
  %59 = vmatpush1.msra.mxu0 0.0
  %60 = vmatprep.subr.mxu0 0.0
  %61 = vmatpush1.msra.mxu0 0.0
  %62 = vmatprep.subr.mxu0 0.0
  %63 = vmatpush1.msra.mxu0 0.0
  %64 = vmatprep.subr.mxu0 0.0
  %65 = vmatpush1.msra.mxu0 0.0
  %66 = vmatprep.subr.mxu0 0.0
  %67 = vmatpush1.msra.mxu0 0.0
  %68 = vmatprep.subr.mxu0 0.0
  %69 = vmatpush1.msra.mxu0 0.0
  %70 = vmatprep.subr.mxu0 0.0
  %71 = vmatpush1.msra.mxu0 0.0
  %72 = vmatprep.subr.mxu0 0.0
  %73 = vmatpush1.msra.mxu0 0.0
  %74 = vmatprep.subr.mxu0 0.0
  %75 = vmatpush1.msra.mxu0 0.0
  %76 = vmatprep.subr.mxu0 0.0
  %77 = vmatpush1.msra.mxu0 0.0
  %78 = vmatprep.subr.mxu0 0.0
  %79 = vmatpush1.msra.mxu0 0.0
  %80 = vmatprep.subr.mxu0 0.0
  %81 = vmatpush1.msra.mxu0 0.0
  %82 = vmatprep.subr.mxu0 0.0
  %83 = vmatpush1.msra.mxu0 0.0
  %84 = vmatprep.subr.mxu0 0.0
  %85 = vmatpush1.msra.mxu0 0.0
  %86 = vmatprep.subr.mxu0 0.0
  %87 = vmatpush1.msra.mxu0 0.0
  %88 = vmatprep.subr.mxu0 0.0
  %89 = vmatpush1.msra.mxu0 0.0
  %90 = vmatprep.subr.mxu0 0.0
  %91 = vmatpush1.msra.mxu0 0.0
  %92 = vmatprep.subr.mxu0 0.0
  %93 = vmatpush1.msra.mxu0 0.0
  %94 = vmatprep.subr.mxu0 0.0
  %95 = vmatpush1.msra.mxu0 0.0
  %96 = vmatprep.subr.mxu0 0.0
  %97 = vmatpush1.msra.mxu0 0.0
  %98 = vmatprep.mubr.f32.mxu0 0.0
  %99 = vmatmul.mubr.f32.gmra.mrb[0].mxu0 %v29
  %v100 = vpop.f32.mrb[0].mxu0
  %v101 = vadd.f32 %v25, %v100
  %v102 = vpop.f32.mrb[0].mxu0
  %103 = vmatprep.mubr.f32.mxu0 0.0
  %104 = vmatmul.mubr.f32.gmra.mrb[0].mxu0 %v32
  %v105 = vpop.f32.mrb[0].mxu0
  %v106 = vadd.f32 %v25, %v105
  %v107 = vpop.f32.mrb[0].mxu0
  %108 = vdwg.mxu0
  %v109 = vmax.f32 %v101, 0.0
  %v110 = vmax.f32 %v106, 0.0
  %vm111 = vcmask 523264
  %112 = vst.msk [vmem:[%s3] sm:$0xff] %vm111, %v109
  %113 = vst.msk [vmem:[%s3 + $0x8] sm:$0xff] %vm111, %v110
  // Predicated region
  $region14: #{_lambda_.62} parent=0 // pred_check
    _
  $region15: #{_lambda_.62} parent=0 // pred_check_branch
    %115 = sbr.rel (0) target = $region17
  $region16: #{_lambda_.62} parent=0 // pred_region
    _
  $region17: #{_lambda_.62} parent=0 // pred_fallthru
    _
  // Predicated region
  $region18: #{_lambda_.62} parent=0 // pred_check
    _
  $region19: #{_lambda_.62} parent=0 // pred_check_branch
    %117 = sbr.rel (0) target = $region21
  $region20: #{_lambda_.62} parent=0 // pred_region
    _
  $region21: #{_lambda_.62} parent=0 // pred_fallthru
    _

// kernel: _lambda_.60
$region0: #{_lambda_.60}
  #allocation0 [shape = 'u32[]', space=smem, size = 0x4, offset = 0x4, fixed_abs, tag = 'smem constant byte address 0x4 - core index']
  #allocation1 [shape = 'u32[144,128]{1,0:T(1,128)}', space=vmem, size = 0x12000, scoped, tag = 'internal scratch']
  %s0 = inlined_call_operand.vmem [shape: f32[2,8,32], index: 0, kind: input, shape index: {}]
  %s1 = inlined_call_operand.vmem [shape: f32[2,10,32], index: 1, kind: input, shape index: {}]
  %s2 = inlined_call_operand.vmem [shape: f32[2,10,32], index: 2, kind: input, shape index: {}]
  %s3 = inlined_call_operand.vmem [shape: f32[2,1,10], index: 3, kind: input, shape index: {}]
  %s4 = inlined_call_operand.vmem [shape: f32[2,8,32], index: 4, kind: output, shape index: {}]
  %s5 = sld [smem:[#allocation0]]
  $region49: #{_lambda_.60} parent=0
    _
  %s7 = ssub.s32 1, %s5
  %s8 = scalar_select 0, %s7, %s5
  loop: start=0, step=1, limit=4
  $region2: #{_lambda_.60} parent=0 // loop_pre_header
    _
  $region3: #{_lambda_.60} parent=0 // loop_header
    %s10 = sphi 0, %s14
    %p11 = scmp.ge.s32.totalorder %s10, 4
    %s20 = sphi 0, %s22
    %s23 = sphi 0, %s20
    %s24 = sphi 0, %s23
    %s40 = sphi 0, %s24
    %s46 = sphi 0, %s48
    %s49 = sphi 0, %s46
    %s50 = sphi 0, %s49
    %s66 = sphi 0, %s50
    %s72 = sphi 0, %s74
    %s75 = sphi 0, %s72
    %s76 = sphi 0, %s75
    %s92 = sphi 0, %s76
    %s98 = sphi 0, %s100
    %s101 = sphi 0, %s98
    %s102 = sphi 0, %s101
    %s118 = sphi 0, %s102
    %s124 = sphi 0, %s126
    %s127 = sphi 0, %s124
    %s128 = sphi 0, %s127
    %s144 = sphi 0, %s128
  $region4: #{_lambda_.60} parent=0 // loop_header_branch
    %13 = sbr.rel (%p11) target = $region8
  $region5: #{_lambda_.60} parent=0 // loop_body
    %s15 = ssub.s32 %s10, 1
    %s16 = ssub.s32 %s10, 2
    %s17 = sadd.s32 %s10, 1
    %s18 = ssub.s32 %s10, %s17
    %p19 = scmp.eq.s32.totalorder %s18, 0
    %s21 = sadd.s32 %s20, 1
    %s22 = scalar_select %p19, %s20, %s21
    %p25 = pneg %p19
    %p26 = scmp.eq.s32.totalorder %s10, 1
    %p27 = por %p25, %p26
    %p28 = scmp.ne.s32.totalorder %s20, %s23
    %p29 = scmp.eq.s32.totalorder %s10, 0
    %p30 = por %p28, %p29
    %p31 = scmp.ne.s32.totalorder %s20, %s23
    %p32 = scmp.eq.s32.totalorder %s15, 1
    %p33 = por %p31, %p32
    %p34 = scmp.ne.s32.totalorder %s23, %s24
    %p35 = scmp.eq.s32.totalorder %s15, 0
    %p36 = por %p34, %p35
    %p37 = scmp.ne.s32.totalorder %s23, %s24
    %p38 = scmp.eq.s32.totalorder %s16, 1
    %p39 = por %p37, %p38
    %p41 = scmp.ne.s32.totalorder %s24, %s40
    %p42 = scmp.eq.s32.totalorder %s16, 0
    %p43 = por %p41, %p42
    %s44 = ssub.s32 %s10, %s17
    %p45 = scmp.eq.s32.totalorder %s44, 0
    %s47 = sadd.s32 %s46, 1
    %s48 = scalar_select %p45, %s46, %s47
    %p51 = pneg %p45
    %p52 = scmp.eq.s32.totalorder %s10, 1
    %p53 = por %p51, %p52
    %p54 = scmp.ne.s32.totalorder %s46, %s49
    %p55 = scmp.eq.s32.totalorder %s10, 0
    %p56 = por %p54, %p55
    %p57 = scmp.ne.s32.totalorder %s46, %s49
    %p58 = scmp.eq.s32.totalorder %s15, 1
    %p59 = por %p57, %p58
    %p60 = scmp.ne.s32.totalorder %s49, %s50
    %p61 = scmp.eq.s32.totalorder %s15, 0
    %p62 = por %p60, %p61
    %p63 = scmp.ne.s32.totalorder %s49, %s50
    %p64 = scmp.eq.s32.totalorder %s16, 1
    %p65 = por %p63, %p64
    %p67 = scmp.ne.s32.totalorder %s50, %s66
    %p68 = scmp.eq.s32.totalorder %s16, 0
    %p69 = por %p67, %p68
    %s70 = ssub.s32 %s10, %s17
    %p71 = scmp.eq.s32.totalorder %s70, 0
    %s73 = sadd.s32 %s72, 1
    %s74 = scalar_select %p71, %s72, %s73
    %p77 = pneg %p71
    %p78 = scmp.eq.s32.totalorder %s10, 1
    %p79 = por %p77, %p78
    %p80 = scmp.ne.s32.totalorder %s72, %s75
    %p81 = scmp.eq.s32.totalorder %s10, 0
    %p82 = por %p80, %p81
    %p83 = scmp.ne.s32.totalorder %s72, %s75
    %p84 = scmp.eq.s32.totalorder %s15, 1
    %p85 = por %p83, %p84
    %p86 = scmp.ne.s32.totalorder %s75, %s76
    %p87 = scmp.eq.s32.totalorder %s15, 0
    %p88 = por %p86, %p87
    %p89 = scmp.ne.s32.totalorder %s75, %s76
    %p90 = scmp.eq.s32.totalorder %s16, 1
    %p91 = por %p89, %p90
    %p93 = scmp.ne.s32.totalorder %s76, %s92
    %p94 = scmp.eq.s32.totalorder %s16, 0
    %p95 = por %p93, %p94
    %s96 = ssub.s32 %s10, %s17
    %p97 = scmp.eq.s32.totalorder %s96, 0
    %s99 = sadd.s32 %s98, 1
    %s100 = scalar_select %p97, %s98, %s99
    %p103 = pneg %p97
    %p104 = scmp.eq.s32.totalorder %s10, 1
    %p105 = por %p103, %p104
    %p106 = scmp.ne.s32.totalorder %s98, %s101
    %p107 = scmp.eq.s32.totalorder %s10, 0
    %p108 = por %p106, %p107
    %p109 = scmp.ne.s32.totalorder %s98, %s101
    %p110 = scmp.eq.s32.totalorder %s15, 1
    %p111 = por %p109, %p110
    %p112 = scmp.ne.s32.totalorder %s101, %s102
    %p113 = scmp.eq.s32.totalorder %s15, 0
    %p114 = por %p112, %p113
    %p115 = scmp.ne.s32.totalorder %s101, %s102
    %p116 = scmp.eq.s32.totalorder %s16, 1
    %p117 = por %p115, %p116
    %p119 = scmp.ne.s32.totalorder %s102, %s118
    %p120 = scmp.eq.s32.totalorder %s16, 0
    %p121 = por %p119, %p120
    %s122 = ssub.s32 %s10, %s17
    %p123 = scmp.eq.s32.totalorder %s122, 0
    %s125 = sadd.s32 %s124, 1
    %s126 = scalar_select %p123, %s124, %s125
    %p129 = pneg %p123
    %p130 = scmp.eq.s32.totalorder %s10, 1
    %p131 = por %p129, %p130
    %p132 = scmp.ne.s32.totalorder %s124, %s127
    %p133 = scmp.eq.s32.totalorder %s10, 0
    %p134 = por %p132, %p133
    %p135 = scmp.ne.s32.totalorder %s124, %s127
    %p136 = scmp.eq.s32.totalorder %s15, 1
    %p137 = por %p135, %p136
    %p138 = scmp.ne.s32.totalorder %s127, %s128
    %p139 = scmp.eq.s32.totalorder %s15, 0
    %p140 = por %p138, %p139
    %p141 = scmp.ne.s32.totalorder %s127, %s128
    %p142 = scmp.eq.s32.totalorder %s16, 1
    %p143 = por %p141, %p142
    %p145 = scmp.ne.s32.totalorder %s128, %s144
    %p146 = scmp.eq.s32.totalorder %s16, 0
    %p147 = por %p145, %p146
    %p148 = scmp.le.s32.totalorder 1, %s10
    %p149 = scmp.lt.s32.totalorder %s10, 3
    %p150 = pnand %p148, %p149
    %p151 = pneg %p150
    // Predicated region
    $region9: #{_lambda_.60} parent=5 // pred_check
      _
    $region10: #{_lambda_.60} parent=5 // pred_check_branch
      %153 = sbr.rel (%p150) target = $region12
    $region11: #{_lambda_.60} parent=5 // pred_region
      %s154 = ssub.s32 %s10, 1
    $region12: #{_lambda_.60} parent=5 // pred_fallthru
      _
    %p155 = scmp.lt.s32.totalorder %s10, 2
    // Predicated region
    $region13: #{_lambda_.60} parent=5 // pred_check
      %p156 = pneg %p155
    $region14: #{_lambda_.60} parent=5 // pred_check_branch
      %158 = sbr.rel (%p156) target = $region16
    $region15: #{_lambda_.60} parent=5 // pred_region
      // Predicated region
      $region17: #{_lambda_.60} parent=15 // pred_check
        %p159 = pneg %p30
      $region18: #{_lambda_.60} parent=15 // pred_check_branch
        %161 = sbr.rel (%p159) target = $region20
      $region19: #{_lambda_.60} parent=15 // pred_region
        %p162 = scmp.lt.s32.totalorder %s10, 1
        %s163 = scalar_select %p162, %s10, 1
        %s164 = smul.addr %s163, 8
        %s165 = scalar_lea.vmem %s0, %s164
      $region20: #{_lambda_.60} parent=15 // pred_fallthru
        _
      // Predicated region
      $region21: #{_lambda_.60} parent=15 // pred_check
        %p166 = pneg %p56
      $region22: #{_lambda_.60} parent=15 // pred_check_branch
        %168 = sbr.rel (%p166) target = $region24
      $region23: #{_lambda_.60} parent=15 // pred_region
        %p169 = scmp.lt.s32.totalorder %s10, 1
        %s170 = scalar_select %p169, %s10, 1
        %s171 = smul.addr %s170, 2
        %s172 = smul.addr %s171, 8
        %s173 = scalar_lea.vmem %s1, %s172
      $region24: #{_lambda_.60} parent=15 // pred_fallthru
        _
      // Predicated region
      $region25: #{_lambda_.60} parent=15 // pred_check
        %p174 = pneg %p82
      $region26: #{_lambda_.60} parent=15 // pred_check_branch
        %176 = sbr.rel (%p174) target = $region28
      $region27: #{_lambda_.60} parent=15 // pred_region
        %p177 = scmp.lt.s32.totalorder %s10, 1
        %s178 = scalar_select %p177, %s10, 1
        %s179 = smul.addr %s178, 2
        %s180 = smul.addr %s179, 8
        %s181 = scalar_lea.vmem %s2, %s180
      $region28: #{_lambda_.60} parent=15 // pred_fallthru
        _
      // Predicated region
      $region29: #{_lambda_.60} parent=15 // pred_check
        %p182 = pneg %p108
      $region30: #{_lambda_.60} parent=15 // pred_check_branch
        %184 = sbr.rel (%p182) target = $region32
      $region31: #{_lambda_.60} parent=15 // pred_region
        %p185 = scmp.lt.s32.totalorder %s10, 1
        %s186 = scalar_select %p185, %s10, 1
        %s187 = scalar_lea.vmem %s3, %s186
      $region32: #{_lambda_.60} parent=15 // pred_fallthru
        _
    $region16: #{_lambda_.60} parent=5 // pred_fallthru
      _
    %p188 = scmp.le.s32.totalorder 1, %s10
    %p189 = scmp.lt.s32.totalorder %s10, 3
    %p190 = pnand %p188, %p189
    %p191 = pneg %p190
    // Predicated region
    $region33: #{_lambda_.60} parent=5 // pred_check
      _
    $region34: #{_lambda_.60} parent=5 // pred_check_branch
      %193 = sbr.rel (%p190) target = $region36
    $region35: #{_lambda_.60} parent=5 // pred_region
      %s194 = ssub.s32 %s10, 1
      %p195 = scmp.lt.s32.totalorder %s15, 1
      %s196 = scalar_select %p195, %s15, 1
      %s197 = smul.addr %s196, 8
      %s198 = scalar_lea.vmem %s0, %s197
      %p199 = pneg %p36
      %p200 = pneg %p33
      %p201 = scmp.lt.s32.totalorder %s15, 1
      %s202 = scalar_select %p201, %s15, 1
      %s203 = smul.addr %s202, 2
      %s204 = smul.addr %s203, 8
      %s205 = scalar_lea.vmem %s1, %s204
      %p206 = pneg %p62
      %p207 = pneg %p59
      %p208 = scmp.lt.s32.totalorder %s15, 1
      %s209 = scalar_select %p208, %s15, 1
      %s210 = smul.addr %s209, 2
      %s211 = smul.addr %s210, 8
      %s212 = scalar_lea.vmem %s2, %s211
      %p213 = pneg %p88
      %p214 = pneg %p85
      %p215 = scmp.lt.s32.totalorder %s15, 1
      %s216 = scalar_select %p215, %s15, 1
      %s217 = scalar_lea.vmem %s3, %s216
      %p218 = pneg %p114
      %p219 = pneg %p111
      %p220 = pneg %p140
      %p221 = pneg %p137
      %p222 = scmp.lt.s32.totalorder %s15, 1
      %s223 = scalar_select %p222, %s15, 1
      %s224 = smul.addr %s223, 8
      %s225 = scalar_lea.vmem %s4, %s224
      %p226 = scmp.lt.s32.totalorder %s15, 1
      %s227 = scalar_select %p226, %s15, 1
      %s228 = smul.addr %s227, 8
      %s229 = scalar_lea.vmem %s0, %s228
      %p230 = scmp.lt.s32.totalorder %s15, 1
      %s231 = scalar_select %p230, %s15, 1
      %s232 = smul.addr %s231, 2
      %s233 = smul.addr %s232, 8
      %s234 = scalar_lea.vmem %s1, %s233
      %p235 = scmp.lt.s32.totalorder %s15, 1
      %s236 = scalar_select %p235, %s15, 1
      %s237 = smul.addr %s236, 2
      %s238 = smul.addr %s237, 8
      %s239 = scalar_lea.vmem %s2, %s238
      %p240 = scmp.lt.s32.totalorder %s15, 1
      %s241 = scalar_select %p240, %s15, 1
      %s242 = scalar_lea.vmem %s3, %s241
      %p243 = scmp.lt.s32.totalorder %s15, 1
      %s244 = scalar_select %p243, %s15, 1
      %s245 = smul.addr %s244, 8
      %s246 = scalar_lea.vmem %s4, %s245
      %v247 = vld [vmem:[%s229] sm:$0xff]
      %v248 = vld [vmem:[%s234] sm:$0xff]
      %v249 = vld [vmem:[%s234 + $0x8] sm:$0x3]
      %v250 = vld [vmem:[%s239] sm:$0xff]
      %v251 = vld [vmem:[%s239 + $0x8] sm:$0x3]
      %v252 = vld [vmem:[%s242] sm:$0x1]
      %vm253 = vcmask 64512
      %v255 = vsel %vm253, %v247, 0
      %v258 = vsel %vm253, %v248, 0
      %v261 = vsel %vm253, %v249, 0
      %263 = vmatprep.subr.mxu0 0.0
      %264 = vmatpush1.xpose.msra.mxu0 %v258
      %265 = vmatprep.subr.mxu0 0.0
      %266 = vmatpush1.xpose.msra.mxu0 %v261
      %267 = vmatprep.subr.mxu0 0.0
      %268 = vmatpush1.xpose.msra.mxu0 0.0
      %269 = vmatprep.subr.mxu0 0.0
      %270 = vmatpush1.xpose.msra.mxu0 0.0
      %271 = vmatprep.subr.mxu0 0.0
      %272 = vmatpush1.xpose.msra.mxu0 0.0
      %273 = vmatprep.subr.mxu0 0.0
      %274 = vmatpush1.xpose.msra.mxu0 0.0
      %275 = vmatprep.subr.mxu0 0.0
      %276 = vmatpush1.xpose.msra.mxu0 0.0
      %277 = vmatprep.subr.mxu0 0.0
      %278 = vmatpush1.xpose.msra.mxu0 0.0
      %279 = vmatprep.subr.mxu0 0.0
      %280 = vmatpush1.xpose.msra.mxu0 0.0
      %281 = vmatprep.subr.mxu0 0.0
      %282 = vmatpush1.xpose.msra.mxu0 0.0
      %283 = vmatprep.subr.mxu0 0.0
      %284 = vmatpush1.xpose.msra.mxu0 0.0
      %285 = vmatprep.subr.mxu0 0.0
      %286 = vmatpush1.xpose.msra.mxu0 0.0
      %287 = vmatprep.subr.mxu0 0.0
      %288 = vmatpush1.xpose.msra.mxu0 0.0
      %289 = vmatprep.subr.mxu0 0.0
      %290 = vmatpush1.xpose.msra.mxu0 0.0
      %291 = vmatprep.subr.mxu0 0.0
      %292 = vmatpush1.xpose.msra.mxu0 0.0
      %293 = vmatprep.subr.mxu0 0.0
      %294 = vmatpush1.xpose.msra.mxu0 0.0
      %295 = vmatprep.subr.mxu0 0.0
      %296 = vmatpush1.xpose.msra.mxu0 0.0
      %297 = vmatprep.subr.mxu0 0.0
      %298 = vmatpush1.xpose.msra.mxu0 0.0
      %299 = vmatprep.subr.mxu0 0.0
      %300 = vmatpush1.xpose.msra.mxu0 0.0
      %301 = vmatprep.subr.mxu0 0.0
      %302 = vmatpush1.xpose.msra.mxu0 0.0
      %303 = vmatprep.subr.mxu0 0.0
      %304 = vmatpush1.xpose.msra.mxu0 0.0
      %305 = vmatprep.subr.mxu0 0.0
      %306 = vmatpush1.xpose.msra.mxu0 0.0
      %307 = vmatprep.subr.mxu0 0.0
      %308 = vmatpush1.xpose.msra.mxu0 0.0
      %309 = vmatprep.subr.mxu0 0.0
      %310 = vmatpush1.xpose.msra.mxu0 0.0
      %311 = vmatprep.subr.mxu0 0.0
      %312 = vmatpush1.xpose.msra.mxu0 0.0
      %313 = vmatprep.subr.mxu0 0.0
      %314 = vmatpush1.xpose.msra.mxu0 0.0
      %315 = vmatprep.subr.mxu0 0.0
      %316 = vmatpush1.xpose.msra.mxu0 0.0
      %317 = vmatprep.subr.mxu0 0.0
      %318 = vmatpush1.xpose.msra.mxu0 0.0
      %319 = vmatprep.subr.mxu0 0.0
      %320 = vmatpush1.xpose.msra.mxu0 0.0
      %321 = vmatprep.subr.mxu0 0.0
      %322 = vmatpush1.xpose.msra.mxu0 0.0
      %323 = vmatprep.subr.mxu0 0.0
      %324 = vmatpush1.xpose.msra.mxu0 0.0
      %325 = vmatprep.subr.mxu0 0.0
      %326 = vmatpush1.xpose.msra.mxu0 0.0
      %327 = vmatprep.mubr.f32.mxu0 0.0
      %328 = vmatmul.mubr.f32.gmra.mrb[0].mxu0 %v255
      %v329 = vpop.f32.mrb[0].mxu0
      %v330 = vadd.f32 0.0, %v329
      %v331 = vpop.f32.mrb[0].mxu0
      %332 = vdwg.mxu0
      %v333 = vmul.f32 %v330, 0.35355338
      %v335 = vlaneseq
      %v336 = vshrl.u32 %v335, 7
      %v337 = vsub.s32 0, %v336
      %v338 = vrot.slane %v252, %v337
      %v340 = vadd.f32 %v333, %v338
      %vm341 = vcmask 80896
      %v342 = vsel %vm341, %v340, -inf
      %343 = vmax.xlane.f32.xlu0 %v342
      %v344 = vpop.xlane.xlu0 %343
      %v345 = vsub.f32 %v340, %v344
      %v346 = vmul.f32 %v345, 1.442695
      %v347 = vpow.pop %v346
      %v348 = vsel %vm341, %v347, 0.0
      %349 = vadd.xlane.f32.xlu0 %v348
      %v350 = vpop.xlane.xlu0 %349
      %v351 = vrcp.pop %v350
      %v352 = vmul.f32 %v347, %v351
      %v354 = vsel %vm341, %v352, 0
      %vm356 = vcmask 1041408
      %v358 = vsel %vm356, %v251, 0
      %360 = vmatprep.subr.mxu0 0.0
      %361 = vmatpush1.msra.mxu0 %v250
      %362 = vmatprep.subr.mxu0 0.0
      %363 = vmatpush1.msra.mxu0 %v358
      %364 = vmatprep.subr.mxu0 0.0
      %365 = vmatpush1.msra.mxu0 0.0
      %366 = vmatprep.subr.mxu0 0.0
      %367 = vmatpush1.msra.mxu0 0.0
      %368 = vmatprep.subr.mxu0 0.0
      %369 = vmatpush1.msra.mxu0 0.0
      %370 = vmatprep.subr.mxu0 0.0
      %371 = vmatpush1.msra.mxu0 0.0
      %372 = vmatprep.subr.mxu0 0.0
      %373 = vmatpush1.msra.mxu0 0.0
      %374 = vmatprep.subr.mxu0 0.0
      %375 = vmatpush1.msra.mxu0 0.0
      %376 = vmatprep.subr.mxu0 0.0
      %377 = vmatpush1.msra.mxu0 0.0
      %378 = vmatprep.subr.mxu0 0.0
      %379 = vmatpush1.msra.mxu0 0.0
      %380 = vmatprep.subr.mxu0 0.0
      %381 = vmatpush1.msra.mxu0 0.0
      %382 = vmatprep.subr.mxu0 0.0
      %383 = vmatpush1.msra.mxu0 0.0
      %384 = vmatprep.subr.mxu0 0.0
      %385 = vmatpush1.msra.mxu0 0.0
      %386 = vmatprep.subr.mxu0 0.0
      %387 = vmatpush1.msra.mxu0 0.0
      %388 = vmatprep.subr.mxu0 0.0
      %389 = vmatpush1.msra.mxu0 0.0
      %390 = vmatprep.subr.mxu0 0.0
      %391 = vmatpush1.msra.mxu0 0.0
      %392 = vmatprep.subr.mxu0 0.0
      %393 = vmatpush1.msra.mxu0 0.0
      %394 = vmatprep.subr.mxu0 0.0
      %395 = vmatpush1.msra.mxu0 0.0
      %396 = vmatprep.subr.mxu0 0.0
      %397 = vmatpush1.msra.mxu0 0.0
      %398 = vmatprep.subr.mxu0 0.0
      %399 = vmatpush1.msra.mxu0 0.0
      %400 = vmatprep.subr.mxu0 0.0
      %401 = vmatpush1.msra.mxu0 0.0
      %402 = vmatprep.subr.mxu0 0.0
      %403 = vmatpush1.msra.mxu0 0.0
      %404 = vmatprep.subr.mxu0 0.0
      %405 = vmatpush1.msra.mxu0 0.0
      %406 = vmatprep.subr.mxu0 0.0
      %407 = vmatpush1.msra.mxu0 0.0
      %408 = vmatprep.subr.mxu0 0.0
      %409 = vmatpush1.msra.mxu0 0.0
      %410 = vmatprep.subr.mxu0 0.0
      %411 = vmatpush1.msra.mxu0 0.0
      %412 = vmatprep.subr.mxu0 0.0
      %413 = vmatpush1.msra.mxu0 0.0
      %414 = vmatprep.subr.mxu0 0.0
      %415 = vmatpush1.msra.mxu0 0.0
      %416 = vmatprep.subr.mxu0 0.0
      %417 = vmatpush1.msra.mxu0 0.0
      %418 = vmatprep.subr.mxu0 0.0
      %419 = vmatpush1.msra.mxu0 0.0
      %420 = vmatprep.subr.mxu0 0.0
      %421 = vmatpush1.msra.mxu0 0.0
      %422 = vmatprep.subr.mxu0 0.0
      %423 = vmatpush1.msra.mxu0 0.0
      %424 = vmatprep.mubr.f32.mxu0 0.0
      %425 = vmatmul.mubr.f32.gmra.mrb[0].mxu0 %v354
      %v426 = vpop.f32.mrb[0].mxu0
      %v427 = vadd.f32 0.0, %v426
      %v428 = vpop.f32.mrb[0].mxu0
      %429 = vdwg.mxu0
      %430 = vrot.lane.b32.xlu0 %v247, 120
      %v431 = vpop.permute.xlu0 %430
      %432 = vrot.lane.b32.xlu0 %v248, 120
      %v433 = vpop.permute.xlu0 %432
      %434 = vrot.lane.b32.xlu0 %v249, 120
      %v435 = vpop.permute.xlu0 %434
      %v436 = vsel %vm253, %v431, 0
      %v438 = vsel %vm253, %v433, 0
      %v440 = vsel %vm253, %v435, 0
      %442 = vmatprep.subr.mxu0 0.0
      %443 = vmatpush1.xpose.msra.mxu0 %v438
      %444 = vmatprep.subr.mxu0 0.0
      %445 = vmatpush1.xpose.msra.mxu0 %v440
      %446 = vmatprep.subr.mxu0 0.0
      %447 = vmatpush1.xpose.msra.mxu0 0.0
      %448 = vmatprep.subr.mxu0 0.0
      %449 = vmatpush1.xpose.msra.mxu0 0.0
      %450 = vmatprep.subr.mxu0 0.0
      %451 = vmatpush1.xpose.msra.mxu0 0.0
      %452 = vmatprep.subr.mxu0 0.0
      %453 = vmatpush1.xpose.msra.mxu0 0.0
      %454 = vmatprep.subr.mxu0 0.0
      %455 = vmatpush1.xpose.msra.mxu0 0.0
      %456 = vmatprep.subr.mxu0 0.0
      %457 = vmatpush1.xpose.msra.mxu0 0.0
      %458 = vmatprep.subr.mxu0 0.0
      %459 = vmatpush1.xpose.msra.mxu0 0.0
      %460 = vmatprep.subr.mxu0 0.0
      %461 = vmatpush1.xpose.msra.mxu0 0.0
      %462 = vmatprep.subr.mxu0 0.0
      %463 = vmatpush1.xpose.msra.mxu0 0.0
      %464 = vmatprep.subr.mxu0 0.0
      %465 = vmatpush1.xpose.msra.mxu0 0.0
      %466 = vmatprep.subr.mxu0 0.0
      %467 = vmatpush1.xpose.msra.mxu0 0.0
      %468 = vmatprep.subr.mxu0 0.0
      %469 = vmatpush1.xpose.msra.mxu0 0.0
      %470 = vmatprep.subr.mxu0 0.0
      %471 = vmatpush1.xpose.msra.mxu0 0.0
      %472 = vmatprep.subr.mxu0 0.0
      %473 = vmatpush1.xpose.msra.mxu0 0.0
      %474 = vmatprep.subr.mxu0 0.0
      %475 = vmatpush1.xpose.msra.mxu0 0.0
      %476 = vmatprep.subr.mxu0 0.0
      %477 = vmatpush1.xpose.msra.mxu0 0.0
      %478 = vmatprep.subr.mxu0 0.0
      %479 = vmatpush1.xpose.msra.mxu0 0.0
      %480 = vmatprep.subr.mxu0 0.0
      %481 = vmatpush1.xpose.msra.mxu0 0.0
      %482 = vmatprep.subr.mxu0 0.0
      %483 = vmatpush1.xpose.msra.mxu0 0.0
      %484 = vmatprep.subr.mxu0 0.0
      %485 = vmatpush1.xpose.msra.mxu0 0.0
      %486 = vmatprep.subr.mxu0 0.0
      %487 = vmatpush1.xpose.msra.mxu0 0.0
      %488 = vmatprep.subr.mxu0 0.0
      %489 = vmatpush1.xpose.msra.mxu0 0.0
      %490 = vmatprep.subr.mxu0 0.0
      %491 = vmatpush1.xpose.msra.mxu0 0.0
      %492 = vmatprep.subr.mxu0 0.0
      %493 = vmatpush1.xpose.msra.mxu0 0.0
      %494 = vmatprep.subr.mxu0 0.0
      %495 = vmatpush1.xpose.msra.mxu0 0.0
      %496 = vmatprep.subr.mxu0 0.0
      %497 = vmatpush1.xpose.msra.mxu0 0.0
      %498 = vmatprep.subr.mxu0 0.0
      %499 = vmatpush1.xpose.msra.mxu0 0.0
      %500 = vmatprep.subr.mxu0 0.0
      %501 = vmatpush1.xpose.msra.mxu0 0.0
      %502 = vmatprep.subr.mxu0 0.0
      %503 = vmatpush1.xpose.msra.mxu0 0.0
      %504 = vmatprep.subr.mxu0 0.0
      %505 = vmatpush1.xpose.msra.mxu0 0.0
      %506 = vmatprep.mubr.f32.mxu0 0.0
      %507 = vmatmul.mubr.f32.gmra.mrb[0].mxu0 %v436
      %v508 = vpop.f32.mrb[0].mxu0
      %v509 = vadd.f32 0.0, %v508
      %v510 = vpop.f32.mrb[0].mxu0
      %511 = vdwg.mxu0
      %v512 = vmul.f32 %v509, 0.35355338
      %v513 = vadd.f32 %v512, %v338
      %v514 = vsel %vm341, %v513, -inf
      %515 = vmax.xlane.f32.xlu0 %v514
      %v516 = vpop.xlane.xlu0 %515
      %v517 = vsub.f32 %v513, %v516
      %v518 = vmul.f32 %v517, 1.442695
      %v519 = vpow.pop %v518
      %v520 = vsel %vm341, %v519, 0.0
      %521 = vadd.xlane.f32.xlu0 %v520
      %v522 = vpop.xlane.xlu0 %521
      %v523 = vrcp.pop %v522
      %v524 = vmul.f32 %v519, %v523
      %526 = vrot.lane.b32.xlu0 %v250, 120
      %v527 = vpop.permute.xlu0 %526
      %528 = vrot.lane.b32.xlu0 %v251, 120
      %v529 = vpop.permute.xlu0 %528
      %v532 = vsel %vm341, %v524, 0
      %v534 = vsel %vm356, %v529, 0
      %536 = vmatprep.subr.mxu0 0.0
      %537 = vmatpush1.msra.mxu0 %v527
      %538 = vmatprep.subr.mxu0 0.0
      %539 = vmatpush1.msra.mxu0 %v534
      %540 = vmatprep.subr.mxu0 0.0
      %541 = vmatpush1.msra.mxu0 0.0
      %542 = vmatprep.subr.mxu0 0.0
      %543 = vmatpush1.msra.mxu0 0.0
      %544 = vmatprep.subr.mxu0 0.0
      %545 = vmatpush1.msra.mxu0 0.0
      %546 = vmatprep.subr.mxu0 0.0
      %547 = vmatpush1.msra.mxu0 0.0
      %548 = vmatprep.subr.mxu0 0.0
      %549 = vmatpush1.msra.mxu0 0.0
      %550 = vmatprep.subr.mxu0 0.0
      %551 = vmatpush1.msra.mxu0 0.0
      %552 = vmatprep.subr.mxu0 0.0
      %553 = vmatpush1.msra.mxu0 0.0
      %554 = vmatprep.subr.mxu0 0.0
      %555 = vmatpush1.msra.mxu0 0.0
      %556 = vmatprep.subr.mxu0 0.0
      %557 = vmatpush1.msra.mxu0 0.0
      %558 = vmatprep.subr.mxu0 0.0
      %559 = vmatpush1.msra.mxu0 0.0
      %560 = vmatprep.subr.mxu0 0.0
      %561 = vmatpush1.msra.mxu0 0.0
      %562 = vmatprep.subr.mxu0 0.0
      %563 = vmatpush1.msra.mxu0 0.0
      %564 = vmatprep.subr.mxu0 0.0
      %565 = vmatpush1.msra.mxu0 0.0
      %566 = vmatprep.subr.mxu0 0.0
      %567 = vmatpush1.msra.mxu0 0.0
      %568 = vmatprep.subr.mxu0 0.0
      %569 = vmatpush1.msra.mxu0 0.0
      %570 = vmatprep.subr.mxu0 0.0
      %571 = vmatpush1.msra.mxu0 0.0
      %572 = vmatprep.subr.mxu0 0.0
      %573 = vmatpush1.msra.mxu0 0.0
      %574 = vmatprep.subr.mxu0 0.0
      %575 = vmatpush1.msra.mxu0 0.0
      %576 = vmatprep.subr.mxu0 0.0
      %577 = vmatpush1.msra.mxu0 0.0
      %578 = vmatprep.subr.mxu0 0.0
      %579 = vmatpush1.msra.mxu0 0.0
      %580 = vmatprep.subr.mxu0 0.0
      %581 = vmatpush1.msra.mxu0 0.0
      %582 = vmatprep.subr.mxu0 0.0
      %583 = vmatpush1.msra.mxu0 0.0
      %584 = vmatprep.subr.mxu0 0.0
      %585 = vmatpush1.msra.mxu0 0.0
      %586 = vmatprep.subr.mxu0 0.0
      %587 = vmatpush1.msra.mxu0 0.0
      %588 = vmatprep.subr.mxu0 0.0
      %589 = vmatpush1.msra.mxu0 0.0
      %590 = vmatprep.subr.mxu0 0.0
      %591 = vmatpush1.msra.mxu0 0.0
      %592 = vmatprep.subr.mxu0 0.0
      %593 = vmatpush1.msra.mxu0 0.0
      %594 = vmatprep.subr.mxu0 0.0
      %595 = vmatpush1.msra.mxu0 0.0
      %596 = vmatprep.subr.mxu0 0.0
      %597 = vmatpush1.msra.mxu0 0.0
      %598 = vmatprep.subr.mxu0 0.0
      %599 = vmatpush1.msra.mxu0 0.0
      %600 = vmatprep.mubr.f32.mxu0 0.0
      %601 = vmatmul.mubr.f32.gmra.mrb[0].mxu0 %v532
      %v602 = vpop.f32.mrb[0].mxu0
      %v603 = vadd.f32 0.0, %v602
      %v604 = vpop.f32.mrb[0].mxu0
      %605 = vdwg.mxu0
      %606 = vrot.lane.b32.xlu0 %v247, 112
      %v607 = vpop.permute.xlu0 %606
      %608 = vrot.lane.b32.xlu0 %v248, 112
      %v609 = vpop.permute.xlu0 %608
      %610 = vrot.lane.b32.xlu0 %v249, 112
      %v611 = vpop.permute.xlu0 %610
      %v612 = vsel %vm253, %v607, 0
      %v614 = vsel %vm253, %v609, 0
      %v616 = vsel %vm253, %v611, 0
      %618 = vmatprep.subr.mxu0 0.0
      %619 = vmatpush1.xpose.msra.mxu0 %v614
      %620 = vmatprep.subr.mxu0 0.0
      %621 = vmatpush1.xpose.msra.mxu0 %v616
      %622 = vmatprep.subr.mxu0 0.0
      %623 = vmatpush1.xpose.msra.mxu0 0.0
      %624 = vmatprep.subr.mxu0 0.0
      %625 = vmatpush1.xpose.msra.mxu0 0.0
      %626 = vmatprep.subr.mxu0 0.0
      %627 = vmatpush1.xpose.msra.mxu0 0.0
      %628 = vmatprep.subr.mxu0 0.0
      %629 = vmatpush1.xpose.msra.mxu0 0.0
      %630 = vmatprep.subr.mxu0 0.0
      %631 = vmatpush1.xpose.msra.mxu0 0.0
      %632 = vmatprep.subr.mxu0 0.0
      %633 = vmatpush1.xpose.msra.mxu0 0.0
      %634 = vmatprep.subr.mxu0 0.0
      %635 = vmatpush1.xpose.msra.mxu0 0.0
      %636 = vmatprep.subr.mxu0 0.0
      %637 = vmatpush1.xpose.msra.mxu0 0.0
      %638 = vmatprep.subr.mxu0 0.0
      %639 = vmatpush1.xpose.msra.mxu0 0.0
      %640 = vmatprep.subr.mxu0 0.0
      %641 = vmatpush1.xpose.msra.mxu0 0.0
      %642 = vmatprep.subr.mxu0 0.0
      %643 = vmatpush1.xpose.msra.mxu0 0.0
      %644 = vmatprep.subr.mxu0 0.0
      %645 = vmatpush1.xpose.msra.mxu0 0.0
      %646 = vmatprep.subr.mxu0 0.0
      %647 = vmatpush1.xpose.msra.mxu0 0.0
      %648 = vmatprep.subr.mxu0 0.0
      %649 = vmatpush1.xpose.msra.mxu0 0.0
      %650 = vmatprep.subr.mxu0 0.0
      %651 = vmatpush1.xpose.msra.mxu0 0.0
      %652 = vmatprep.subr.mxu0 0.0
      %653 = vmatpush1.xpose.msra.mxu0 0.0
      %654 = vmatprep.subr.mxu0 0.0
      %655 = vmatpush1.xpose.msra.mxu0 0.0
      %656 = vmatprep.subr.mxu0 0.0
      %657 = vmatpush1.xpose.msra.mxu0 0.0
      %658 = vmatprep.subr.mxu0 0.0
      %659 = vmatpush1.xpose.msra.mxu0 0.0
      %660 = vmatprep.subr.mxu0 0.0
      %661 = vmatpush1.xpose.msra.mxu0 0.0
      %662 = vmatprep.subr.mxu0 0.0
      %663 = vmatpush1.xpose.msra.mxu0 0.0
      %664 = vmatprep.subr.mxu0 0.0
      %665 = vmatpush1.xpose.msra.mxu0 0.0
      %666 = vmatprep.subr.mxu0 0.0
      %667 = vmatpush1.xpose.msra.mxu0 0.0
      %668 = vmatprep.subr.mxu0 0.0
      %669 = vmatpush1.xpose.msra.mxu0 0.0
      %670 = vmatprep.subr.mxu0 0.0
      %671 = vmatpush1.xpose.msra.mxu0 0.0
      %672 = vmatprep.subr.mxu0 0.0
      %673 = vmatpush1.xpose.msra.mxu0 0.0
      %674 = vmatprep.subr.mxu0 0.0
      %675 = vmatpush1.xpose.msra.mxu0 0.0
      %676 = vmatprep.subr.mxu0 0.0
      %677 = vmatpush1.xpose.msra.mxu0 0.0
      %678 = vmatprep.subr.mxu0 0.0
      %679 = vmatpush1.xpose.msra.mxu0 0.0
      %680 = vmatprep.subr.mxu0 0.0
      %681 = vmatpush1.xpose.msra.mxu0 0.0
      %682 = vmatprep.mubr.f32.mxu0 0.0
      %683 = vmatmul.mubr.f32.gmra.mrb[0].mxu0 %v612
      %v684 = vpop.f32.mrb[0].mxu0
      %v685 = vadd.f32 0.0, %v684
      %v686 = vpop.f32.mrb[0].mxu0
      %687 = vdwg.mxu0
      %v688 = vmul.f32 %v685, 0.35355338
      %v689 = vadd.f32 %v688, %v338
      %v690 = vsel %vm341, %v689, -inf
      %691 = vmax.xlane.f32.xlu0 %v690
      %v692 = vpop.xlane.xlu0 %691
      %v693 = vsub.f32 %v689, %v692
      %v694 = vmul.f32 %v693, 1.442695
      %v695 = vpow.pop %v694
      %v696 = vsel %vm341, %v695, 0.0
      %697 = vadd.xlane.f32.xlu0 %v696
      %v698 = vpop.xlane.xlu0 %697
      %v699 = vrcp.pop %v698
      %v700 = vmul.f32 %v695, %v699
      %701 = vrot.lane.b32.xlu0 %v250, 112
      %v702 = vpop.permute.xlu0 %701
      %703 = vrot.lane.b32.xlu0 %v251, 112
      %v704 = vpop.permute.xlu0 %703
      %v707 = vsel %vm341, %v700, 0
      %v709 = vsel %vm356, %v704, 0
      %711 = vmatprep.subr.mxu0 0.0
      %712 = vmatpush1.msra.mxu0 %v702
      %713 = vmatprep.subr.mxu0 0.0
      %714 = vmatpush1.msra.mxu0 %v709
      %715 = vmatprep.subr.mxu0 0.0
      %716 = vmatpush1.msra.mxu0 0.0
      %717 = vmatprep.subr.mxu0 0.0
      %718 = vmatpush1.msra.mxu0 0.0
      %719 = vmatprep.subr.mxu0 0.0
      %720 = vmatpush1.msra.mxu0 0.0
      %721 = vmatprep.subr.mxu0 0.0
      %722 = vmatpush1.msra.mxu0 0.0
      %723 = vmatprep.subr.mxu0 0.0
      %724 = vmatpush1.msra.mxu0 0.0
      %725 = vmatprep.subr.mxu0 0.0
      %726 = vmatpush1.msra.mxu0 0.0
      %727 = vmatprep.subr.mxu0 0.0
      %728 = vmatpush1.msra.mxu0 0.0
      %729 = vmatprep.subr.mxu0 0.0
      %730 = vmatpush1.msra.mxu0 0.0
      %731 = vmatprep.subr.mxu0 0.0
      %732 = vmatpush1.msra.mxu0 0.0
      %733 = vmatprep.subr.mxu0 0.0
      %734 = vmatpush1.msra.mxu0 0.0
      %735 = vmatprep.subr.mxu0 0.0
      %736 = vmatpush1.msra.mxu0 0.0
      %737 = vmatprep.subr.mxu0 0.0
      %738 = vmatpush1.msra.mxu0 0.0
      %739 = vmatprep.subr.mxu0 0.0
      %740 = vmatpush1.msra.mxu0 0.0
      %741 = vmatprep.subr.mxu0 0.0
      %742 = vmatpush1.msra.mxu0 0.0
      %743 = vmatprep.subr.mxu0 0.0
      %744 = vmatpush1.msra.mxu0 0.0
      %745 = vmatprep.subr.mxu0 0.0
      %746 = vmatpush1.msra.mxu0 0.0
      %747 = vmatprep.subr.mxu0 0.0
      %748 = vmatpush1.msra.mxu0 0.0
      %749 = vmatprep.subr.mxu0 0.0
      %750 = vmatpush1.msra.mxu0 0.0
      %751 = vmatprep.subr.mxu0 0.0
      %752 = vmatpush1.msra.mxu0 0.0
      %753 = vmatprep.subr.mxu0 0.0
      %754 = vmatpush1.msra.mxu0 0.0
      %755 = vmatprep.subr.mxu0 0.0
      %756 = vmatpush1.msra.mxu0 0.0
      %757 = vmatprep.subr.mxu0 0.0
      %758 = vmatpush1.msra.mxu0 0.0
      %759 = vmatprep.subr.mxu0 0.0
      %760 = vmatpush1.msra.mxu0 0.0
      %761 = vmatprep.subr.mxu0 0.0
      %762 = vmatpush1.msra.mxu0 0.0
      %763 = vmatprep.subr.mxu0 0.0
      %764 = vmatpush1.msra.mxu0 0.0
      %765 = vmatprep.subr.mxu0 0.0
      %766 = vmatpush1.msra.mxu0 0.0
      %767 = vmatprep.subr.mxu0 0.0
      %768 = vmatpush1.msra.mxu0 0.0
      %769 = vmatprep.subr.mxu0 0.0
      %770 = vmatpush1.msra.mxu0 0.0
      %771 = vmatprep.subr.mxu0 0.0
      %772 = vmatpush1.msra.mxu0 0.0
      %773 = vmatprep.subr.mxu0 0.0
      %774 = vmatpush1.msra.mxu0 0.0
      %775 = vmatprep.mubr.f32.mxu0 0.0
      %776 = vmatmul.mubr.f32.gmra.mrb[0].mxu0 %v707
      %v777 = vpop.f32.mrb[0].mxu0
      %v778 = vadd.f32 0.0, %v777
      %v779 = vpop.f32.mrb[0].mxu0
      %780 = vdwg.mxu0
      %781 = vrot.lane.b32.xlu0 %v247, 104
      %v782 = vpop.permute.xlu0 %781
      %783 = vrot.lane.b32.xlu0 %v248, 104
      %v784 = vpop.permute.xlu0 %783
      %785 = vrot.lane.b32.xlu0 %v249, 104
      %v786 = vpop.permute.xlu0 %785
      %v787 = vsel %vm253, %v782, 0
      %v789 = vsel %vm253, %v784, 0
      %v791 = vsel %vm253, %v786, 0
      %793 = vmatprep.subr.mxu0 0.0
      %794 = vmatpush1.xpose.msra.mxu0 %v789
      %795 = vmatprep.subr.mxu0 0.0
      %796 = vmatpush1.xpose.msra.mxu0 %v791
      %797 = vmatprep.subr.mxu0 0.0
      %798 = vmatpush1.xpose.msra.mxu0 0.0
      %799 = vmatprep.subr.mxu0 0.0
      %800 = vmatpush1.xpose.msra.mxu0 0.0
      %801 = vmatprep.subr.mxu0 0.0
      %802 = vmatpush1.xpose.msra.mxu0 0.0
      %803 = vmatprep.subr.mxu0 0.0
      %804 = vmatpush1.xpose.msra.mxu0 0.0
      %805 = vmatprep.subr.mxu0 0.0
      %806 = vmatpush1.xpose.msra.mxu0 0.0
      %807 = vmatprep.subr.mxu0 0.0
      %808 = vmatpush1.xpose.msra.mxu0 0.0
      %809 = vmatprep.subr.mxu0 0.0
      %810 = vmatpush1.xpose.msra.mxu0 0.0
      %811 = vmatprep.subr.mxu0 0.0
      %812 = vmatpush1.xpose.msra.mxu0 0.0
      %813 = vmatprep.subr.mxu0 0.0
      %814 = vmatpush1.xpose.msra.mxu0 0.0
      %815 = vmatprep.subr.mxu0 0.0
      %816 = vmatpush1.xpose.msra.mxu0 0.0
      %817 = vmatprep.subr.mxu0 0.0
      %818 = vmatpush1.xpose.msra.mxu0 0.0
      %819 = vmatprep.subr.mxu0 0.0
      %820 = vmatpush1.xpose.msra.mxu0 0.0
      %821 = vmatprep.subr.mxu0 0.0
      %822 = vmatpush1.xpose.msra.mxu0 0.0
      %823 = vmatprep.subr.mxu0 0.0
      %824 = vmatpush1.xpose.msra.mxu0 0.0
      %825 = vmatprep.subr.mxu0 0.0
      %826 = vmatpush1.xpose.msra.mxu0 0.0
      %827 = vmatprep.subr.mxu0 0.0
      %828 = vmatpush1.xpose.msra.mxu0 0.0
      %829 = vmatprep.subr.mxu0 0.0
      %830 = vmatpush1.xpose.msra.mxu0 0.0
      %831 = vmatprep.subr.mxu0 0.0
      %832 = vmatpush1.xpose.msra.mxu0 0.0
      %833 = vmatprep.subr.mxu0 0.0
      %834 = vmatpush1.xpose.msra.mxu0 0.0
      %835 = vmatprep.subr.mxu0 0.0
      %836 = vmatpush1.xpose.msra.mxu0 0.0
      %837 = vmatprep.subr.mxu0 0.0
      %838 = vmatpush1.xpose.msra.mxu0 0.0
      %839 = vmatprep.subr.mxu0 0.0
      %840 = vmatpush1.xpose.msra.mxu0 0.0
      %841 = vmatprep.subr.mxu0 0.0
      %842 = vmatpush1.xpose.msra.mxu0 0.0
      %843 = vmatprep.subr.mxu0 0.0
      %844 = vmatpush1.xpose.msra.mxu0 0.0
      %845 = vmatprep.subr.mxu0 0.0
      %846 = vmatpush1.xpose.msra.mxu0 0.0
      %847 = vmatprep.subr.mxu0 0.0
      %848 = vmatpush1.xpose.msra.mxu0 0.0
      %849 = vmatprep.subr.mxu0 0.0
      %850 = vmatpush1.xpose.msra.mxu0 0.0
      %851 = vmatprep.subr.mxu0 0.0
      %852 = vmatpush1.xpose.msra.mxu0 0.0
      %853 = vmatprep.subr.mxu0 0.0
      %854 = vmatpush1.xpose.msra.mxu0 0.0
      %855 = vmatprep.subr.mxu0 0.0
      %856 = vmatpush1.xpose.msra.mxu0 0.0
      %857 = vmatprep.mubr.f32.mxu0 0.0
      %858 = vmatmul.mubr.f32.gmra.mrb[0].mxu0 %v787
      %v859 = vpop.f32.mrb[0].mxu0
      %v860 = vadd.f32 0.0, %v859
      %v861 = vpop.f32.mrb[0].mxu0
      %862 = vdwg.mxu0
      %v863 = vmul.f32 %v860, 0.35355338
      %v864 = vadd.f32 %v863, %v338
      %v865 = vsel %vm341, %v864, -inf
      %866 = vmax.xlane.f32.xlu0 %v865
      %v867 = vpop.xlane.xlu0 %866
      %v868 = vsub.f32 %v864, %v867
      %v869 = vmul.f32 %v868, 1.442695
      %v870 = vpow.pop %v869
      %v871 = vsel %vm341, %v870, 0.0
      %872 = vadd.xlane.f32.xlu0 %v871
      %v873 = vpop.xlane.xlu0 %872
      %v874 = vrcp.pop %v873
      %v875 = vmul.f32 %v870, %v874
      %876 = vrot.lane.b32.xlu0 %v250, 104
      %v877 = vpop.permute.xlu0 %876
      %878 = vrot.lane.b32.xlu0 %v251, 104
      %v879 = vpop.permute.xlu0 %878
      %v882 = vsel %vm341, %v875, 0
      %v884 = vsel %vm356, %v879, 0
      %886 = vmatprep.subr.mxu0 0.0
      %887 = vmatpush1.msra.mxu0 %v877
      %888 = vmatprep.subr.mxu0 0.0
      %889 = vmatpush1.msra.mxu0 %v884
      %890 = vmatprep.subr.mxu0 0.0
      %891 = vmatpush1.msra.mxu0 0.0
      %892 = vmatprep.subr.mxu0 0.0
      %893 = vmatpush1.msra.mxu0 0.0
      %894 = vmatprep.subr.mxu0 0.0
      %895 = vmatpush1.msra.mxu0 0.0
      %896 = vmatprep.subr.mxu0 0.0
      %897 = vmatpush1.msra.mxu0 0.0
      %898 = vmatprep.subr.mxu0 0.0
      %899 = vmatpush1.msra.mxu0 0.0
      %900 = vmatprep.subr.mxu0 0.0
      %901 = vmatpush1.msra.mxu0 0.0
      %902 = vmatprep.subr.mxu0 0.0
      %903 = vmatpush1.msra.mxu0 0.0
      %904 = vmatprep.subr.mxu0 0.0
      %905 = vmatpush1.msra.mxu0 0.0
      %906 = vmatprep.subr.mxu0 0.0
      %907 = vmatpush1.msra.mxu0 0.0
      %908 = vmatprep.subr.mxu0 0.0
      %909 = vmatpush1.msra.mxu0 0.0
      %910 = vmatprep.subr.mxu0 0.0
      %911 = vmatpush1.msra.mxu0 0.0
      %912 = vmatprep.subr.mxu0 0.0
      %913 = vmatpush1.msra.mxu0 0.0
      %914 = vmatprep.subr.mxu0 0.0
      %915 = vmatpush1.msra.mxu0 0.0
      %916 = vmatprep.subr.mxu0 0.0
      %917 = vmatpush1.msra.mxu0 0.0
      %918 = vmatprep.subr.mxu0 0.0
      %919 = vmatpush1.msra.mxu0 0.0
      %920 = vmatprep.subr.mxu0 0.0
      %921 = vmatpush1.msra.mxu0 0.0
      %922 = vmatprep.subr.mxu0 0.0
      %923 = vmatpush1.msra.mxu0 0.0
      %924 = vmatprep.subr.mxu0 0.0
      %925 = vmatpush1.msra.mxu0 0.0
      %926 = vmatprep.subr.mxu0 0.0
      %927 = vmatpush1.msra.mxu0 0.0
      %928 = vmatprep.subr.mxu0 0.0
      %929 = vmatpush1.msra.mxu0 0.0
      %930 = vmatprep.subr.mxu0 0.0
      %931 = vmatpush1.msra.mxu0 0.0
      %932 = vmatprep.subr.mxu0 0.0
      %933 = vmatpush1.msra.mxu0 0.0
      %934 = vmatprep.subr.mxu0 0.0
      %935 = vmatpush1.msra.mxu0 0.0
      %936 = vmatprep.subr.mxu0 0.0
      %937 = vmatpush1.msra.mxu0 0.0
      %938 = vmatprep.subr.mxu0 0.0
      %939 = vmatpush1.msra.mxu0 0.0
      %940 = vmatprep.subr.mxu0 0.0
      %941 = vmatpush1.msra.mxu0 0.0
      %942 = vmatprep.subr.mxu0 0.0
      %943 = vmatpush1.msra.mxu0 0.0
      %944 = vmatprep.subr.mxu0 0.0
      %945 = vmatpush1.msra.mxu0 0.0
      %946 = vmatprep.subr.mxu0 0.0
      %947 = vmatpush1.msra.mxu0 0.0
      %948 = vmatprep.subr.mxu0 0.0
      %949 = vmatpush1.msra.mxu0 0.0
      %950 = vmatprep.mubr.f32.mxu0 0.0
      %951 = vmatmul.mubr.f32.gmra.mrb[0].mxu0 %v882
      %v952 = vpop.f32.mrb[0].mxu0
      %v953 = vadd.f32 0.0, %v952
      %v954 = vpop.f32.mrb[0].mxu0
      %955 = vdwg.mxu0
      %957 = vrot.lane.b32.xlu0 %v603, 8
      %v958 = vpop.permute.xlu0 %957
      %961 = vrot.lane.b32.xlu0 %v778, 16
      %v962 = vpop.permute.xlu0 %961
      %965 = vrot.lane.b32.xlu0 %v953, 24
      %v966 = vpop.permute.xlu0 %965
      %v968 = vsel %vm253, %v427, %v958
      %vm969 = vcmask 130048
      %v970 = vsel %vm969, %v968, %v962
      %vm971 = vcmask 195584
      %v972 = vsel %vm971, %v970, %v966
      %vm973 = vcmask 261120
      %974 = vst.msk [vmem:[%s246] sm:$0xff] %vm973, %v972
      %p975 = scmp.lt.s32.totalorder %s15, 1
      %s976 = scalar_select %p975, %s15, 1
      %s977 = smul.addr %s976, 8
      %s978 = scalar_lea.vmem %s4, %s977
      // Predicated region
      $region37: #{_lambda_.60} parent=35 // pred_check
        %p979 = pneg %p137
      $region38: #{_lambda_.60} parent=35 // pred_check_branch
        %981 = sbr.rel (%p979) target = $region40
      $region39: #{_lambda_.60} parent=35 // pred_region
        _
      $region40: #{_lambda_.60} parent=35 // pred_fallthru
        _
    $region36: #{_lambda_.60} parent=5 // pred_fallthru
      _
    %p982 = scmp.le.s32.totalorder 2, %s10
    // Predicated region
    $region41: #{_lambda_.60} parent=5 // pred_check
      %p983 = pneg %p982
    $region42: #{_lambda_.60} parent=5 // pred_check_branch
      %985 = sbr.rel (%p983) target = $region44
    $region43: #{_lambda_.60} parent=5 // pred_region
      %s986 = ssub.s32 %s10, 2
      // Predicated region
      $region45: #{_lambda_.60} parent=43 // pred_check
        %p987 = pneg %p143
      $region46: #{_lambda_.60} parent=43 // pred_check_branch
        %989 = sbr.rel (%p987) target = $region48
      $region47: #{_lambda_.60} parent=43 // pred_region
        %p990 = scmp.lt.s32.totalorder %s16, 1
        %s991 = scalar_select %p990, %s16, 1
        %s992 = smul.addr %s991, 8
        %s993 = scalar_lea.vmem %s4, %s992
      $region48: #{_lambda_.60} parent=43 // pred_fallthru
        _
    $region44: #{_lambda_.60} parent=5 // pred_fallthru
      _
  $region6: #{_lambda_.60} parent=0 // loop_footer
    %s14 = sadd.s32 1, %s10
  $region7: #{_lambda_.60} parent=0 // loop_footer_branch
    %9 = sbr.rel target = $region3
  $region8: #{_lambda_.60} parent=0 // loop_exit
    _

// kernel: _lambda_.73
$region0: #{_lambda_.73}
  #allocation0 [shape = 'u32[]', space=smem, size = 0x4, offset = 0x4, fixed_abs, tag = 'smem constant byte address 0x4 - core index']
  #allocation1 [shape = 'u32[144,128]{1,0:T(1,128)}', space=vmem, size = 0x12000, scoped, tag = 'internal scratch']
  %s0 = inlined_call_operand.vmem [shape: f32[2,8,32], index: 0, kind: input, shape index: {}]
  %s1 = inlined_call_operand.vmem [shape: f32[2,8,32], index: 1, kind: input, shape index: {}]
  %s2 = inlined_call_operand.vmem [shape: f32[1,32], index: 2, kind: input, shape index: {}]
  %s3 = inlined_call_operand.hbm [shape: f32[2,1,32], index: 3, kind: output, shape index: {}]
  %s4 = sld [smem:[#allocation0]]
  $region45: #{_lambda_.73} parent=0
    _
  %s6 = ssub.s32 1, %s4
  %s7 = scalar_select 0, %s6, %s4
  $region1: #{_lambda_.73} parent=0
    #allocation2 [shape = 'u8[1024]{0}', space=vmem, size = 0x400, scoped, tag = 'output window, operand 0']
    #allocation3 [shape = 's32[2]{0}', space=sflag, size = 0x8, scoped, tag = 'scoped memory for _lambda_.73']
    %8 = vsyncpa [#allocation3], 0
    %s9 = scalar_lea.sflag [#allocation3], 1
    %10 = vsyncpa %s9, 0
    loop: start=0, step=1, limit=4
    $region2: #{_lambda_.73} parent=1 // loop_pre_header
      _
    $region3: #{_lambda_.73} parent=1 // loop_header
      %s12 = sphi 0, %s16
      %p13 = scmp.ge.s32.totalorder %s12, 4
      %s22 = sphi 0, %s24
      %s25 = sphi 0, %s22
      %s26 = sphi 0, %s25
      %s42 = sphi 0, %s26
      %s48 = sphi 0, %s50
      %s51 = sphi 0, %s48
      %s52 = sphi 0, %s51
      %s68 = sphi 0, %s52
      %s72 = sphi 0, %s72
      %s74 = sphi 0, %s72
      %s75 = sphi 0, %s74
      %s89 = sphi 0, %s75
      %s95 = sphi 0, %s97
      %s98 = sphi 0, %s95
      %s99 = sphi 0, %s98
      %s115 = sphi 0, %s99
    $region4: #{_lambda_.73} parent=1 // loop_header_branch
      %15 = sbr.rel (%p13) target = $region8
    $region5: #{_lambda_.73} parent=1 // loop_body
      %s17 = ssub.s32 %s12, 1
      %s18 = ssub.s32 %s12, 2
      %s19 = sadd.s32 %s12, 1
      %s20 = ssub.s32 %s12, %s19
      %p21 = scmp.eq.s32.totalorder %s20, 0
      %s23 = sadd.s32 %s22, 1
      %s24 = scalar_select %p21, %s22, %s23
      %p27 = pneg %p21
      %p28 = scmp.eq.s32.totalorder %s12, 1
      %p29 = por %p27, %p28
      %p30 = scmp.ne.s32.totalorder %s22, %s25
      %p31 = scmp.eq.s32.totalorder %s12, 0
      %p32 = por %p30, %p31
      %p33 = scmp.ne.s32.totalorder %s22, %s25
      %p34 = scmp.eq.s32.totalorder %s17, 1
      %p35 = por %p33, %p34
      %p36 = scmp.ne.s32.totalorder %s25, %s26
      %p37 = scmp.eq.s32.totalorder %s17, 0
      %p38 = por %p36, %p37
      %p39 = scmp.ne.s32.totalorder %s25, %s26
      %p40 = scmp.eq.s32.totalorder %s18, 1
      %p41 = por %p39, %p40
      %p43 = scmp.ne.s32.totalorder %s26, %s42
      %p44 = scmp.eq.s32.totalorder %s18, 0
      %p45 = por %p43, %p44
      %s46 = ssub.s32 %s12, %s19
      %p47 = scmp.eq.s32.totalorder %s46, 0
      %s49 = sadd.s32 %s48, 1
      %s50 = scalar_select %p47, %s48, %s49
      %p53 = pneg %p47
      %p54 = scmp.eq.s32.totalorder %s12, 1
      %p55 = por %p53, %p54
      %p56 = scmp.ne.s32.totalorder %s48, %s51
      %p57 = scmp.eq.s32.totalorder %s12, 0
      %p58 = por %p56, %p57
      %p59 = scmp.ne.s32.totalorder %s48, %s51
      %p60 = scmp.eq.s32.totalorder %s17, 1
      %p61 = por %p59, %p60
      %p62 = scmp.ne.s32.totalorder %s51, %s52
      %p63 = scmp.eq.s32.totalorder %s17, 0
      %p64 = por %p62, %p63
      %p65 = scmp.ne.s32.totalorder %s51, %s52
      %p66 = scmp.eq.s32.totalorder %s18, 1
      %p67 = por %p65, %p66
      %p69 = scmp.ne.s32.totalorder %s52, %s68
      %p70 = scmp.eq.s32.totalorder %s18, 0
      %p71 = por %p69, %p70
      %s73 = sadd.s32 %s72, 1
      %p76 = scmp.eq.s32.totalorder %s12, 1
      %p77 = scmp.ne.s32.totalorder %s72, %s74
      %p78 = scmp.eq.s32.totalorder %s12, 0
      %p79 = por %p77, %p78
      %p80 = scmp.ne.s32.totalorder %s72, %s74
      %p81 = scmp.eq.s32.totalorder %s17, 1
      %p82 = por %p80, %p81
      %p83 = scmp.ne.s32.totalorder %s74, %s75
      %p84 = scmp.eq.s32.totalorder %s17, 0
      %p85 = por %p83, %p84
      %p86 = scmp.ne.s32.totalorder %s74, %s75
      %p87 = scmp.eq.s32.totalorder %s18, 1
      %p88 = por %p86, %p87
      %p90 = scmp.ne.s32.totalorder %s75, %s89
      %p91 = scmp.eq.s32.totalorder %s18, 0
      %p92 = por %p90, %p91
      %s93 = ssub.s32 %s12, %s19
      %p94 = scmp.eq.s32.totalorder %s93, 0
      %s96 = sadd.s32 %s95, 1
      %s97 = scalar_select %p94, %s95, %s96
      %p100 = pneg %p94
      %p101 = scmp.eq.s32.totalorder %s12, 1
      %p102 = por %p100, %p101
      %p103 = scmp.ne.s32.totalorder %s95, %s98
      %p104 = scmp.eq.s32.totalorder %s12, 0
      %p105 = por %p103, %p104
      %p106 = scmp.ne.s32.totalorder %s95, %s98
      %p107 = scmp.eq.s32.totalorder %s17, 1
      %p108 = por %p106, %p107
      %p109 = scmp.ne.s32.totalorder %s98, %s99
      %p110 = scmp.eq.s32.totalorder %s17, 0
      %p111 = por %p109, %p110
      %p112 = scmp.ne.s32.totalorder %s98, %s99
      %p113 = scmp.eq.s32.totalorder %s18, 1
      %p114 = por %p112, %p113
      %p116 = scmp.ne.s32.totalorder %s99, %s115
      %p117 = scmp.eq.s32.totalorder %s18, 0
      %p118 = por %p116, %p117
      %p119 = scmp.le.s32.totalorder 1, %s12
      %p120 = scmp.lt.s32.totalorder %s12, 3
      %p121 = pnand %p119, %p120
      %p122 = pneg %p121
      // Predicated region
      $region9: #{_lambda_.73} parent=5 // pred_check
        _
      $region10: #{_lambda_.73} parent=5 // pred_check_branch
        %124 = sbr.rel (%p121) target = $region12
      $region11: #{_lambda_.73} parent=5 // pred_region
        %s125 = ssub.s32 %s12, 1
        // Predicated region
        $region13: #{_lambda_.73} parent=11 // pred_check
          %p126 = pneg %p85
        $region14: #{_lambda_.73} parent=11 // pred_check_branch
          %128 = sbr.rel (%p126) target = $region16
        $region15: #{_lambda_.73} parent=11 // pred_region
          _
        $region16: #{_lambda_.73} parent=11 // pred_fallthru
          _
      $region12: #{_lambda_.73} parent=5 // pred_fallthru
        _
      %p129 = scmp.lt.s32.totalorder %s12, 2
      // Predicated region
      $region17: #{_lambda_.73} parent=5 // pred_check
        %p130 = pneg %p129
      $region18: #{_lambda_.73} parent=5 // pred_check_branch
        %132 = sbr.rel (%p130) target = $region20
      $region19: #{_lambda_.73} parent=5 // pred_region
        // Predicated region
        $region21: #{_lambda_.73} parent=19 // pred_check
          %p133 = pneg %p32
        $region22: #{_lambda_.73} parent=19 // pred_check_branch
          %135 = sbr.rel (%p133) target = $region24
        $region23: #{_lambda_.73} parent=19 // pred_region
          %p136 = scmp.lt.s32.totalorder %s12, 1
          %s137 = scalar_select %p136, %s12, 1
          %s138 = smul.addr %s137, 8
          %s139 = scalar_lea.vmem %s0, %s138
        $region24: #{_lambda_.73} parent=19 // pred_fallthru
          _
        // Predicated region
        $region25: #{_lambda_.73} parent=19 // pred_check
          %p140 = pneg %p58
        $region26: #{_lambda_.73} parent=19 // pred_check_branch
          %142 = sbr.rel (%p140) target = $region28
        $region27: #{_lambda_.73} parent=19 // pred_region
          %p143 = scmp.lt.s32.totalorder %s12, 1
          %s144 = scalar_select %p143, %s12, 1
          %s145 = smul.addr %s144, 8
          %s146 = scalar_lea.vmem %s1, %s145
        $region28: #{_lambda_.73} parent=19 // pred_fallthru
          _
      $region20: #{_lambda_.73} parent=5 // pred_fallthru
        _
      %p147 = scmp.le.s32.totalorder 1, %s12
      %p148 = scmp.lt.s32.totalorder %s12, 3
      %p149 = pnand %p147, %p148
      %p150 = pneg %p149
      // Predicated region
      $region29: #{_lambda_.73} parent=5 // pred_check
        _
      $region30: #{_lambda_.73} parent=5 // pred_check_branch
        %152 = sbr.rel (%p149) target = $region32
      $region31: #{_lambda_.73} parent=5 // pred_region
        %s153 = ssub.s32 %s12, 1
        %p154 = scmp.lt.s32.totalorder %s17, 1
        %s155 = scalar_select %p154, %s17, 1
        %s156 = smul.addr %s155, 8
        %s157 = scalar_lea.vmem %s0, %s156
        %p158 = pneg %p38
        %p159 = pneg %p35
        %p160 = scmp.lt.s32.totalorder %s17, 1
        %s161 = scalar_select %p160, %s17, 1
        %s162 = smul.addr %s161, 8
        %s163 = scalar_lea.vmem %s1, %s162
        %p164 = pneg %p64
        %p165 = pneg %p61
        %p166 = pneg %p85
        %p167 = pneg %p82
        %p168 = pneg %p111
        %p169 = pneg %p108
        %s170 = sand.u32 %s98, 1
        %s171 = scalar_lea.sflag [#allocation3], %s170
        %s172 = sand.u32 %s98, 1
        %s173 = scalar_lea.vmem [#allocation2], %s172
        %p174 = scmp.lt.s32.totalorder %s17, 1
        %s175 = scalar_select %p174, %s17, 1
        %s176 = smul.addr %s175, 8
        %s177 = scalar_lea.vmem %s0, %s176
        %p178 = scmp.lt.s32.totalorder %s17, 1
        %s179 = scalar_select %p178, %s17, 1
        %s180 = smul.addr %s179, 8
        %s181 = scalar_lea.vmem %s1, %s180
        %v182 = vld [vmem:[%s177] sm:$0xff]
        %v183 = vld [vmem:[%s181] sm:$0xff]
        %v184 = vadd.f32 %v182, %v183
        %v185 = vmul.f32 %v184, 0.5
        %v186 = vld [vmem:[%s2] sm:$0x1]
        %v188 = vlaneseq
        %v189 = vshrl.u32 %v188, 7
        %v190 = vsub.s32 0, %v189
        %v191 = vrot.slane %v186, %v190
        %v193 = vmul.f32 %v185, %v191
        %vm194 = vcmask 261120
        %v195 = vsel %vm194, %v193, 0.0
        %196 = vadd.xlane.f32.xlu0 %v195
        %v197 = vpop.xlane.xlu0 %196
        %v198 = vrot.slane %v197, 4
        %v199 = vmax.f32 %v197, %v198
        %v200 = vrot.slane %v199, 2
        %v201 = vmax.f32 %v199, %v200
        %v202 = vrot.slane %v201, 1
        %v203 = vmax.f32 %v201, %v202
        %v204 = vsub.f32 %v197, %v203
        %v205 = vmul.f32 %v204, 1.442695
        %v206 = vpow.pop %v205
        %v207 = vrot.slane %v206, 4
        %v208 = vadd.f32 %v206, %v207
        %v209 = vrot.slane %v208, 2
        %v210 = vadd.f32 %v208, %v209
        %v211 = vrot.slane %v210, 1
        %v212 = vadd.f32 %v210, %v211
        %v213 = vrcp.pop %v212
        %v214 = vmul.f32 %v206, %v213
        %v215 = vmul.f32 %v185, %v214
        %v216 = vsel %vm194, %v215, 0.0
        %v217 = vrot.slane %v216, 4
        %v218 = vadd.f32 %v216, %v217
        %v219 = vrot.slane %v218, 2
        %v220 = vadd.f32 %v218, %v219
        %v221 = vrot.slane %v220, 1
        %v222 = vadd.f32 %v220, %v221
        %vm223 = vcmask 253952
        %224 = vst.msk [vmem:[%s173] sm:$0x1] %vm223, %v222
        %s225 = sand.u32 %s98, 1
        %s226 = scalar_lea.sflag [#allocation3], %s225
        %s227 = sand.u32 %s98, 1
        %s228 = scalar_lea.vmem [#allocation2], %s227
        // Predicated region
        $region33: #{_lambda_.73} parent=31 // pred_check
          %p229 = pneg %p108
        $region34: #{_lambda_.73} parent=31 // pred_check_branch
          %231 = sbr.rel (%p229) target = $region36
        $region35: #{_lambda_.73} parent=31 // pred_region
          %s233 = ssub.s32 16, 16
          %234 = vsyncadd %s226, %s233
          %s235 = smul.addr %s17, 16
          %s236 = scalar_lea.hbm %s3, %s235
          %s238 = sshll.u32 %s228, 4
          %s239 = int_to_ptr.vmem [resolvable:$true] %s238
          %241 = dma.vmem_to_hbm [thread:$0]  %s239, 16, %s236, %s226
        $region36: #{_lambda_.73} parent=31 // pred_fallthru
          _
      $region32: #{_lambda_.73} parent=5 // pred_fallthru
        _
      %p242 = scmp.le.s32.totalorder 2, %s12
      // Predicated region
      $region37: #{_lambda_.73} parent=5 // pred_check
        %p243 = pneg %p242
      $region38: #{_lambda_.73} parent=5 // pred_check_branch
        %245 = sbr.rel (%p243) target = $region40
      $region39: #{_lambda_.73} parent=5 // pred_region
        %s246 = ssub.s32 %s12, 2
        // Predicated region
        $region41: #{_lambda_.73} parent=39 // pred_check
          %p247 = pneg %p114
        $region42: #{_lambda_.73} parent=39 // pred_check_branch
          %249 = sbr.rel (%p247) target = $region44
        $region43: #{_lambda_.73} parent=39 // pred_region
          %s250 = sand.u32 %s99, 1
          %s251 = scalar_lea.sflag [#allocation3], %s250
          %s252 = sand.u32 %s99, 1
          %s253 = scalar_lea.vmem [#allocation2], %s252
          %254 = dma.done %s251, 16
        $region44: #{_lambda_.73} parent=39 // pred_fallthru
          _
      $region40: #{_lambda_.73} parent=5 // pred_fallthru
        _
    $region6: #{_lambda_.73} parent=1 // loop_footer
      %s16 = sadd.s32 1, %s12
    $region7: #{_lambda_.73} parent=1 // loop_footer_branch
      %11 = sbr.rel target = $region3
    $region8: #{_lambda_.73} parent=1 // loop_exit
      _
    %255 = vsyncpa [#allocation3], 1
    %s256 = scalar_lea.sflag [#allocation3], 1
    %257 = vsyncpa %s256, 1

</llo_original>
